<compile_context>
chip_gen: v7x
topology: tpu7x:2x2x1
jax: 0.10.0
libtpu: 0.0.40
codegen_flags: <defaults>
</compile_context>

<pallas_src>
import functools

import jax
import jax.numpy as jnp
from jax.experimental import pallas as pl
from jax.experimental.pallas import tpu as pltpu


def _round_up(v, m):
    return -(-v // m) * m


# ----------------------------------------------------------------------------
# Fused kernel (transposed layout: channels on sublanes, pixels*batch on lanes)
#
# Lane ordering of the patch matrix per tile: (i2, j2, i3, j3, h3, w3, b), so:
#   * conv1 consumes it directly,
#   * conv2's 4 kernel positions are the 4 leading lane blocks of length R2 = 4*S*TB,
#   * conv3's 4 kernel positions are the 4 leading lane blocks of length R3 = S*TB,
#   * the head's S spatial positions are the S leading lane blocks of length TB.
# TB is a multiple of 128, so every slice offset is lane-tile aligned.
# ----------------------------------------------------------------------------
def _fused_cnn_kernel(p1_ref, w1_ref, b1_ref, w2_ref, b2_ref, w3_ref, b3_ref,
                      wh_ref, bh_ref, o_ref, *, S, TB):
    f32 = jnp.float32
    R2 = 4 * S * TB          # conv2 output pixels per tile (lanes)
    R3 = S * TB              # conv3 output pixels per tile (lanes)

    # ---- conv1 + ReLU : (16, 4C) @ (4C, 16*S*TB), bf16 operands, f32 accumulation
    y1 = jnp.dot(w1_ref[...], p1_ref[0], preferred_element_type=f32)
    y1 = jnp.maximum(y1 + b1_ref[...], 0.0)                       # (16, 16*S*TB)

    # ---- conv2 + ReLU : gather the 4 (kh,kw) lane blocks onto sublanes, one K=64 dot
    x2 = jnp.concatenate([y1[:, q * R2:(q + 1) * R2] for q in range(4)], axis=0)
    y2 = jnp.maximum(
        jnp.dot(w2_ref[...], x2, preferred_element_type=f32) + b2_ref[...], 0.0)  # (32, R2)

    # ---- conv3 + ReLU : same trick, one K=128 dot
    x3 = jnp.concatenate([y2[:, q * R3:(q + 1) * R3] for q in range(4)], axis=0)
    y3 = jnp.maximum(
        jnp.dot(w3_ref[...], x3, preferred_element_type=f32) + b3_ref[...], 0.0)  # (64, R3)

    # ---- head Linear : gather the S spatial lane blocks onto sublanes, one K=64*S dot
    x4 = jnp.concatenate([y3[:, s * TB:(s + 1) * TB] for s in range(S)], axis=0)
    out = jnp.dot(wh_ref[...], x4, preferred_element_type=f32) + bh_ref[...]
    o_ref[0] = out.astype(o_ref.dtype)                            # (Cout, TB), lane-dense


# ----------------------------------------------------------------------------
# VMEM budget / batch-tile sizing (counts the real padded footprint)
# ----------------------------------------------------------------------------
def _vmem_budget():
    cap = 128 * 1024 * 1024
    try:
        cap = int(getattr(pltpu.get_tpu_info(), "vmem_capacity_bytes", cap))
    except Exception:  # interpret mode / older runtimes
        pass
    budget = min(40 * 1024 * 1024, cap // 2)                 # live bytes per grid step
    limit = min(budget + 16 * 1024 * 1024, 64 * 1024 * 1024)  # scoped-VMEM request
    return budget, limit


def _pick_batch_tile(B, S, C, in_bytes):
    """Largest TB (multiple of 128 lanes) whose padded footprint fits the budget,
    capped so the streamed p1 block stays ~<= 4 MiB and the grid has >= 4 steps
    when the batch allows it."""
    budget, limit = _vmem_budget()
    c1rows = max(_round_up(4 * C, 16), 16)        # sublane packing of the bf16 p1 rows
    p1_b = c1rows * 16 * S * in_bytes             # one p1 buffer, per batch element
    # y1 + x2 + y2 + x3 + y3 + x4 (all f32, lanes already dense), per batch element
    act_b = (256 + 256 + 128 + 128 + 64 + 64) * S * 4
    per_b = 2 * p1_b + act_b                      # double-buffered input + live activations
    tb = max(128, (budget // max(per_b, 1)) // 128 * 128)
    while tb > 128 and p1_b * tb > 4 * 1024 * 1024:   # 1-4 MiB p1 block sweet spot
        tb -= 128
    tb = min(tb, max(128, _round_up(-(-B // 4), 128)))  # prefer >= 4 grid steps
    # TODO(synk): for very large images (S*128 over budget) also tile spatially.
    return tb, limit


# ----------------------------------------------------------------------------
# Full forward pass (matches ConvolutionalNetwork.forward, NCHW input)
# ----------------------------------------------------------------------------
@functools.partial(jax.jit, static_argnames=("input_dtype",))
def convolutional_network_forward(params, x, input_dtype=jnp.bfloat16):
    x = jnp.asarray(x, jnp.float32)
    B, C, H, W = x.shape
    H3, W3 = H // 8, W // 8                      # conv3 output spatial dims
    assert H3 > 0 and W3 > 0, "input too small for three stride-2 convs"
    S = H3 * W3
    Cout = params["head_w"].shape[1]

    # ---- trace-time weight re-layout (transposed: (cout, k_in), free at runtime) ----
    w1 = params["conv1_w"].reshape(16, 4 * C).astype(input_dtype)        # cols (cin,kh,kw)
    w2 = params["conv2_w"].transpose(0, 2, 3, 1).reshape(32, 64)         # cols (kh,kw,cin)
    w3 = params["conv3_w"].transpose(0, 2, 3, 1).reshape(64, 128)        # cols (kh,kw,cin)
    # head weight rows are in PyTorch NCHW-flatten order (c3, h3, w3); permute once so
    # its columns match the kernel's (spatial, c3) sublane order of x4.
    wh = params["head_w"].reshape(64, S, Cout).transpose(2, 1, 0).reshape(Cout, S * 64)
    b1 = params["conv1_b"].reshape(16, 1)
    b2 = params["conv2_b"].reshape(32, 1)
    b3 = params["conv3_b"].reshape(64, 1)
    bh = params["head_b"].reshape(Cout, 1)

    # ---- batch tiling ----
    in_bytes = jnp.dtype(input_dtype).itemsize
    TB, vmem_limit = _pick_batch_tile(B, S, C, in_bytes)
    ntiles = -(-B // TB)
    Bp = ntiles * TB
    N1 = 16 * S * TB

    # ---- single layout pass: crop (PyTorch stride-2 drops trailing odd rows/cols),
    #      cast to the matmul dtype FIRST (halves the HBM write + kernel read of the
    #      patch matrix), pad batch, and transpose into the hierarchical patch layout.
    x = x[:, :, : 8 * H3, : 8 * W3].astype(input_dtype)
    if Bp != B:
        x = jnp.concatenate(
            [x, jnp.zeros((Bp - B, C, 8 * H3, 8 * W3), x.dtype)], axis=0)
    # dims: (t, b, C, h3, i3, i2, i1, w3, j3, j2, j1)
    xr = x.reshape(ntiles, TB, C, H3, 2, 2, 2, W3, 2, 2, 2)
    # -> (t | C,i1,j1 | i2,j2,i3,j3,h3,w3,b): sublanes = conv1 input features (== w1
    #    column order), lanes = conv1 output pixels (hierarchical, so every later slice
    #    in the kernel is a 128-aligned contiguous lane block).
    xt = xr.transpose(0, 2, 6, 10, 5, 9, 4, 8, 3, 7, 1)
    p1 = xt.reshape(ntiles, 4 * C, N1)
    # TODO(synk): fold this patchification pass into the kernel (or produce the layout
    # upstream) to remove the extra HBM read+write of the input stream.

    def full_spec(shape):
        return pl.BlockSpec(shape, lambda i: (0,) * len(shape))

    kernel = functools.partial(_fused_cnn_kernel, S=S, TB=TB)

    out = pl.pallas_call(
        kernel,
        out_shape=jax.ShapeDtypeStruct((ntiles, Cout, TB), jnp.float32),
        grid_spec=pltpu.PrefetchScalarGridSpec(
            num_scalar_prefetch=0,
            grid=(ntiles,),
            in_specs=[
                pl.BlockSpec((1, 4 * C, N1), lambda i: (i, 0, 0)),   # streamed patch tile
                full_spec((16, 4 * C)), full_spec((16, 1)),          # conv1 w, b
                full_spec((32, 64)),    full_spec((32, 1)),          # conv2 w, b
                full_spec((64, 128)),   full_spec((64, 1)),          # conv3 w, b
                full_spec((Cout, S * 64)), full_spec((Cout, 1)),     # head w (permuted), b
            ],
            out_specs=pl.BlockSpec((1, Cout, TB), lambda i: (i, 0, 0)),
        ),
        compiler_params=pltpu.CompilerParams(
            dimension_semantics=("parallel",),        # split batch tiles across TCs
            vmem_limit_bytes=vmem_limit,
        ),
    )(p1, w1, b1, w2, b2, w3, b3, wh, bh)

    # (ntiles, Cout, TB) -> (Bp, Cout) -> (B, Cout)   (tiny)
    return out.transpose(0, 2, 1).reshape(Bp, Cout)[:B]


# ----------------------------------------------------------------------------
# Deterministic parameter init (Xavier-uniform weights, zero biases — matches the
# repo's reset_type='XAVIER' convention; load real weights for exact parity).
# ----------------------------------------------------------------------------
def _xavier_uniform(key, shape, fan_in, fan_out):
    limit = jnp.sqrt(6.0 / (fan_in + fan_out))
    return jax.random.uniform(key, shape, jnp.float32, -limit, limit)


def make_params(key, in_channels, in_height, in_width, out_dim):
    def conv_size_out(s, k=2, st=2):
        return (s - (k - 1) - 1) // st + 1

    convw = conv_size_out(conv_size_out(conv_size_out(in_width)))
    convh = conv_size_out(conv_size_out(conv_size_out(in_height)))
    assert convw > 0 and convh > 0
    head_in = convw * convh * 64

    ks = jax.random.split(key, 4)
    return {
        "conv1_w": _xavier_uniform(ks[0], (16, in_channels, 2, 2),
                                   in_channels * 4, 16 * 4),
        "conv1_b": jnp.zeros((16,), jnp.float32),
        "conv2_w": _xavier_uniform(ks[1], (32, 16, 2, 2), 16 * 4, 32 * 4),
        "conv2_b": jnp.zeros((32,), jnp.float32),
        "conv3_w": _xavier_uniform(ks[2], (64, 32, 2, 2), 32 * 4, 64 * 4),
        "conv3_b": jnp.zeros((64,), jnp.float32),
        # head MLP with layers=[] -> just the `predict` Linear(head_in, out);
        # stored as (head_in, out) with rows in PyTorch NCHW-flatten order (c3,h3,w3).
        "head_w": _xavier_uniform(ks[3], (head_in, out_dim), head_in, out_dim),
        "head_b": jnp.zeros((out_dim,), jnp.float32),
    }


# ----------------------------------------------------------------------------
# Pure-XLA references (validation only)
# ----------------------------------------------------------------------------
def _reference_forward(params, x):
    def conv(x, w, b):
        y = jax.lax.conv_general_dilated(
            x, w, (2, 2), "VALID",
            dimension_numbers=("NCHW", "OIHW", "NCHW"),
            precision=jax.lax.Precision.HIGHEST)
        return jax.nn.relu(y + b.reshape(1, -1, 1, 1))

    h = conv(x, params["conv1_w"], params["conv1_b"])
    h = conv(h, params["conv2_w"], params["conv2_b"])
    h = conv(h, params["conv3_w"], params["conv3_b"])
    flat = h.reshape(h.shape[0], -1)                      # NCHW flatten, like PyTorch
    return jnp.dot(flat, params["head_w"],
                   precision=jax.lax.Precision.HIGHEST) + params["head_b"].reshape(1, -1)


def _quantized_input_reference(params, x, input_dtype):
    """Reference with the kernel's deliberate quantization (conv1 inputs/weights cast to
    the matmul dtype, everything else f32) — isolates the patch-matmul decomposition."""
    q = dict(params)
    q["conv1_w"] = params["conv1_w"].astype(input_dtype).astype(jnp.float32)
    xq = x.astype(input_dtype).astype(jnp.float32)
    return _reference_forward(q, xq)


if __name__ == "__main__":
    key = jax.random.PRNGKey(0)
    k_params, k_x = jax.random.split(key)

    B, C, H, W = 2, 4, 16, 16      # 16 -> 8 -> 4 -> 2 spatially
    OUT = 8                        # number of actions / outputs

    params = make_params(k_params, C, H, W, OUT)
    x = jax.random.normal(k_x, (B, C, H, W), jnp.float32)

    y = convolutional_network_forward(params, x)
    y = jax.block_until_ready(y)
    assert y.shape == (B, OUT), y.shape
    assert bool(jnp.all(jnp.isfinite(y)))

    # (1) kernel math check against a reference with identical bf16 input quantization
    #     (any layout / permutation / slicing bug would produce O(0.1-1) errors here).
    y_q = _quantized_input_reference(params, x, jnp.bfloat16)
    err_q = float(jnp.max(jnp.abs(y - y_q)))
    assert err_q < 1e-2, f"mismatch vs quantization-matched reference: {err_q}"

    # (2) end-to-end parity with the f32 PyTorch-equivalent module; the only deliberate
    #     difference is the bf16 quantization of the conv1 inputs (f32 accumulation).
    y_ref = _reference_forward(params, x)
    err = float(jnp.max(jnp.abs(y - y_ref)))
    assert err < 5e-2, f"mismatch vs f32 reference: max abs err = {err}"

    print("KERNEL_OK")
</pallas_src>

<mosaic_0001>
module attributes {stable_mosaic.version = 11 : i64} {
  func.func @_fused_cnn_kernel(%arg0: i32, %arg1: memref<1x16x8192xbf16, #tpu.memory_space<vmem>>, %arg2: memref<16x16xbf16, #tpu.memory_space<vmem>>, %arg3: memref<16x1xf32, #tpu.memory_space<vmem>>, %arg4: memref<32x64xf32, #tpu.memory_space<vmem>>, %arg5: memref<32x1xf32, #tpu.memory_space<vmem>>, %arg6: memref<64x128xf32, #tpu.memory_space<vmem>>, %arg7: memref<64x1xf32, #tpu.memory_space<vmem>>, %arg8: memref<8x256xf32, #tpu.memory_space<vmem>>, %arg9: memref<8x1xf32, #tpu.memory_space<vmem>>, %arg10: memref<1x8x128xf32, #tpu.memory_space<vmem>>) attributes {dimension_semantics = [#tpu.dimension_semantics<parallel>], iteration_bounds = array<i64: 1>, scalar_prefetch = 0 : i64, scratch_operands = 0 : i64, tpu.core_type = #tpu.core_type<tc>, window_params = [{transform_indices = @transform_0, window_bounds = array<i64: 1, 16, 8192>}, {pipeline_mode = #tpu.pipeline_mode<synchronous>, transform_indices = @transform_1, window_bounds = array<i64: 16, 16>}, {pipeline_mode = #tpu.pipeline_mode<synchronous>, transform_indices = @transform_2, window_bounds = array<i64: 16, 1>}, {pipeline_mode = #tpu.pipeline_mode<synchronous>, transform_indices = @transform_3, window_bounds = array<i64: 32, 64>}, {pipeline_mode = #tpu.pipeline_mode<synchronous>, transform_indices = @transform_4, window_bounds = array<i64: 32, 1>}, {pipeline_mode = #tpu.pipeline_mode<synchronous>, transform_indices = @transform_5, window_bounds = array<i64: 64, 128>}, {pipeline_mode = #tpu.pipeline_mode<synchronous>, transform_indices = @transform_6, window_bounds = array<i64: 64, 1>}, {pipeline_mode = #tpu.pipeline_mode<synchronous>, transform_indices = @transform_7, window_bounds = array<i64: 8, 256>}, {pipeline_mode = #tpu.pipeline_mode<synchronous>, transform_indices = @transform_8, window_bounds = array<i64: 8, 1>}, {transform_indices = @transform_9, window_bounds = array<i64: 1, 8, 128>}]} {
    %c0 = arith.constant 0 : index
    %c0_0 = arith.constant 0 : index
    %0 = vector.load %arg2[%c0, %c0_0] : memref<16x16xbf16, #tpu.memory_space<vmem>>, vector<16x16xbf16>
    %c0_1 = arith.constant 0 : index
    %c0_2 = arith.constant 0 : index
    %c0_3 = arith.constant 0 : index
    %1 = vector.load %arg1[%c0_1, %c0_2, %c0_3] : memref<1x16x8192xbf16, #tpu.memory_space<vmem>>, vector<1x16x8192xbf16>
    %2 = vector.shape_cast %1 : vector<1x16x8192xbf16> to vector<16x8192xbf16>
    %cst = arith.constant dense<0.000000e+00> : vector<16x8192xf32>
    %3 = tpu.matmul %0, %2, %cst {dimension_numbers = #tpu.dot_dimension_numbers<[1], [0], [0], [1], [0, 0, 1, 1], [], []>} : vector<16x16xbf16>, vector<16x8192xbf16>, vector<16x8192xf32> -> vector<16x8192xf32>
    %c0_4 = arith.constant 0 : index
    %c0_5 = arith.constant 0 : index
    %4 = vector.load %arg3[%c0_4, %c0_5] : memref<16x1xf32, #tpu.memory_space<vmem>>, vector<16x1xf32>
    %5 = vector.broadcast %4 : vector<16x1xf32> to vector<16x8192xf32>
    %6 = arith.addf %3, %5 : vector<16x8192xf32>
    %cst_6 = arith.constant 0.000000e+00 : f32
    %7 = vector.broadcast %cst_6 : f32 to vector<16x8192xf32>
    %8 = arith.maximumf %6, %7 : vector<16x8192xf32>
    %9 = vector.extract_strided_slice %8 {offsets = [0, 0], sizes = [16, 2048], strides = [1, 1]} : vector<16x8192xf32> to vector<16x2048xf32>
    %10 = vector.extract_strided_slice %8 {offsets = [0, 2048], sizes = [16, 2048], strides = [1, 1]} : vector<16x8192xf32> to vector<16x2048xf32>
    %11 = vector.extract_strided_slice %8 {offsets = [0, 4096], sizes = [16, 2048], strides = [1, 1]} : vector<16x8192xf32> to vector<16x2048xf32>
    %12 = vector.extract_strided_slice %8 {offsets = [0, 6144], sizes = [16, 2048], strides = [1, 1]} : vector<16x8192xf32> to vector<16x2048xf32>
    %13 = tpu.concatenate %9, %10, %11, %12 in 0 : vector<16x2048xf32>, vector<16x2048xf32>, vector<16x2048xf32>, vector<16x2048xf32> -> vector<64x2048xf32>
    %c0_7 = arith.constant 0 : index
    %c0_8 = arith.constant 0 : index
    %14 = vector.load %arg4[%c0_7, %c0_8] : memref<32x64xf32, #tpu.memory_space<vmem>>, vector<32x64xf32>
    %cst_9 = arith.constant dense<0.000000e+00> : vector<32x2048xf32>
    %15 = tpu.matmul %14, %13, %cst_9 {dimension_numbers = #tpu.dot_dimension_numbers<[1], [0], [0], [1], [0, 0, 1, 1], [], []>} : vector<32x64xf32>, vector<64x2048xf32>, vector<32x2048xf32> -> vector<32x2048xf32>
    %c0_10 = arith.constant 0 : index
    %c0_11 = arith.constant 0 : index
    %16 = vector.load %arg5[%c0_10, %c0_11] : memref<32x1xf32, #tpu.memory_space<vmem>>, vector<32x1xf32>
    %17 = vector.broadcast %16 : vector<32x1xf32> to vector<32x2048xf32>
    %18 = arith.addf %15, %17 : vector<32x2048xf32>
    %cst_12 = arith.constant 0.000000e+00 : f32
    %19 = vector.broadcast %cst_12 : f32 to vector<32x2048xf32>
    %20 = arith.maximumf %18, %19 : vector<32x2048xf32>
    %21 = vector.extract_strided_slice %20 {offsets = [0, 0], sizes = [32, 512], strides = [1, 1]} : vector<32x2048xf32> to vector<32x512xf32>
    %22 = vector.extract_strided_slice %20 {offsets = [0, 512], sizes = [32, 512], strides = [1, 1]} : vector<32x2048xf32> to vector<32x512xf32>
    %23 = vector.extract_strided_slice %20 {offsets = [0, 1024], sizes = [32, 512], strides = [1, 1]} : vector<32x2048xf32> to vector<32x512xf32>
    %24 = vector.extract_strided_slice %20 {offsets = [0, 1536], sizes = [32, 512], strides = [1, 1]} : vector<32x2048xf32> to vector<32x512xf32>
    %25 = tpu.concatenate %21, %22, %23, %24 in 0 : vector<32x512xf32>, vector<32x512xf32>, vector<32x512xf32>, vector<32x512xf32> -> vector<128x512xf32>
    %c0_13 = arith.constant 0 : index
    %c0_14 = arith.constant 0 : index
    %26 = vector.load %arg6[%c0_13, %c0_14] : memref<64x128xf32, #tpu.memory_space<vmem>>, vector<64x128xf32>
    %cst_15 = arith.constant dense<0.000000e+00> : vector<64x512xf32>
    %27 = tpu.matmul %26, %25, %cst_15 {dimension_numbers = #tpu.dot_dimension_numbers<[1], [0], [0], [1], [0, 0, 1, 1], [], []>} : vector<64x128xf32>, vector<128x512xf32>, vector<64x512xf32> -> vector<64x512xf32>
    %c0_16 = arith.constant 0 : index
    %c0_17 = arith.constant 0 : index
    %28 = vector.load %arg7[%c0_16, %c0_17] : memref<64x1xf32, #tpu.memory_space<vmem>>, vector<64x1xf32>
    %29 = vector.broadcast %28 : vector<64x1xf32> to vector<64x512xf32>
    %30 = arith.addf %27, %29 : vector<64x512xf32>
    %cst_18 = arith.constant 0.000000e+00 : f32
    %31 = vector.broadcast %cst_18 : f32 to vector<64x512xf32>
    %32 = arith.maximumf %30, %31 : vector<64x512xf32>
    %33 = vector.extract_strided_slice %32 {offsets = [0, 0], sizes = [64, 128], strides = [1, 1]} : vector<64x512xf32> to vector<64x128xf32>
    %34 = vector.extract_strided_slice %32 {offsets = [0, 128], sizes = [64, 128], strides = [1, 1]} : vector<64x512xf32> to vector<64x128xf32>
    %35 = vector.extract_strided_slice %32 {offsets = [0, 256], sizes = [64, 128], strides = [1, 1]} : vector<64x512xf32> to vector<64x128xf32>
    %36 = vector.extract_strided_slice %32 {offsets = [0, 384], sizes = [64, 128], strides = [1, 1]} : vector<64x512xf32> to vector<64x128xf32>
    %37 = tpu.concatenate %33, %34, %35, %36 in 0 : vector<64x128xf32>, vector<64x128xf32>, vector<64x128xf32>, vector<64x128xf32> -> vector<256x128xf32>
    %c0_19 = arith.constant 0 : index
    %c0_20 = arith.constant 0 : index
    %38 = vector.load %arg8[%c0_19, %c0_20] : memref<8x256xf32, #tpu.memory_space<vmem>>, vector<8x256xf32>
    %cst_21 = arith.constant dense<0.000000e+00> : vector<8x128xf32>
    %39 = tpu.matmul %38, %37, %cst_21 {dimension_numbers = #tpu.dot_dimension_numbers<[1], [0], [0], [1], [0, 0, 1, 1], [], []>} : vector<8x256xf32>, vector<256x128xf32>, vector<8x128xf32> -> vector<8x128xf32>
    %c0_22 = arith.constant 0 : index
    %c0_23 = arith.constant 0 : index
    %40 = vector.load %arg9[%c0_22, %c0_23] : memref<8x1xf32, #tpu.memory_space<vmem>>, vector<8x1xf32>
    %41 = vector.broadcast %40 : vector<8x1xf32> to vector<8x128xf32>
    %42 = arith.addf %39, %41 : vector<8x128xf32>
    %c0_24 = arith.constant 0 : index
    %c0_25 = arith.constant 0 : index
    %c0_26 = arith.constant 0 : index
    %43 = vector.load %arg10[%c0_24, %c0_25, %c0_26] : memref<1x8x128xf32, #tpu.memory_space<vmem>>, vector<1x8x128xf32>
    %44 = vector.shape_cast %43 : vector<1x8x128xf32> to vector<8x128xf32>
    %45 = vector.shape_cast %42 : vector<8x128xf32> to vector<1x8x128xf32>
    tpu.vector_store %arg10[%c0_24, %c0_25, %c0_26], %45 {strides = array<i32>} : memref<1x8x128xf32, #tpu.memory_space<vmem>>, vector<1x8x128xf32>,
    return
  }
  func.func @transform_0(%arg0: i32) -> (i32, i32, i32) {
    %c0_i32 = arith.constant 0 : i32
    %c0_i32_0 = arith.constant 0 : i32
    %c0_i32_1 = arith.constant 0 : i32
    return %arg0, %c0_i32, %c0_i32_0 : i32, i32, i32
  }
  func.func @transform_1(%arg0: i32) -> (i32, i32) {
    %c0_i32 = arith.constant 0 : i32
    %c0_i32_0 = arith.constant 0 : i32
    %c0_i32_1 = arith.constant 0 : i32
    return %c0_i32, %c0_i32_0 : i32, i32
  }
  func.func @transform_2(%arg0: i32) -> (i32, i32) {
    %c0_i32 = arith.constant 0 : i32
    %c0_i32_0 = arith.constant 0 : i32
    %c0_i32_1 = arith.constant 0 : i32
    return %c0_i32, %c0_i32_0 : i32, i32
  }
  func.func @transform_3(%arg0: i32) -> (i32, i32) {
    %c0_i32 = arith.constant 0 : i32
    %c0_i32_0 = arith.constant 0 : i32
    %c0_i32_1 = arith.constant 0 : i32
    return %c0_i32, %c0_i32_0 : i32, i32
  }
  func.func @transform_4(%arg0: i32) -> (i32, i32) {
    %c0_i32 = arith.constant 0 : i32
    %c0_i32_0 = arith.constant 0 : i32
    %c0_i32_1 = arith.constant 0 : i32
    return %c0_i32, %c0_i32_0 : i32, i32
  }
  func.func @transform_5(%arg0: i32) -> (i32, i32) {
    %c0_i32 = arith.constant 0 : i32
    %c0_i32_0 = arith.constant 0 : i32
    %c0_i32_1 = arith.constant 0 : i32
    return %c0_i32, %c0_i32_0 : i32, i32
  }
  func.func @transform_6(%arg0: i32) -> (i32, i32) {
    %c0_i32 = arith.constant 0 : i32
    %c0_i32_0 = arith.constant 0 : i32
    %c0_i32_1 = arith.constant 0 : i32
    return %c0_i32, %c0_i32_0 : i32, i32
  }
  func.func @transform_7(%arg0: i32) -> (i32, i32) {
    %c0_i32 = arith.constant 0 : i32
    %c0_i32_0 = arith.constant 0 : i32
    %c0_i32_1 = arith.constant 0 : i32
    return %c0_i32, %c0_i32_0 : i32, i32
  }
  func.func @transform_8(%arg0: i32) -> (i32, i32) {
    %c0_i32 = arith.constant 0 : i32
    %c0_i32_0 = arith.constant 0 : i32
    %c0_i32_1 = arith.constant 0 : i32
    return %c0_i32, %c0_i32_0 : i32, i32
  }
  func.func @transform_9(%arg0: i32) -> (i32, i32, i32) {
    %c0_i32 = arith.constant 0 : i32
    %c0_i32_0 = arith.constant 0 : i32
    %c0_i32_1 = arith.constant 0 : i32
    return %arg0, %c0_i32, %c0_i32_0 : i32, i32, i32
  }
}

</mosaic_0001>

<llo_original>
// kernel: convolutional_network_forward.1
$region0: #{convolutional_network_forward.1}
  #allocation0 [shape = 'u32[]', space=smem, size = 0x4, offset = 0x4, fixed_abs, tag = 'smem constant byte address 0x4 - core index']
  #allocation1 [shape = 'u32[144,128]{1,0:T(1,128)}', space=vmem, size = 0x12000, scoped, tag = 'internal scratch']
  %s0 = inlined_call_operand.vmem [shape: bf16[1,16,8192], index: 0, kind: input, shape index: {}]
  %s1 = inlined_call_operand.vmem [shape: bf16[16,16], index: 1, kind: input, shape index: {}]
  %s2 = inlined_call_operand.vmem [shape: f32[16,1], index: 2, kind: input, shape index: {}]
  %s3 = inlined_call_operand.vmem [shape: f32[32,64], index: 3, kind: input, shape index: {}]
  %s4 = inlined_call_operand.vmem [shape: f32[32,1], index: 4, kind: input, shape index: {}]
  %s5 = inlined_call_operand.vmem [shape: f32[64,128], index: 5, kind: input, shape index: {}]
  %s6 = inlined_call_operand.vmem [shape: f32[64,1], index: 6, kind: input, shape index: {}]
  %s7 = inlined_call_operand.vmem [shape: f32[8,256], index: 7, kind: input, shape index: {}]
  %s8 = inlined_call_operand.vmem [shape: f32[8,1], index: 8, kind: input, shape index: {}]
  %s9 = inlined_call_operand.vmem [shape: f32[1,8,128], index: 9, kind: output, shape index: {}]
  %s10 = sld [smem:[#allocation0]]
  $region46: #{convolutional_network_forward.1} parent=0
    _
  %s12 = ssub.s32 1, %s10
  %s13 = scalar_select 0, %s12, %s10
  // Predicated region
  $region2: #{convolutional_network_forward.1} parent=0 // pred_check
    _
  $region3: #{convolutional_network_forward.1} parent=0 // pred_check_branch
    %15 = sbr.rel (0) target = $region5
  $region4: #{convolutional_network_forward.1} parent=0 // pred_region
    _
  $region5: #{convolutional_network_forward.1} parent=0 // pred_fallthru
    _
  // Predicated region
  $region6: #{convolutional_network_forward.1} parent=0 // pred_check
    _
  $region7: #{convolutional_network_forward.1} parent=0 // pred_check_branch
    %17 = sbr.rel (0) target = $region9
  $region8: #{convolutional_network_forward.1} parent=0 // pred_region
    _
  $region9: #{convolutional_network_forward.1} parent=0 // pred_fallthru
    _
  // Predicated region
  $region10: #{convolutional_network_forward.1} parent=0 // pred_check
    _
  $region11: #{convolutional_network_forward.1} parent=0 // pred_check_branch
    %19 = sbr.rel (0) target = $region13
  $region12: #{convolutional_network_forward.1} parent=0 // pred_region
    _
  $region13: #{convolutional_network_forward.1} parent=0 // pred_fallthru
    _
  // Predicated region
  $region14: #{convolutional_network_forward.1} parent=0 // pred_check
    _
  $region15: #{convolutional_network_forward.1} parent=0 // pred_check_branch
    %21 = sbr.rel (0) target = $region17
  $region16: #{convolutional_network_forward.1} parent=0 // pred_region
    _
  $region17: #{convolutional_network_forward.1} parent=0 // pred_fallthru
    _
  // Predicated region
  $region18: #{convolutional_network_forward.1} parent=0 // pred_check
    _
  $region19: #{convolutional_network_forward.1} parent=0 // pred_check_branch
    %23 = sbr.rel (0) target = $region21
  $region20: #{convolutional_network_forward.1} parent=0 // pred_region
    _
  $region21: #{convolutional_network_forward.1} parent=0 // pred_fallthru
    _
  // Predicated region
  $region22: #{convolutional_network_forward.1} parent=0 // pred_check
    _
  $region23: #{convolutional_network_forward.1} parent=0 // pred_check_branch
    %25 = sbr.rel (0) target = $region25
  $region24: #{convolutional_network_forward.1} parent=0 // pred_region
    _
  $region25: #{convolutional_network_forward.1} parent=0 // pred_fallthru
    _
  // Predicated region
  $region26: #{convolutional_network_forward.1} parent=0 // pred_check
    _
  $region27: #{convolutional_network_forward.1} parent=0 // pred_check_branch
    %27 = sbr.rel (0) target = $region29
  $region28: #{convolutional_network_forward.1} parent=0 // pred_region
    _
  $region29: #{convolutional_network_forward.1} parent=0 // pred_fallthru
    _
  // Predicated region
  $region30: #{convolutional_network_forward.1} parent=0 // pred_check
    _
  $region31: #{convolutional_network_forward.1} parent=0 // pred_check_branch
    %29 = sbr.rel (0) target = $region33
  $region32: #{convolutional_network_forward.1} parent=0 // pred_region
    _
  $region33: #{convolutional_network_forward.1} parent=0 // pred_fallthru
    _
  // Predicated region
  $region34: #{convolutional_network_forward.1} parent=0 // pred_check
    _
  $region35: #{convolutional_network_forward.1} parent=0 // pred_check_branch
    %31 = sbr.rel (0) target = $region37
  $region36: #{convolutional_network_forward.1} parent=0 // pred_region
    _
  $region37: #{convolutional_network_forward.1} parent=0 // pred_fallthru
    _
  %v33 = vld [vmem:[%s1] sm:$0xf]
  %v34 = vld [vmem:[%s1 + $0x4] sm:$0xf]
  %v35 = vld [vmem:[%s0] sm:$0xff]
  %v36 = vld [vmem:[%s0 + $0x8] sm:$0xff]
  %v37 = vld [vmem:[%s0 + $0x10] sm:$0xff]
  %v38 = vld [vmem:[%s0 + $0x18] sm:$0xff]
  %v39 = vld [vmem:[%s0 + $0x20] sm:$0xff]
  %v40 = vld [vmem:[%s0 + $0x28] sm:$0xff]
  %v41 = vld [vmem:[%s0 + $0x30] sm:$0xff]
  %v42 = vld [vmem:[%s0 + $0x38] sm:$0xff]
  %v43 = vld [vmem:[%s0 + $0x40] sm:$0xff]
  %v44 = vld [vmem:[%s0 + $0x48] sm:$0xff]
  %v45 = vld [vmem:[%s0 + $0x50] sm:$0xff]
  %v46 = vld [vmem:[%s0 + $0x58] sm:$0xff]
  %v47 = vld [vmem:[%s0 + $0x60] sm:$0xff]
  %v48 = vld [vmem:[%s0 + $0x68] sm:$0xff]
  %v49 = vld [vmem:[%s0 + $0x70] sm:$0xff]
  %v50 = vld [vmem:[%s0 + $0x78] sm:$0xff]
  %v51 = vld [vmem:[%s0 + $0x80] sm:$0xff]
  %v52 = vld [vmem:[%s0 + $0x88] sm:$0xff]
  %v53 = vld [vmem:[%s0 + $0x90] sm:$0xff]
  %v54 = vld [vmem:[%s0 + $0x98] sm:$0xff]
  %v55 = vld [vmem:[%s0 + $0xa0] sm:$0xff]
  %v56 = vld [vmem:[%s0 + $0xa8] sm:$0xff]
  %v57 = vld [vmem:[%s0 + $0xb0] sm:$0xff]
  %v58 = vld [vmem:[%s0 + $0xb8] sm:$0xff]
  %v59 = vld [vmem:[%s0 + $0xc0] sm:$0xff]
  %v60 = vld [vmem:[%s0 + $0xc8] sm:$0xff]
  %v61 = vld [vmem:[%s0 + $0xd0] sm:$0xff]
  %v62 = vld [vmem:[%s0 + $0xd8] sm:$0xff]
  %v63 = vld [vmem:[%s0 + $0xe0] sm:$0xff]
  %v64 = vld [vmem:[%s0 + $0xe8] sm:$0xff]
  %v65 = vld [vmem:[%s0 + $0xf0] sm:$0xff]
  %v66 = vld [vmem:[%s0 + $0xf8] sm:$0xff]
  %v67 = vld [vmem:[%s0 + $0x100] sm:$0xff]
  %v68 = vld [vmem:[%s0 + $0x108] sm:$0xff]
  %v69 = vld [vmem:[%s0 + $0x110] sm:$0xff]
  %v70 = vld [vmem:[%s0 + $0x118] sm:$0xff]
  %v71 = vld [vmem:[%s0 + $0x120] sm:$0xff]
  %v72 = vld [vmem:[%s0 + $0x128] sm:$0xff]
  %v73 = vld [vmem:[%s0 + $0x130] sm:$0xff]
  %v74 = vld [vmem:[%s0 + $0x138] sm:$0xff]
  %v75 = vld [vmem:[%s0 + $0x140] sm:$0xff]
  %v76 = vld [vmem:[%s0 + $0x148] sm:$0xff]
  %v77 = vld [vmem:[%s0 + $0x150] sm:$0xff]
  %v78 = vld [vmem:[%s0 + $0x158] sm:$0xff]
  %v79 = vld [vmem:[%s0 + $0x160] sm:$0xff]
  %v80 = vld [vmem:[%s0 + $0x168] sm:$0xff]
  %v81 = vld [vmem:[%s0 + $0x170] sm:$0xff]
  %v82 = vld [vmem:[%s0 + $0x178] sm:$0xff]
  %v83 = vld [vmem:[%s0 + $0x180] sm:$0xff]
  %v84 = vld [vmem:[%s0 + $0x188] sm:$0xff]
  %v85 = vld [vmem:[%s0 + $0x190] sm:$0xff]
  %v86 = vld [vmem:[%s0 + $0x198] sm:$0xff]
  %v87 = vld [vmem:[%s0 + $0x1a0] sm:$0xff]
  %v88 = vld [vmem:[%s0 + $0x1a8] sm:$0xff]
  %v89 = vld [vmem:[%s0 + $0x1b0] sm:$0xff]
  %v90 = vld [vmem:[%s0 + $0x1b8] sm:$0xff]
  %v91 = vld [vmem:[%s0 + $0x1c0] sm:$0xff]
  %v92 = vld [vmem:[%s0 + $0x1c8] sm:$0xff]
  %v93 = vld [vmem:[%s0 + $0x1d0] sm:$0xff]
  %v94 = vld [vmem:[%s0 + $0x1d8] sm:$0xff]
  %v95 = vld [vmem:[%s0 + $0x1e0] sm:$0xff]
  %v96 = vld [vmem:[%s0 + $0x1e8] sm:$0xff]
  %v97 = vld [vmem:[%s0 + $0x1f0] sm:$0xff]
  %v98 = vld [vmem:[%s0 + $0x1f8] sm:$0xff]
  %v99 = vld [vmem:[%s2] sm:$0xff]
  %v100 = vld [vmem:[%s2 + $0x8] sm:$0xff]
  %102 = vset.pattern.permute.xlu0 0
  %103 = vperm.xlu0 %102, %v99
  %v104 = vpop.permute.xlu0 %103
  %107 = vset.pattern.permute.xlu0 0
  %108 = vperm.xlu0 %107, %v100
  %v109 = vpop.permute.xlu0 %108
  %v113 = vunpack.c.l.b16 %v33
  %v114 = vunpack.c.l.b16 %v34
  %v115 = vpack.c.b16 %v114, %v113
  %v180 = vunpack.c.l.b16 %v35
  %v181 = vunpack.c.h.b16 %v35
  %v182 = vunpack.c.l.b16 %v36
  %v183 = vunpack.c.h.b16 %v36
  %v184 = vunpack.c.l.b16 %v37
  %v185 = vunpack.c.h.b16 %v37
  %v186 = vunpack.c.l.b16 %v38
  %v187 = vunpack.c.h.b16 %v38
  %v188 = vunpack.c.l.b16 %v39
  %v189 = vunpack.c.h.b16 %v39
  %v190 = vunpack.c.l.b16 %v40
  %v191 = vunpack.c.h.b16 %v40
  %v192 = vunpack.c.l.b16 %v41
  %v193 = vunpack.c.h.b16 %v41
  %v194 = vunpack.c.l.b16 %v42
  %v195 = vunpack.c.h.b16 %v42
  %v196 = vunpack.c.l.b16 %v43
  %v197 = vunpack.c.h.b16 %v43
  %v198 = vunpack.c.l.b16 %v44
  %v199 = vunpack.c.h.b16 %v44
  %v200 = vunpack.c.l.b16 %v45
  %v201 = vunpack.c.h.b16 %v45
  %v202 = vunpack.c.l.b16 %v46
  %v203 = vunpack.c.h.b16 %v46
  %v204 = vunpack.c.l.b16 %v47
  %v205 = vunpack.c.h.b16 %v47
  %v206 = vunpack.c.l.b16 %v48
  %v207 = vunpack.c.h.b16 %v48
  %v208 = vunpack.c.l.b16 %v49
  %v209 = vunpack.c.h.b16 %v49
  %v210 = vunpack.c.l.b16 %v50
  %v211 = vunpack.c.h.b16 %v50
  %v212 = vunpack.c.l.b16 %v51
  %v213 = vunpack.c.h.b16 %v51
  %v214 = vunpack.c.l.b16 %v52
  %v215 = vunpack.c.h.b16 %v52
  %v216 = vunpack.c.l.b16 %v53
  %v217 = vunpack.c.h.b16 %v53
  %v218 = vunpack.c.l.b16 %v54
  %v219 = vunpack.c.h.b16 %v54
  %v220 = vunpack.c.l.b16 %v55
  %v221 = vunpack.c.h.b16 %v55
  %v222 = vunpack.c.l.b16 %v56
  %v223 = vunpack.c.h.b16 %v56
  %v224 = vunpack.c.l.b16 %v57
  %v225 = vunpack.c.h.b16 %v57
  %v226 = vunpack.c.l.b16 %v58
  %v227 = vunpack.c.h.b16 %v58
  %v228 = vunpack.c.l.b16 %v59
  %v229 = vunpack.c.h.b16 %v59
  %v230 = vunpack.c.l.b16 %v60
  %v231 = vunpack.c.h.b16 %v60
  %v232 = vunpack.c.l.b16 %v61
  %v233 = vunpack.c.h.b16 %v61
  %v234 = vunpack.c.l.b16 %v62
  %v235 = vunpack.c.h.b16 %v62
  %v236 = vunpack.c.l.b16 %v63
  %v237 = vunpack.c.h.b16 %v63
  %v238 = vunpack.c.l.b16 %v64
  %v239 = vunpack.c.h.b16 %v64
  %v240 = vunpack.c.l.b16 %v65
  %v241 = vunpack.c.h.b16 %v65
  %v242 = vunpack.c.l.b16 %v66
  %v243 = vunpack.c.h.b16 %v66
  %v244 = vunpack.c.l.b16 %v67
  %v245 = vunpack.c.h.b16 %v67
  %v246 = vunpack.c.l.b16 %v68
  %v247 = vunpack.c.h.b16 %v68
  %v248 = vunpack.c.l.b16 %v69
  %v249 = vunpack.c.h.b16 %v69
  %v250 = vunpack.c.l.b16 %v70
  %v251 = vunpack.c.h.b16 %v70
  %v252 = vunpack.c.l.b16 %v71
  %v253 = vunpack.c.h.b16 %v71
  %v254 = vunpack.c.l.b16 %v72
  %v255 = vunpack.c.h.b16 %v72
  %v256 = vunpack.c.l.b16 %v73
  %v257 = vunpack.c.h.b16 %v73
  %v258 = vunpack.c.l.b16 %v74
  %v259 = vunpack.c.h.b16 %v74
  %v260 = vunpack.c.l.b16 %v75
  %v261 = vunpack.c.h.b16 %v75
  %v262 = vunpack.c.l.b16 %v76
  %v263 = vunpack.c.h.b16 %v76
  %v264 = vunpack.c.l.b16 %v77
  %v265 = vunpack.c.h.b16 %v77
  %v266 = vunpack.c.l.b16 %v78
  %v267 = vunpack.c.h.b16 %v78
  %v268 = vunpack.c.l.b16 %v79
  %v269 = vunpack.c.h.b16 %v79
  %v270 = vunpack.c.l.b16 %v80
  %v271 = vunpack.c.h.b16 %v80
  %v272 = vunpack.c.l.b16 %v81
  %v273 = vunpack.c.h.b16 %v81
  %v274 = vunpack.c.l.b16 %v82
  %v275 = vunpack.c.h.b16 %v82
  %v276 = vunpack.c.l.b16 %v83
  %v277 = vunpack.c.h.b16 %v83
  %v278 = vunpack.c.l.b16 %v84
  %v279 = vunpack.c.h.b16 %v84
  %v280 = vunpack.c.l.b16 %v85
  %v281 = vunpack.c.h.b16 %v85
  %v282 = vunpack.c.l.b16 %v86
  %v283 = vunpack.c.h.b16 %v86
  %v284 = vunpack.c.l.b16 %v87
  %v285 = vunpack.c.h.b16 %v87
  %v286 = vunpack.c.l.b16 %v88
  %v287 = vunpack.c.h.b16 %v88
  %v288 = vunpack.c.l.b16 %v89
  %v289 = vunpack.c.h.b16 %v89
  %v290 = vunpack.c.l.b16 %v90
  %v291 = vunpack.c.h.b16 %v90
  %v292 = vunpack.c.l.b16 %v91
  %v293 = vunpack.c.h.b16 %v91
  %v294 = vunpack.c.l.b16 %v92
  %v295 = vunpack.c.h.b16 %v92
  %v296 = vunpack.c.l.b16 %v93
  %v297 = vunpack.c.h.b16 %v93
  %v298 = vunpack.c.l.b16 %v94
  %v299 = vunpack.c.h.b16 %v94
  %v300 = vunpack.c.l.b16 %v95
  %v301 = vunpack.c.h.b16 %v95
  %v302 = vunpack.c.l.b16 %v96
  %v303 = vunpack.c.h.b16 %v96
  %v304 = vunpack.c.l.b16 %v97
  %v305 = vunpack.c.h.b16 %v97
  %v306 = vunpack.c.l.b16 %v98
  %v307 = vunpack.c.h.b16 %v98
  %v308 = vpack.c.b16 %v244, %v180
  %v309 = vpack.c.b16 %v245, %v181
  %v310 = vpack.c.b16 %v246, %v182
  %v311 = vpack.c.b16 %v247, %v183
  %v312 = vpack.c.b16 %v248, %v184
  %v313 = vpack.c.b16 %v249, %v185
  %v314 = vpack.c.b16 %v250, %v186
  %v315 = vpack.c.b16 %v251, %v187
  %v316 = vpack.c.b16 %v252, %v188
  %v317 = vpack.c.b16 %v253, %v189
  %v318 = vpack.c.b16 %v254, %v190
  %v319 = vpack.c.b16 %v255, %v191
  %v320 = vpack.c.b16 %v256, %v192
  %v321 = vpack.c.b16 %v257, %v193
  %v322 = vpack.c.b16 %v258, %v194
  %v323 = vpack.c.b16 %v259, %v195
  %v324 = vpack.c.b16 %v260, %v196
  %v325 = vpack.c.b16 %v261, %v197
  %v326 = vpack.c.b16 %v262, %v198
  %v327 = vpack.c.b16 %v263, %v199
  %v328 = vpack.c.b16 %v264, %v200
  %v329 = vpack.c.b16 %v265, %v201
  %v330 = vpack.c.b16 %v266, %v202
  %v331 = vpack.c.b16 %v267, %v203
  %v332 = vpack.c.b16 %v268, %v204
  %v333 = vpack.c.b16 %v269, %v205
  %v334 = vpack.c.b16 %v270, %v206
  %v335 = vpack.c.b16 %v271, %v207
  %v336 = vpack.c.b16 %v272, %v208
  %v337 = vpack.c.b16 %v273, %v209
  %v338 = vpack.c.b16 %v274, %v210
  %v339 = vpack.c.b16 %v275, %v211
  %v340 = vpack.c.b16 %v276, %v212
  %v341 = vpack.c.b16 %v277, %v213
  %v342 = vpack.c.b16 %v278, %v214
  %v343 = vpack.c.b16 %v279, %v215
  %v344 = vpack.c.b16 %v280, %v216
  %v345 = vpack.c.b16 %v281, %v217
  %v346 = vpack.c.b16 %v282, %v218
  %v347 = vpack.c.b16 %v283, %v219
  %v348 = vpack.c.b16 %v284, %v220
  %v349 = vpack.c.b16 %v285, %v221
  %v350 = vpack.c.b16 %v286, %v222
  %v351 = vpack.c.b16 %v287, %v223
  %v352 = vpack.c.b16 %v288, %v224
  %v353 = vpack.c.b16 %v289, %v225
  %v354 = vpack.c.b16 %v290, %v226
  %v355 = vpack.c.b16 %v291, %v227
  %v356 = vpack.c.b16 %v292, %v228
  %v357 = vpack.c.b16 %v293, %v229
  %v358 = vpack.c.b16 %v294, %v230
  %v359 = vpack.c.b16 %v295, %v231
  %v360 = vpack.c.b16 %v296, %v232
  %v361 = vpack.c.b16 %v297, %v233
  %v362 = vpack.c.b16 %v298, %v234
  %v363 = vpack.c.b16 %v299, %v235
  %v364 = vpack.c.b16 %v300, %v236
  %v365 = vpack.c.b16 %v301, %v237
  %v366 = vpack.c.b16 %v302, %v238
  %v367 = vpack.c.b16 %v303, %v239
  %v368 = vpack.c.b16 %v304, %v240
  %v369 = vpack.c.b16 %v305, %v241
  %v370 = vpack.c.b16 %v306, %v242
  %v371 = vpack.c.b16 %v307, %v243
  %vm436 = vcmask 130048
  %v438 = vsel %vm436, %v115, 0
  %440 = vmatprep.subr.bf16.mxu0 %v309
  %441 = vmatpush1.bf16.msra.mxu0 %v308
  %442 = vmatprep.subr.bf16.mxu0 0
  %443 = vmatpush1.bf16.msra.mxu0 0
  %444 = vmatprep.subr.bf16.mxu0 0
  %445 = vmatpush1.bf16.msra.mxu0 0
  %446 = vmatprep.subr.bf16.mxu0 0
  %447 = vmatpush1.bf16.msra.mxu0 0
  %448 = vmatprep.subr.bf16.mxu0 0
  %449 = vmatpush1.bf16.msra.mxu0 0
  %450 = vmatprep.subr.bf16.mxu0 0
  %451 = vmatpush1.bf16.msra.mxu0 0
  %452 = vmatprep.subr.bf16.mxu0 0
  %453 = vmatpush1.bf16.msra.mxu0 0
  %454 = vmatprep.subr.bf16.mxu0 0
  %455 = vmatpush1.bf16.msra.mxu0 0
  %456 = vmatprep.subr.bf16.mxu0 0
  %457 = vmatpush1.bf16.msra.mxu0 0
  %458 = vmatprep.subr.bf16.mxu0 0
  %459 = vmatpush1.bf16.msra.mxu0 0
  %460 = vmatprep.subr.bf16.mxu0 0
  %461 = vmatpush1.bf16.msra.mxu0 0
  %462 = vmatprep.subr.bf16.mxu0 0
  %463 = vmatpush1.bf16.msra.mxu0 0
  %464 = vmatprep.subr.bf16.mxu0 0
  %465 = vmatpush1.bf16.msra.mxu0 0
  %466 = vmatprep.subr.bf16.mxu0 0
  %467 = vmatpush1.bf16.msra.mxu0 0
  %468 = vmatprep.subr.bf16.mxu0 0
  %469 = vmatpush1.bf16.msra.mxu0 0
  %470 = vmatprep.subr.bf16.mxu0 0
  %471 = vmatpush1.bf16.msra.mxu0 0
  %472 = vmatprep.mubr.bf16.mxu0 0
  %473 = vmatmul.mubr.bf16.gmra.mrb[0].mxu0 %v438
  %v474 = vpop.f32.mrb[0].mxu0
  %v475 = vadd.f32 %v104, %v474
  %v476 = vpop.f32.mrb[0].mxu0
  %v477 = vadd.f32 %v104, %v476
  %v478 = vpop.f32.mrb[0].mxu0
  %v479 = vadd.f32 %v109, %v478
  %v480 = vpop.f32.mrb[0].mxu0
  %v481 = vadd.f32 %v109, %v480
  %482 = vdwg.mxu0
  %483 = vmatprep.subr.bf16.mxu0 %v311
  %484 = vmatpush1.bf16.msra.mxu0 %v310
  %485 = vmatprep.subr.bf16.mxu0 0
  %486 = vmatpush1.bf16.msra.mxu0 0
  %487 = vmatprep.subr.bf16.mxu0 0
  %488 = vmatpush1.bf16.msra.mxu0 0
  %489 = vmatprep.subr.bf16.mxu0 0
  %490 = vmatpush1.bf16.msra.mxu0 0
  %491 = vmatprep.subr.bf16.mxu0 0
  %492 = vmatpush1.bf16.msra.mxu0 0
  %493 = vmatprep.subr.bf16.mxu0 0
  %494 = vmatpush1.bf16.msra.mxu0 0
  %495 = vmatprep.subr.bf16.mxu0 0
  %496 = vmatpush1.bf16.msra.mxu0 0
  %497 = vmatprep.subr.bf16.mxu0 0
  %498 = vmatpush1.bf16.msra.mxu0 0
  %499 = vmatprep.subr.bf16.mxu0 0
  %500 = vmatpush1.bf16.msra.mxu0 0
  %501 = vmatprep.subr.bf16.mxu0 0
  %502 = vmatpush1.bf16.msra.mxu0 0
  %503 = vmatprep.subr.bf16.mxu0 0
  %504 = vmatpush1.bf16.msra.mxu0 0
  %505 = vmatprep.subr.bf16.mxu0 0
  %506 = vmatpush1.bf16.msra.mxu0 0
  %507 = vmatprep.subr.bf16.mxu0 0
  %508 = vmatpush1.bf16.msra.mxu0 0
  %509 = vmatprep.subr.bf16.mxu0 0
  %510 = vmatpush1.bf16.msra.mxu0 0
  %511 = vmatprep.subr.bf16.mxu0 0
  %512 = vmatpush1.bf16.msra.mxu0 0
  %513 = vmatprep.subr.bf16.mxu0 0
  %514 = vmatpush1.bf16.msra.mxu0 0
  %515 = vmatprep.mubr.bf16.mxu0 0
  %516 = vmatmul.mubr.bf16.gmra.mrb[0].mxu0 %v438
  %v517 = vpop.f32.mrb[0].mxu0
  %v518 = vadd.f32 %v104, %v517
  %v519 = vpop.f32.mrb[0].mxu0
  %v520 = vadd.f32 %v104, %v519
  %v521 = vpop.f32.mrb[0].mxu0
  %v522 = vadd.f32 %v109, %v521
  %v523 = vpop.f32.mrb[0].mxu0
  %v524 = vadd.f32 %v109, %v523
  %525 = vdwg.mxu0
  %526 = vmatprep.subr.bf16.mxu0 %v313
  %527 = vmatpush1.bf16.msra.mxu0 %v312
  %528 = vmatprep.subr.bf16.mxu0 0
  %529 = vmatpush1.bf16.msra.mxu0 0
  %530 = vmatprep.subr.bf16.mxu0 0
  %531 = vmatpush1.bf16.msra.mxu0 0
  %532 = vmatprep.subr.bf16.mxu0 0
  %533 = vmatpush1.bf16.msra.mxu0 0
  %534 = vmatprep.subr.bf16.mxu0 0
  %535 = vmatpush1.bf16.msra.mxu0 0
  %536 = vmatprep.subr.bf16.mxu0 0
  %537 = vmatpush1.bf16.msra.mxu0 0
  %538 = vmatprep.subr.bf16.mxu0 0
  %539 = vmatpush1.bf16.msra.mxu0 0
  %540 = vmatprep.subr.bf16.mxu0 0
  %541 = vmatpush1.bf16.msra.mxu0 0
  %542 = vmatprep.subr.bf16.mxu0 0
  %543 = vmatpush1.bf16.msra.mxu0 0
  %544 = vmatprep.subr.bf16.mxu0 0
  %545 = vmatpush1.bf16.msra.mxu0 0
  %546 = vmatprep.subr.bf16.mxu0 0
  %547 = vmatpush1.bf16.msra.mxu0 0
  %548 = vmatprep.subr.bf16.mxu0 0
  %549 = vmatpush1.bf16.msra.mxu0 0
  %550 = vmatprep.subr.bf16.mxu0 0
  %551 = vmatpush1.bf16.msra.mxu0 0
  %552 = vmatprep.subr.bf16.mxu0 0
  %553 = vmatpush1.bf16.msra.mxu0 0
  %554 = vmatprep.subr.bf16.mxu0 0
  %555 = vmatpush1.bf16.msra.mxu0 0
  %556 = vmatprep.subr.bf16.mxu0 0
  %557 = vmatpush1.bf16.msra.mxu0 0
  %558 = vmatprep.mubr.bf16.mxu0 0
  %559 = vmatmul.mubr.bf16.gmra.mrb[0].mxu0 %v438
  %v560 = vpop.f32.mrb[0].mxu0
  %v561 = vadd.f32 %v104, %v560
  %v562 = vpop.f32.mrb[0].mxu0
  %v563 = vadd.f32 %v104, %v562
  %v564 = vpop.f32.mrb[0].mxu0
  %v565 = vadd.f32 %v109, %v564
  %v566 = vpop.f32.mrb[0].mxu0
  %v567 = vadd.f32 %v109, %v566
  %568 = vdwg.mxu0
  %569 = vmatprep.subr.bf16.mxu0 %v315
  %570 = vmatpush1.bf16.msra.mxu0 %v314
  %571 = vmatprep.subr.bf16.mxu0 0
  %572 = vmatpush1.bf16.msra.mxu0 0
  %573 = vmatprep.subr.bf16.mxu0 0
  %574 = vmatpush1.bf16.msra.mxu0 0
  %575 = vmatprep.subr.bf16.mxu0 0
  %576 = vmatpush1.bf16.msra.mxu0 0
  %577 = vmatprep.subr.bf16.mxu0 0
  %578 = vmatpush1.bf16.msra.mxu0 0
  %579 = vmatprep.subr.bf16.mxu0 0
  %580 = vmatpush1.bf16.msra.mxu0 0
  %581 = vmatprep.subr.bf16.mxu0 0
  %582 = vmatpush1.bf16.msra.mxu0 0
  %583 = vmatprep.subr.bf16.mxu0 0
  %584 = vmatpush1.bf16.msra.mxu0 0
  %585 = vmatprep.subr.bf16.mxu0 0
  %586 = vmatpush1.bf16.msra.mxu0 0
  %587 = vmatprep.subr.bf16.mxu0 0
  %588 = vmatpush1.bf16.msra.mxu0 0
  %589 = vmatprep.subr.bf16.mxu0 0
  %590 = vmatpush1.bf16.msra.mxu0 0
  %591 = vmatprep.subr.bf16.mxu0 0
  %592 = vmatpush1.bf16.msra.mxu0 0
  %593 = vmatprep.subr.bf16.mxu0 0
  %594 = vmatpush1.bf16.msra.mxu0 0
  %595 = vmatprep.subr.bf16.mxu0 0
  %596 = vmatpush1.bf16.msra.mxu0 0
  %597 = vmatprep.subr.bf16.mxu0 0
  %598 = vmatpush1.bf16.msra.mxu0 0
  %599 = vmatprep.subr.bf16.mxu0 0
  %600 = vmatpush1.bf16.msra.mxu0 0
  %601 = vmatprep.mubr.bf16.mxu0 0
  %602 = vmatmul.mubr.bf16.gmra.mrb[0].mxu0 %v438
  %v603 = vpop.f32.mrb[0].mxu0
  %v604 = vadd.f32 %v104, %v603
  %v605 = vpop.f32.mrb[0].mxu0
  %v606 = vadd.f32 %v104, %v605
  %v607 = vpop.f32.mrb[0].mxu0
  %v608 = vadd.f32 %v109, %v607
  %v609 = vpop.f32.mrb[0].mxu0
  %v610 = vadd.f32 %v109, %v609
  %611 = vdwg.mxu0
  %612 = vmatprep.subr.bf16.mxu0 %v317
  %613 = vmatpush1.bf16.msra.mxu0 %v316
  %614 = vmatprep.subr.bf16.mxu0 0
  %615 = vmatpush1.bf16.msra.mxu0 0
  %616 = vmatprep.subr.bf16.mxu0 0
  %617 = vmatpush1.bf16.msra.mxu0 0
  %618 = vmatprep.subr.bf16.mxu0 0
  %619 = vmatpush1.bf16.msra.mxu0 0
  %620 = vmatprep.subr.bf16.mxu0 0
  %621 = vmatpush1.bf16.msra.mxu0 0
  %622 = vmatprep.subr.bf16.mxu0 0
  %623 = vmatpush1.bf16.msra.mxu0 0
  %624 = vmatprep.subr.bf16.mxu0 0
  %625 = vmatpush1.bf16.msra.mxu0 0
  %626 = vmatprep.subr.bf16.mxu0 0
  %627 = vmatpush1.bf16.msra.mxu0 0
  %628 = vmatprep.subr.bf16.mxu0 0
  %629 = vmatpush1.bf16.msra.mxu0 0
  %630 = vmatprep.subr.bf16.mxu0 0
  %631 = vmatpush1.bf16.msra.mxu0 0
  %632 = vmatprep.subr.bf16.mxu0 0
  %633 = vmatpush1.bf16.msra.mxu0 0
  %634 = vmatprep.subr.bf16.mxu0 0
  %635 = vmatpush1.bf16.msra.mxu0 0
  %636 = vmatprep.subr.bf16.mxu0 0
  %637 = vmatpush1.bf16.msra.mxu0 0
  %638 = vmatprep.subr.bf16.mxu0 0
  %639 = vmatpush1.bf16.msra.mxu0 0
  %640 = vmatprep.subr.bf16.mxu0 0
  %641 = vmatpush1.bf16.msra.mxu0 0
  %642 = vmatprep.subr.bf16.mxu0 0
  %643 = vmatpush1.bf16.msra.mxu0 0
  %644 = vmatprep.mubr.bf16.mxu0 0
  %645 = vmatmul.mubr.bf16.gmra.mrb[0].mxu0 %v438
  %v646 = vpop.f32.mrb[0].mxu0
  %v647 = vadd.f32 %v104, %v646
  %v648 = vpop.f32.mrb[0].mxu0
  %v649 = vadd.f32 %v104, %v648
  %v650 = vpop.f32.mrb[0].mxu0
  %v651 = vadd.f32 %v109, %v650
  %v652 = vpop.f32.mrb[0].mxu0
  %v653 = vadd.f32 %v109, %v652
  %654 = vdwg.mxu0
  %655 = vmatprep.subr.bf16.mxu0 %v319
  %656 = vmatpush1.bf16.msra.mxu0 %v318
  %657 = vmatprep.subr.bf16.mxu0 0
  %658 = vmatpush1.bf16.msra.mxu0 0
  %659 = vmatprep.subr.bf16.mxu0 0
  %660 = vmatpush1.bf16.msra.mxu0 0
  %661 = vmatprep.subr.bf16.mxu0 0
  %662 = vmatpush1.bf16.msra.mxu0 0
  %663 = vmatprep.subr.bf16.mxu0 0
  %664 = vmatpush1.bf16.msra.mxu0 0
  %665 = vmatprep.subr.bf16.mxu0 0
  %666 = vmatpush1.bf16.msra.mxu0 0
  %667 = vmatprep.subr.bf16.mxu0 0
  %668 = vmatpush1.bf16.msra.mxu0 0
  %669 = vmatprep.subr.bf16.mxu0 0
  %670 = vmatpush1.bf16.msra.mxu0 0
  %671 = vmatprep.subr.bf16.mxu0 0
  %672 = vmatpush1.bf16.msra.mxu0 0
  %673 = vmatprep.subr.bf16.mxu0 0
  %674 = vmatpush1.bf16.msra.mxu0 0
  %675 = vmatprep.subr.bf16.mxu0 0
  %676 = vmatpush1.bf16.msra.mxu0 0
  %677 = vmatprep.subr.bf16.mxu0 0
  %678 = vmatpush1.bf16.msra.mxu0 0
  %679 = vmatprep.subr.bf16.mxu0 0
  %680 = vmatpush1.bf16.msra.mxu0 0
  %681 = vmatprep.subr.bf16.mxu0 0
  %682 = vmatpush1.bf16.msra.mxu0 0
  %683 = vmatprep.subr.bf16.mxu0 0
  %684 = vmatpush1.bf16.msra.mxu0 0
  %685 = vmatprep.subr.bf16.mxu0 0
  %686 = vmatpush1.bf16.msra.mxu0 0
  %687 = vmatprep.mubr.bf16.mxu0 0
  %688 = vmatmul.mubr.bf16.gmra.mrb[0].mxu0 %v438
  %v689 = vpop.f32.mrb[0].mxu0
  %v690 = vadd.f32 %v104, %v689
  %v691 = vpop.f32.mrb[0].mxu0
  %v692 = vadd.f32 %v104, %v691
  %v693 = vpop.f32.mrb[0].mxu0
  %v694 = vadd.f32 %v109, %v693
  %v695 = vpop.f32.mrb[0].mxu0
  %v696 = vadd.f32 %v109, %v695
  %697 = vdwg.mxu0
  %698 = vmatprep.subr.bf16.mxu0 %v321
  %699 = vmatpush1.bf16.msra.mxu0 %v320
  %700 = vmatprep.subr.bf16.mxu0 0
  %701 = vmatpush1.bf16.msra.mxu0 0
  %702 = vmatprep.subr.bf16.mxu0 0
  %703 = vmatpush1.bf16.msra.mxu0 0
  %704 = vmatprep.subr.bf16.mxu0 0
  %705 = vmatpush1.bf16.msra.mxu0 0
  %706 = vmatprep.subr.bf16.mxu0 0
  %707 = vmatpush1.bf16.msra.mxu0 0
  %708 = vmatprep.subr.bf16.mxu0 0
  %709 = vmatpush1.bf16.msra.mxu0 0
  %710 = vmatprep.subr.bf16.mxu0 0
  %711 = vmatpush1.bf16.msra.mxu0 0
  %712 = vmatprep.subr.bf16.mxu0 0
  %713 = vmatpush1.bf16.msra.mxu0 0
  %714 = vmatprep.subr.bf16.mxu0 0
  %715 = vmatpush1.bf16.msra.mxu0 0
  %716 = vmatprep.subr.bf16.mxu0 0
  %717 = vmatpush1.bf16.msra.mxu0 0
  %718 = vmatprep.subr.bf16.mxu0 0
  %719 = vmatpush1.bf16.msra.mxu0 0
  %720 = vmatprep.subr.bf16.mxu0 0
  %721 = vmatpush1.bf16.msra.mxu0 0
  %722 = vmatprep.subr.bf16.mxu0 0
  %723 = vmatpush1.bf16.msra.mxu0 0
  %724 = vmatprep.subr.bf16.mxu0 0
  %725 = vmatpush1.bf16.msra.mxu0 0
  %726 = vmatprep.subr.bf16.mxu0 0
  %727 = vmatpush1.bf16.msra.mxu0 0
  %728 = vmatprep.subr.bf16.mxu0 0
  %729 = vmatpush1.bf16.msra.mxu0 0
  %730 = vmatprep.mubr.bf16.mxu0 0
  %731 = vmatmul.mubr.bf16.gmra.mrb[0].mxu0 %v438
  %v732 = vpop.f32.mrb[0].mxu0
  %v733 = vadd.f32 %v104, %v732
  %v734 = vpop.f32.mrb[0].mxu0
  %v735 = vadd.f32 %v104, %v734
  %v736 = vpop.f32.mrb[0].mxu0
  %v737 = vadd.f32 %v109, %v736
  %v738 = vpop.f32.mrb[0].mxu0
  %v739 = vadd.f32 %v109, %v738
  %740 = vdwg.mxu0
  %741 = vmatprep.subr.bf16.mxu0 %v323
  %742 = vmatpush1.bf16.msra.mxu0 %v322
  %743 = vmatprep.subr.bf16.mxu0 0
  %744 = vmatpush1.bf16.msra.mxu0 0
  %745 = vmatprep.subr.bf16.mxu0 0
  %746 = vmatpush1.bf16.msra.mxu0 0
  %747 = vmatprep.subr.bf16.mxu0 0
  %748 = vmatpush1.bf16.msra.mxu0 0
  %749 = vmatprep.subr.bf16.mxu0 0
  %750 = vmatpush1.bf16.msra.mxu0 0
  %751 = vmatprep.subr.bf16.mxu0 0
  %752 = vmatpush1.bf16.msra.mxu0 0
  %753 = vmatprep.subr.bf16.mxu0 0
  %754 = vmatpush1.bf16.msra.mxu0 0
  %755 = vmatprep.subr.bf16.mxu0 0
  %756 = vmatpush1.bf16.msra.mxu0 0
  %757 = vmatprep.subr.bf16.mxu0 0
  %758 = vmatpush1.bf16.msra.mxu0 0
  %759 = vmatprep.subr.bf16.mxu0 0
  %760 = vmatpush1.bf16.msra.mxu0 0
  %761 = vmatprep.subr.bf16.mxu0 0
  %762 = vmatpush1.bf16.msra.mxu0 0
  %763 = vmatprep.subr.bf16.mxu0 0
  %764 = vmatpush1.bf16.msra.mxu0 0
  %765 = vmatprep.subr.bf16.mxu0 0
  %766 = vmatpush1.bf16.msra.mxu0 0
  %767 = vmatprep.subr.bf16.mxu0 0
  %768 = vmatpush1.bf16.msra.mxu0 0
  %769 = vmatprep.subr.bf16.mxu0 0
  %770 = vmatpush1.bf16.msra.mxu0 0
  %771 = vmatprep.subr.bf16.mxu0 0
  %772 = vmatpush1.bf16.msra.mxu0 0
  %773 = vmatprep.mubr.bf16.mxu0 0
  %774 = vmatmul.mubr.bf16.gmra.mrb[0].mxu0 %v438
  %v775 = vpop.f32.mrb[0].mxu0
  %v776 = vadd.f32 %v104, %v775
  %v777 = vpop.f32.mrb[0].mxu0
  %v778 = vadd.f32 %v104, %v777
  %v779 = vpop.f32.mrb[0].mxu0
  %v780 = vadd.f32 %v109, %v779
  %v781 = vpop.f32.mrb[0].mxu0
  %v782 = vadd.f32 %v109, %v781
  %783 = vdwg.mxu0
  %784 = vmatprep.subr.bf16.mxu0 %v325
  %785 = vmatpush1.bf16.msra.mxu0 %v324
  %786 = vmatprep.subr.bf16.mxu0 0
  %787 = vmatpush1.bf16.msra.mxu0 0
  %788 = vmatprep.subr.bf16.mxu0 0
  %789 = vmatpush1.bf16.msra.mxu0 0
  %790 = vmatprep.subr.bf16.mxu0 0
  %791 = vmatpush1.bf16.msra.mxu0 0
  %792 = vmatprep.subr.bf16.mxu0 0
  %793 = vmatpush1.bf16.msra.mxu0 0
  %794 = vmatprep.subr.bf16.mxu0 0
  %795 = vmatpush1.bf16.msra.mxu0 0
  %796 = vmatprep.subr.bf16.mxu0 0
  %797 = vmatpush1.bf16.msra.mxu0 0
  %798 = vmatprep.subr.bf16.mxu0 0
  %799 = vmatpush1.bf16.msra.mxu0 0
  %800 = vmatprep.subr.bf16.mxu0 0
  %801 = vmatpush1.bf16.msra.mxu0 0
  %802 = vmatprep.subr.bf16.mxu0 0
  %803 = vmatpush1.bf16.msra.mxu0 0
  %804 = vmatprep.subr.bf16.mxu0 0
  %805 = vmatpush1.bf16.msra.mxu0 0
  %806 = vmatprep.subr.bf16.mxu0 0
  %807 = vmatpush1.bf16.msra.mxu0 0
  %808 = vmatprep.subr.bf16.mxu0 0
  %809 = vmatpush1.bf16.msra.mxu0 0
  %810 = vmatprep.subr.bf16.mxu0 0
  %811 = vmatpush1.bf16.msra.mxu0 0
  %812 = vmatprep.subr.bf16.mxu0 0
  %813 = vmatpush1.bf16.msra.mxu0 0
  %814 = vmatprep.subr.bf16.mxu0 0
  %815 = vmatpush1.bf16.msra.mxu0 0
  %816 = vmatprep.mubr.bf16.mxu0 0
  %817 = vmatmul.mubr.bf16.gmra.mrb[0].mxu0 %v438
  %v818 = vpop.f32.mrb[0].mxu0
  %v819 = vadd.f32 %v104, %v818
  %v820 = vpop.f32.mrb[0].mxu0
  %v821 = vadd.f32 %v104, %v820
  %v822 = vpop.f32.mrb[0].mxu0
  %v823 = vadd.f32 %v109, %v822
  %v824 = vpop.f32.mrb[0].mxu0
  %v825 = vadd.f32 %v109, %v824
  %826 = vdwg.mxu0
  %827 = vmatprep.subr.bf16.mxu0 %v327
  %828 = vmatpush1.bf16.msra.mxu0 %v326
  %829 = vmatprep.subr.bf16.mxu0 0
  %830 = vmatpush1.bf16.msra.mxu0 0
  %831 = vmatprep.subr.bf16.mxu0 0
  %832 = vmatpush1.bf16.msra.mxu0 0
  %833 = vmatprep.subr.bf16.mxu0 0
  %834 = vmatpush1.bf16.msra.mxu0 0
  %835 = vmatprep.subr.bf16.mxu0 0
  %836 = vmatpush1.bf16.msra.mxu0 0
  %837 = vmatprep.subr.bf16.mxu0 0
  %838 = vmatpush1.bf16.msra.mxu0 0
  %839 = vmatprep.subr.bf16.mxu0 0
  %840 = vmatpush1.bf16.msra.mxu0 0
  %841 = vmatprep.subr.bf16.mxu0 0
  %842 = vmatpush1.bf16.msra.mxu0 0
  %843 = vmatprep.subr.bf16.mxu0 0
  %844 = vmatpush1.bf16.msra.mxu0 0
  %845 = vmatprep.subr.bf16.mxu0 0
  %846 = vmatpush1.bf16.msra.mxu0 0
  %847 = vmatprep.subr.bf16.mxu0 0
  %848 = vmatpush1.bf16.msra.mxu0 0
  %849 = vmatprep.subr.bf16.mxu0 0
  %850 = vmatpush1.bf16.msra.mxu0 0
  %851 = vmatprep.subr.bf16.mxu0 0
  %852 = vmatpush1.bf16.msra.mxu0 0
  %853 = vmatprep.subr.bf16.mxu0 0
  %854 = vmatpush1.bf16.msra.mxu0 0
  %855 = vmatprep.subr.bf16.mxu0 0
  %856 = vmatpush1.bf16.msra.mxu0 0
  %857 = vmatprep.subr.bf16.mxu0 0
  %858 = vmatpush1.bf16.msra.mxu0 0
  %859 = vmatprep.mubr.bf16.mxu0 0
  %860 = vmatmul.mubr.bf16.gmra.mrb[0].mxu0 %v438
  %v861 = vpop.f32.mrb[0].mxu0
  %v862 = vadd.f32 %v104, %v861
  %v863 = vpop.f32.mrb[0].mxu0
  %v864 = vadd.f32 %v104, %v863
  %v865 = vpop.f32.mrb[0].mxu0
  %v866 = vadd.f32 %v109, %v865
  %v867 = vpop.f32.mrb[0].mxu0
  %v868 = vadd.f32 %v109, %v867
  %869 = vdwg.mxu0
  %870 = vmatprep.subr.bf16.mxu0 %v329
  %871 = vmatpush1.bf16.msra.mxu0 %v328
  %872 = vmatprep.subr.bf16.mxu0 0
  %873 = vmatpush1.bf16.msra.mxu0 0
  %874 = vmatprep.subr.bf16.mxu0 0
  %875 = vmatpush1.bf16.msra.mxu0 0
  %876 = vmatprep.subr.bf16.mxu0 0
  %877 = vmatpush1.bf16.msra.mxu0 0
  %878 = vmatprep.subr.bf16.mxu0 0
  %879 = vmatpush1.bf16.msra.mxu0 0
  %880 = vmatprep.subr.bf16.mxu0 0
  %881 = vmatpush1.bf16.msra.mxu0 0
  %882 = vmatprep.subr.bf16.mxu0 0
  %883 = vmatpush1.bf16.msra.mxu0 0
  %884 = vmatprep.subr.bf16.mxu0 0
  %885 = vmatpush1.bf16.msra.mxu0 0
  %886 = vmatprep.subr.bf16.mxu0 0
  %887 = vmatpush1.bf16.msra.mxu0 0
  %888 = vmatprep.subr.bf16.mxu0 0
  %889 = vmatpush1.bf16.msra.mxu0 0
  %890 = vmatprep.subr.bf16.mxu0 0
  %891 = vmatpush1.bf16.msra.mxu0 0
  %892 = vmatprep.subr.bf16.mxu0 0
  %893 = vmatpush1.bf16.msra.mxu0 0
  %894 = vmatprep.subr.bf16.mxu0 0
  %895 = vmatpush1.bf16.msra.mxu0 0
  %896 = vmatprep.subr.bf16.mxu0 0
  %897 = vmatpush1.bf16.msra.mxu0 0
  %898 = vmatprep.subr.bf16.mxu0 0
  %899 = vmatpush1.bf16.msra.mxu0 0
  %900 = vmatprep.subr.bf16.mxu0 0
  %901 = vmatpush1.bf16.msra.mxu0 0
  %902 = vmatprep.mubr.bf16.mxu0 0
  %903 = vmatmul.mubr.bf16.gmra.mrb[0].mxu0 %v438
  %v904 = vpop.f32.mrb[0].mxu0
  %v905 = vadd.f32 %v104, %v904
  %v906 = vpop.f32.mrb[0].mxu0
  %v907 = vadd.f32 %v104, %v906
  %v908 = vpop.f32.mrb[0].mxu0
  %v909 = vadd.f32 %v109, %v908
  %v910 = vpop.f32.mrb[0].mxu0
  %v911 = vadd.f32 %v109, %v910
  %912 = vdwg.mxu0
  %913 = vmatprep.subr.bf16.mxu0 %v331
  %914 = vmatpush1.bf16.msra.mxu0 %v330
  %915 = vmatprep.subr.bf16.mxu0 0
  %916 = vmatpush1.bf16.msra.mxu0 0
  %917 = vmatprep.subr.bf16.mxu0 0
  %918 = vmatpush1.bf16.msra.mxu0 0
  %919 = vmatprep.subr.bf16.mxu0 0
  %920 = vmatpush1.bf16.msra.mxu0 0
  %921 = vmatprep.subr.bf16.mxu0 0
  %922 = vmatpush1.bf16.msra.mxu0 0
  %923 = vmatprep.subr.bf16.mxu0 0
  %924 = vmatpush1.bf16.msra.mxu0 0
  %925 = vmatprep.subr.bf16.mxu0 0
  %926 = vmatpush1.bf16.msra.mxu0 0
  %927 = vmatprep.subr.bf16.mxu0 0
  %928 = vmatpush1.bf16.msra.mxu0 0
  %929 = vmatprep.subr.bf16.mxu0 0
  %930 = vmatpush1.bf16.msra.mxu0 0
  %931 = vmatprep.subr.bf16.mxu0 0
  %932 = vmatpush1.bf16.msra.mxu0 0
  %933 = vmatprep.subr.bf16.mxu0 0
  %934 = vmatpush1.bf16.msra.mxu0 0
  %935 = vmatprep.subr.bf16.mxu0 0
  %936 = vmatpush1.bf16.msra.mxu0 0
  %937 = vmatprep.subr.bf16.mxu0 0
  %938 = vmatpush1.bf16.msra.mxu0 0
  %939 = vmatprep.subr.bf16.mxu0 0
  %940 = vmatpush1.bf16.msra.mxu0 0
  %941 = vmatprep.subr.bf16.mxu0 0
  %942 = vmatpush1.bf16.msra.mxu0 0
  %943 = vmatprep.subr.bf16.mxu0 0
  %944 = vmatpush1.bf16.msra.mxu0 0
  %945 = vmatprep.mubr.bf16.mxu0 0
  %946 = vmatmul.mubr.bf16.gmra.mrb[0].mxu0 %v438
  %v947 = vpop.f32.mrb[0].mxu0
  %v948 = vadd.f32 %v104, %v947
  %v949 = vpop.f32.mrb[0].mxu0
  %v950 = vadd.f32 %v104, %v949
  %v951 = vpop.f32.mrb[0].mxu0
  %v952 = vadd.f32 %v109, %v951
  %v953 = vpop.f32.mrb[0].mxu0
  %v954 = vadd.f32 %v109, %v953
  %955 = vdwg.mxu0
  %956 = vmatprep.subr.bf16.mxu0 %v333
  %957 = vmatpush1.bf16.msra.mxu0 %v332
  %958 = vmatprep.subr.bf16.mxu0 0
  %959 = vmatpush1.bf16.msra.mxu0 0
  %960 = vmatprep.subr.bf16.mxu0 0
  %961 = vmatpush1.bf16.msra.mxu0 0
  %962 = vmatprep.subr.bf16.mxu0 0
  %963 = vmatpush1.bf16.msra.mxu0 0
  %964 = vmatprep.subr.bf16.mxu0 0
  %965 = vmatpush1.bf16.msra.mxu0 0
  %966 = vmatprep.subr.bf16.mxu0 0
  %967 = vmatpush1.bf16.msra.mxu0 0
  %968 = vmatprep.subr.bf16.mxu0 0
  %969 = vmatpush1.bf16.msra.mxu0 0
  %970 = vmatprep.subr.bf16.mxu0 0
  %971 = vmatpush1.bf16.msra.mxu0 0
  %972 = vmatprep.subr.bf16.mxu0 0
  %973 = vmatpush1.bf16.msra.mxu0 0
  %974 = vmatprep.subr.bf16.mxu0 0
  %975 = vmatpush1.bf16.msra.mxu0 0
  %976 = vmatprep.subr.bf16.mxu0 0
  %977 = vmatpush1.bf16.msra.mxu0 0
  %978 = vmatprep.subr.bf16.mxu0 0
  %979 = vmatpush1.bf16.msra.mxu0 0
  %980 = vmatprep.subr.bf16.mxu0 0
  %981 = vmatpush1.bf16.msra.mxu0 0
  %982 = vmatprep.subr.bf16.mxu0 0
  %983 = vmatpush1.bf16.msra.mxu0 0
  %984 = vmatprep.subr.bf16.mxu0 0
  %985 = vmatpush1.bf16.msra.mxu0 0
  %986 = vmatprep.subr.bf16.mxu0 0
  %987 = vmatpush1.bf16.msra.mxu0 0
  %988 = vmatprep.mubr.bf16.mxu0 0
  %989 = vmatmul.mubr.bf16.gmra.mrb[0].mxu0 %v438
  %v990 = vpop.f32.mrb[0].mxu0
  %v991 = vadd.f32 %v104, %v990
  %v992 = vpop.f32.mrb[0].mxu0
  %v993 = vadd.f32 %v104, %v992
  %v994 = vpop.f32.mrb[0].mxu0
  %v995 = vadd.f32 %v109, %v994
  %v996 = vpop.f32.mrb[0].mxu0
  %v997 = vadd.f32 %v109, %v996
  %998 = vdwg.mxu0
  %999 = vmatprep.subr.bf16.mxu0 %v335
  %1000 = vmatpush1.bf16.msra.mxu0 %v334
  %1001 = vmatprep.subr.bf16.mxu0 0
  %1002 = vmatpush1.bf16.msra.mxu0 0
  %1003 = vmatprep.subr.bf16.mxu0 0
  %1004 = vmatpush1.bf16.msra.mxu0 0
  %1005 = vmatprep.subr.bf16.mxu0 0
  %1006 = vmatpush1.bf16.msra.mxu0 0
  %1007 = vmatprep.subr.bf16.mxu0 0
  %1008 = vmatpush1.bf16.msra.mxu0 0
  %1009 = vmatprep.subr.bf16.mxu0 0
  %1010 = vmatpush1.bf16.msra.mxu0 0
  %1011 = vmatprep.subr.bf16.mxu0 0
  %1012 = vmatpush1.bf16.msra.mxu0 0
  %1013 = vmatprep.subr.bf16.mxu0 0
  %1014 = vmatpush1.bf16.msra.mxu0 0
  %1015 = vmatprep.subr.bf16.mxu0 0
  %1016 = vmatpush1.bf16.msra.mxu0 0
  %1017 = vmatprep.subr.bf16.mxu0 0
  %1018 = vmatpush1.bf16.msra.mxu0 0
  %1019 = vmatprep.subr.bf16.mxu0 0
  %1020 = vmatpush1.bf16.msra.mxu0 0
  %1021 = vmatprep.subr.bf16.mxu0 0
  %1022 = vmatpush1.bf16.msra.mxu0 0
  %1023 = vmatprep.subr.bf16.mxu0 0
  %1024 = vmatpush1.bf16.msra.mxu0 0
  %1025 = vmatprep.subr.bf16.mxu0 0
  %1026 = vmatpush1.bf16.msra.mxu0 0
  %1027 = vmatprep.subr.bf16.mxu0 0
  %1028 = vmatpush1.bf16.msra.mxu0 0
  %1029 = vmatprep.subr.bf16.mxu0 0
  %1030 = vmatpush1.bf16.msra.mxu0 0
  %1031 = vmatprep.mubr.bf16.mxu0 0
  %1032 = vmatmul.mubr.bf16.gmra.mrb[0].mxu0 %v438
  %v1033 = vpop.f32.mrb[0].mxu0
  %v1034 = vadd.f32 %v104, %v1033
  %v1035 = vpop.f32.mrb[0].mxu0
  %v1036 = vadd.f32 %v104, %v1035
  %v1037 = vpop.f32.mrb[0].mxu0
  %v1038 = vadd.f32 %v109, %v1037
  %v1039 = vpop.f32.mrb[0].mxu0
  %v1040 = vadd.f32 %v109, %v1039
  %1041 = vdwg.mxu0
  %1042 = vmatprep.subr.bf16.mxu0 %v337
  %1043 = vmatpush1.bf16.msra.mxu0 %v336
  %1044 = vmatprep.subr.bf16.mxu0 0
  %1045 = vmatpush1.bf16.msra.mxu0 0
  %1046 = vmatprep.subr.bf16.mxu0 0
  %1047 = vmatpush1.bf16.msra.mxu0 0
  %1048 = vmatprep.subr.bf16.mxu0 0
  %1049 = vmatpush1.bf16.msra.mxu0 0
  %1050 = vmatprep.subr.bf16.mxu0 0
  %1051 = vmatpush1.bf16.msra.mxu0 0
  %1052 = vmatprep.subr.bf16.mxu0 0
  %1053 = vmatpush1.bf16.msra.mxu0 0
  %1054 = vmatprep.subr.bf16.mxu0 0
  %1055 = vmatpush1.bf16.msra.mxu0 0
  %1056 = vmatprep.subr.bf16.mxu0 0
  %1057 = vmatpush1.bf16.msra.mxu0 0
  %1058 = vmatprep.subr.bf16.mxu0 0
  %1059 = vmatpush1.bf16.msra.mxu0 0
  %1060 = vmatprep.subr.bf16.mxu0 0
  %1061 = vmatpush1.bf16.msra.mxu0 0
  %1062 = vmatprep.subr.bf16.mxu0 0
  %1063 = vmatpush1.bf16.msra.mxu0 0
  %1064 = vmatprep.subr.bf16.mxu0 0
  %1065 = vmatpush1.bf16.msra.mxu0 0
  %1066 = vmatprep.subr.bf16.mxu0 0
  %1067 = vmatpush1.bf16.msra.mxu0 0
  %1068 = vmatprep.subr.bf16.mxu0 0
  %1069 = vmatpush1.bf16.msra.mxu0 0
  %1070 = vmatprep.subr.bf16.mxu0 0
  %1071 = vmatpush1.bf16.msra.mxu0 0
  %1072 = vmatprep.subr.bf16.mxu0 0
  %1073 = vmatpush1.bf16.msra.mxu0 0
  %1074 = vmatprep.mubr.bf16.mxu0 0
  %1075 = vmatmul.mubr.bf16.gmra.mrb[0].mxu0 %v438
  %v1076 = vpop.f32.mrb[0].mxu0
  %v1077 = vadd.f32 %v104, %v1076
  %v1078 = vpop.f32.mrb[0].mxu0
  %v1079 = vadd.f32 %v104, %v1078
  %v1080 = vpop.f32.mrb[0].mxu0
  %v1081 = vadd.f32 %v109, %v1080
  %v1082 = vpop.f32.mrb[0].mxu0
  %v1083 = vadd.f32 %v109, %v1082
  %1084 = vdwg.mxu0
  %1085 = vmatprep.subr.bf16.mxu0 %v339
  %1086 = vmatpush1.bf16.msra.mxu0 %v338
  %1087 = vmatprep.subr.bf16.mxu0 0
  %1088 = vmatpush1.bf16.msra.mxu0 0
  %1089 = vmatprep.subr.bf16.mxu0 0
  %1090 = vmatpush1.bf16.msra.mxu0 0
  %1091 = vmatprep.subr.bf16.mxu0 0
  %1092 = vmatpush1.bf16.msra.mxu0 0
  %1093 = vmatprep.subr.bf16.mxu0 0
  %1094 = vmatpush1.bf16.msra.mxu0 0
  %1095 = vmatprep.subr.bf16.mxu0 0
  %1096 = vmatpush1.bf16.msra.mxu0 0
  %1097 = vmatprep.subr.bf16.mxu0 0
  %1098 = vmatpush1.bf16.msra.mxu0 0
  %1099 = vmatprep.subr.bf16.mxu0 0
  %1100 = vmatpush1.bf16.msra.mxu0 0
  %1101 = vmatprep.subr.bf16.mxu0 0
  %1102 = vmatpush1.bf16.msra.mxu0 0
  %1103 = vmatprep.subr.bf16.mxu0 0
  %1104 = vmatpush1.bf16.msra.mxu0 0
  %1105 = vmatprep.subr.bf16.mxu0 0
  %1106 = vmatpush1.bf16.msra.mxu0 0
  %1107 = vmatprep.subr.bf16.mxu0 0
  %1108 = vmatpush1.bf16.msra.mxu0 0
  %1109 = vmatprep.subr.bf16.mxu0 0
  %1110 = vmatpush1.bf16.msra.mxu0 0
  %1111 = vmatprep.subr.bf16.mxu0 0
  %1112 = vmatpush1.bf16.msra.mxu0 0
  %1113 = vmatprep.subr.bf16.mxu0 0
  %1114 = vmatpush1.bf16.msra.mxu0 0
  %1115 = vmatprep.subr.bf16.mxu0 0
  %1116 = vmatpush1.bf16.msra.mxu0 0
  %1117 = vmatprep.mubr.bf16.mxu0 0
  %1118 = vmatmul.mubr.bf16.gmra.mrb[0].mxu0 %v438
  %v1119 = vpop.f32.mrb[0].mxu0
  %v1120 = vadd.f32 %v104, %v1119
  %v1121 = vpop.f32.mrb[0].mxu0
  %v1122 = vadd.f32 %v104, %v1121
  %v1123 = vpop.f32.mrb[0].mxu0
  %v1124 = vadd.f32 %v109, %v1123
  %v1125 = vpop.f32.mrb[0].mxu0
  %v1126 = vadd.f32 %v109, %v1125
  %1127 = vdwg.mxu0
  %1128 = vmatprep.subr.bf16.mxu0 %v341
  %1129 = vmatpush1.bf16.msra.mxu0 %v340
  %1130 = vmatprep.subr.bf16.mxu0 0
  %1131 = vmatpush1.bf16.msra.mxu0 0
  %1132 = vmatprep.subr.bf16.mxu0 0
  %1133 = vmatpush1.bf16.msra.mxu0 0
  %1134 = vmatprep.subr.bf16.mxu0 0
  %1135 = vmatpush1.bf16.msra.mxu0 0
  %1136 = vmatprep.subr.bf16.mxu0 0
  %1137 = vmatpush1.bf16.msra.mxu0 0
  %1138 = vmatprep.subr.bf16.mxu0 0
  %1139 = vmatpush1.bf16.msra.mxu0 0
  %1140 = vmatprep.subr.bf16.mxu0 0
  %1141 = vmatpush1.bf16.msra.mxu0 0
  %1142 = vmatprep.subr.bf16.mxu0 0
  %1143 = vmatpush1.bf16.msra.mxu0 0
  %1144 = vmatprep.subr.bf16.mxu0 0
  %1145 = vmatpush1.bf16.msra.mxu0 0
  %1146 = vmatprep.subr.bf16.mxu0 0
  %1147 = vmatpush1.bf16.msra.mxu0 0
  %1148 = vmatprep.subr.bf16.mxu0 0
  %1149 = vmatpush1.bf16.msra.mxu0 0
  %1150 = vmatprep.subr.bf16.mxu0 0
  %1151 = vmatpush1.bf16.msra.mxu0 0
  %1152 = vmatprep.subr.bf16.mxu0 0
  %1153 = vmatpush1.bf16.msra.mxu0 0
  %1154 = vmatprep.subr.bf16.mxu0 0
  %1155 = vmatpush1.bf16.msra.mxu0 0
  %1156 = vmatprep.subr.bf16.mxu0 0
  %1157 = vmatpush1.bf16.msra.mxu0 0
  %1158 = vmatprep.subr.bf16.mxu0 0
  %1159 = vmatpush1.bf16.msra.mxu0 0
  %1160 = vmatprep.mubr.bf16.mxu0 0
  %1161 = vmatmul.mubr.bf16.gmra.mrb[0].mxu0 %v438
  %v1162 = vpop.f32.mrb[0].mxu0
  %v1163 = vadd.f32 %v104, %v1162
  %v1164 = vpop.f32.mrb[0].mxu0
  %v1165 = vadd.f32 %v104, %v1164
  %v1166 = vpop.f32.mrb[0].mxu0
  %v1167 = vadd.f32 %v109, %v1166
  %v1168 = vpop.f32.mrb[0].mxu0
  %v1169 = vadd.f32 %v109, %v1168
  %1170 = vdwg.mxu0
  %1171 = vmatprep.subr.bf16.mxu0 %v343
  %1172 = vmatpush1.bf16.msra.mxu0 %v342
  %1173 = vmatprep.subr.bf16.mxu0 0
  %1174 = vmatpush1.bf16.msra.mxu0 0
  %1175 = vmatprep.subr.bf16.mxu0 0
  %1176 = vmatpush1.bf16.msra.mxu0 0
  %1177 = vmatprep.subr.bf16.mxu0 0
  %1178 = vmatpush1.bf16.msra.mxu0 0
  %1179 = vmatprep.subr.bf16.mxu0 0
  %1180 = vmatpush1.bf16.msra.mxu0 0
  %1181 = vmatprep.subr.bf16.mxu0 0
  %1182 = vmatpush1.bf16.msra.mxu0 0
  %1183 = vmatprep.subr.bf16.mxu0 0
  %1184 = vmatpush1.bf16.msra.mxu0 0
  %1185 = vmatprep.subr.bf16.mxu0 0
  %1186 = vmatpush1.bf16.msra.mxu0 0
  %1187 = vmatprep.subr.bf16.mxu0 0
  %1188 = vmatpush1.bf16.msra.mxu0 0
  %1189 = vmatprep.subr.bf16.mxu0 0
  %1190 = vmatpush1.bf16.msra.mxu0 0
  %1191 = vmatprep.subr.bf16.mxu0 0
  %1192 = vmatpush1.bf16.msra.mxu0 0
  %1193 = vmatprep.subr.bf16.mxu0 0
  %1194 = vmatpush1.bf16.msra.mxu0 0
  %1195 = vmatprep.subr.bf16.mxu0 0
  %1196 = vmatpush1.bf16.msra.mxu0 0
  %1197 = vmatprep.subr.bf16.mxu0 0
  %1198 = vmatpush1.bf16.msra.mxu0 0
  %1199 = vmatprep.subr.bf16.mxu0 0
  %1200 = vmatpush1.bf16.msra.mxu0 0
  %1201 = vmatprep.subr.bf16.mxu0 0
  %1202 = vmatpush1.bf16.msra.mxu0 0
  %1203 = vmatprep.mubr.bf16.mxu0 0
  %1204 = vmatmul.mubr.bf16.gmra.mrb[0].mxu0 %v438
  %v1205 = vpop.f32.mrb[0].mxu0
  %v1206 = vadd.f32 %v104, %v1205
  %v1207 = vpop.f32.mrb[0].mxu0
  %v1208 = vadd.f32 %v104, %v1207
  %v1209 = vpop.f32.mrb[0].mxu0
  %v1210 = vadd.f32 %v109, %v1209
  %v1211 = vpop.f32.mrb[0].mxu0
  %v1212 = vadd.f32 %v109, %v1211
  %1213 = vdwg.mxu0
  %1214 = vmatprep.subr.bf16.mxu0 %v345
  %1215 = vmatpush1.bf16.msra.mxu0 %v344
  %1216 = vmatprep.subr.bf16.mxu0 0
  %1217 = vmatpush1.bf16.msra.mxu0 0
  %1218 = vmatprep.subr.bf16.mxu0 0
  %1219 = vmatpush1.bf16.msra.mxu0 0
  %1220 = vmatprep.subr.bf16.mxu0 0
  %1221 = vmatpush1.bf16.msra.mxu0 0
  %1222 = vmatprep.subr.bf16.mxu0 0
  %1223 = vmatpush1.bf16.msra.mxu0 0
  %1224 = vmatprep.subr.bf16.mxu0 0
  %1225 = vmatpush1.bf16.msra.mxu0 0
  %1226 = vmatprep.subr.bf16.mxu0 0
  %1227 = vmatpush1.bf16.msra.mxu0 0
  %1228 = vmatprep.subr.bf16.mxu0 0
  %1229 = vmatpush1.bf16.msra.mxu0 0
  %1230 = vmatprep.subr.bf16.mxu0 0
  %1231 = vmatpush1.bf16.msra.mxu0 0
  %1232 = vmatprep.subr.bf16.mxu0 0
  %1233 = vmatpush1.bf16.msra.mxu0 0
  %1234 = vmatprep.subr.bf16.mxu0 0
  %1235 = vmatpush1.bf16.msra.mxu0 0
  %1236 = vmatprep.subr.bf16.mxu0 0
  %1237 = vmatpush1.bf16.msra.mxu0 0
  %1238 = vmatprep.subr.bf16.mxu0 0
  %1239 = vmatpush1.bf16.msra.mxu0 0
  %1240 = vmatprep.subr.bf16.mxu0 0
  %1241 = vmatpush1.bf16.msra.mxu0 0
  %1242 = vmatprep.subr.bf16.mxu0 0
  %1243 = vmatpush1.bf16.msra.mxu0 0
  %1244 = vmatprep.subr.bf16.mxu0 0
  %1245 = vmatpush1.bf16.msra.mxu0 0
  %1246 = vmatprep.mubr.bf16.mxu0 0
  %1247 = vmatmul.mubr.bf16.gmra.mrb[0].mxu0 %v438
  %v1248 = vpop.f32.mrb[0].mxu0
  %v1249 = vadd.f32 %v104, %v1248
  %v1250 = vpop.f32.mrb[0].mxu0
  %v1251 = vadd.f32 %v104, %v1250
  %v1252 = vpop.f32.mrb[0].mxu0
  %v1253 = vadd.f32 %v109, %v1252
  %v1254 = vpop.f32.mrb[0].mxu0
  %v1255 = vadd.f32 %v109, %v1254
  %1256 = vdwg.mxu0
  %1257 = vmatprep.subr.bf16.mxu0 %v347
  %1258 = vmatpush1.bf16.msra.mxu0 %v346
  %1259 = vmatprep.subr.bf16.mxu0 0
  %1260 = vmatpush1.bf16.msra.mxu0 0
  %1261 = vmatprep.subr.bf16.mxu0 0
  %1262 = vmatpush1.bf16.msra.mxu0 0
  %1263 = vmatprep.subr.bf16.mxu0 0
  %1264 = vmatpush1.bf16.msra.mxu0 0
  %1265 = vmatprep.subr.bf16.mxu0 0
  %1266 = vmatpush1.bf16.msra.mxu0 0
  %1267 = vmatprep.subr.bf16.mxu0 0
  %1268 = vmatpush1.bf16.msra.mxu0 0
  %1269 = vmatprep.subr.bf16.mxu0 0
  %1270 = vmatpush1.bf16.msra.mxu0 0
  %1271 = vmatprep.subr.bf16.mxu0 0
  %1272 = vmatpush1.bf16.msra.mxu0 0
  %1273 = vmatprep.subr.bf16.mxu0 0
  %1274 = vmatpush1.bf16.msra.mxu0 0
  %1275 = vmatprep.subr.bf16.mxu0 0
  %1276 = vmatpush1.bf16.msra.mxu0 0
  %1277 = vmatprep.subr.bf16.mxu0 0
  %1278 = vmatpush1.bf16.msra.mxu0 0
  %1279 = vmatprep.subr.bf16.mxu0 0
  %1280 = vmatpush1.bf16.msra.mxu0 0
  %1281 = vmatprep.subr.bf16.mxu0 0
  %1282 = vmatpush1.bf16.msra.mxu0 0
  %1283 = vmatprep.subr.bf16.mxu0 0
  %1284 = vmatpush1.bf16.msra.mxu0 0
  %1285 = vmatprep.subr.bf16.mxu0 0
  %1286 = vmatpush1.bf16.msra.mxu0 0
  %1287 = vmatprep.subr.bf16.mxu0 0
  %1288 = vmatpush1.bf16.msra.mxu0 0
  %1289 = vmatprep.mubr.bf16.mxu0 0
  %1290 = vmatmul.mubr.bf16.gmra.mrb[0].mxu0 %v438
  %v1291 = vpop.f32.mrb[0].mxu0
  %v1292 = vadd.f32 %v104, %v1291
  %v1293 = vpop.f32.mrb[0].mxu0
  %v1294 = vadd.f32 %v104, %v1293
  %v1295 = vpop.f32.mrb[0].mxu0
  %v1296 = vadd.f32 %v109, %v1295
  %v1297 = vpop.f32.mrb[0].mxu0
  %v1298 = vadd.f32 %v109, %v1297
  %1299 = vdwg.mxu0
  %1300 = vmatprep.subr.bf16.mxu0 %v349
  %1301 = vmatpush1.bf16.msra.mxu0 %v348
  %1302 = vmatprep.subr.bf16.mxu0 0
  %1303 = vmatpush1.bf16.msra.mxu0 0
  %1304 = vmatprep.subr.bf16.mxu0 0
  %1305 = vmatpush1.bf16.msra.mxu0 0
  %1306 = vmatprep.subr.bf16.mxu0 0
  %1307 = vmatpush1.bf16.msra.mxu0 0
  %1308 = vmatprep.subr.bf16.mxu0 0
  %1309 = vmatpush1.bf16.msra.mxu0 0
  %1310 = vmatprep.subr.bf16.mxu0 0
  %1311 = vmatpush1.bf16.msra.mxu0 0
  %1312 = vmatprep.subr.bf16.mxu0 0
  %1313 = vmatpush1.bf16.msra.mxu0 0
  %1314 = vmatprep.subr.bf16.mxu0 0
  %1315 = vmatpush1.bf16.msra.mxu0 0
  %1316 = vmatprep.subr.bf16.mxu0 0
  %1317 = vmatpush1.bf16.msra.mxu0 0
  %1318 = vmatprep.subr.bf16.mxu0 0
  %1319 = vmatpush1.bf16.msra.mxu0 0
  %1320 = vmatprep.subr.bf16.mxu0 0
  %1321 = vmatpush1.bf16.msra.mxu0 0
  %1322 = vmatprep.subr.bf16.mxu0 0
  %1323 = vmatpush1.bf16.msra.mxu0 0
  %1324 = vmatprep.subr.bf16.mxu0 0
  %1325 = vmatpush1.bf16.msra.mxu0 0
  %1326 = vmatprep.subr.bf16.mxu0 0
  %1327 = vmatpush1.bf16.msra.mxu0 0
  %1328 = vmatprep.subr.bf16.mxu0 0
  %1329 = vmatpush1.bf16.msra.mxu0 0
  %1330 = vmatprep.subr.bf16.mxu0 0
  %1331 = vmatpush1.bf16.msra.mxu0 0
  %1332 = vmatprep.mubr.bf16.mxu0 0
  %1333 = vmatmul.mubr.bf16.gmra.mrb[0].mxu0 %v438
  %v1334 = vpop.f32.mrb[0].mxu0
  %v1335 = vadd.f32 %v104, %v1334
  %v1336 = vpop.f32.mrb[0].mxu0
  %v1337 = vadd.f32 %v104, %v1336
  %v1338 = vpop.f32.mrb[0].mxu0
  %v1339 = vadd.f32 %v109, %v1338
  %v1340 = vpop.f32.mrb[0].mxu0
  %v1341 = vadd.f32 %v109, %v1340
  %1342 = vdwg.mxu0
  %1343 = vmatprep.subr.bf16.mxu0 %v351
  %1344 = vmatpush1.bf16.msra.mxu0 %v350
  %1345 = vmatprep.subr.bf16.mxu0 0
  %1346 = vmatpush1.bf16.msra.mxu0 0
  %1347 = vmatprep.subr.bf16.mxu0 0
  %1348 = vmatpush1.bf16.msra.mxu0 0
  %1349 = vmatprep.subr.bf16.mxu0 0
  %1350 = vmatpush1.bf16.msra.mxu0 0
  %1351 = vmatprep.subr.bf16.mxu0 0
  %1352 = vmatpush1.bf16.msra.mxu0 0
  %1353 = vmatprep.subr.bf16.mxu0 0
  %1354 = vmatpush1.bf16.msra.mxu0 0
  %1355 = vmatprep.subr.bf16.mxu0 0
  %1356 = vmatpush1.bf16.msra.mxu0 0
  %1357 = vmatprep.subr.bf16.mxu0 0
  %1358 = vmatpush1.bf16.msra.mxu0 0
  %1359 = vmatprep.subr.bf16.mxu0 0
  %1360 = vmatpush1.bf16.msra.mxu0 0
  %1361 = vmatprep.subr.bf16.mxu0 0
  %1362 = vmatpush1.bf16.msra.mxu0 0
  %1363 = vmatprep.subr.bf16.mxu0 0
  %1364 = vmatpush1.bf16.msra.mxu0 0
  %1365 = vmatprep.subr.bf16.mxu0 0
  %1366 = vmatpush1.bf16.msra.mxu0 0
  %1367 = vmatprep.subr.bf16.mxu0 0
  %1368 = vmatpush1.bf16.msra.mxu0 0
  %1369 = vmatprep.subr.bf16.mxu0 0
  %1370 = vmatpush1.bf16.msra.mxu0 0
  %1371 = vmatprep.subr.bf16.mxu0 0
  %1372 = vmatpush1.bf16.msra.mxu0 0
  %1373 = vmatprep.subr.bf16.mxu0 0
  %1374 = vmatpush1.bf16.msra.mxu0 0
  %1375 = vmatprep.mubr.bf16.mxu0 0
  %1376 = vmatmul.mubr.bf16.gmra.mrb[0].mxu0 %v438
  %v1377 = vpop.f32.mrb[0].mxu0
  %v1378 = vadd.f32 %v104, %v1377
  %v1379 = vpop.f32.mrb[0].mxu0
  %v1380 = vadd.f32 %v104, %v1379
  %v1381 = vpop.f32.mrb[0].mxu0
  %v1382 = vadd.f32 %v109, %v1381
  %v1383 = vpop.f32.mrb[0].mxu0
  %v1384 = vadd.f32 %v109, %v1383
  %1385 = vdwg.mxu0
  %1386 = vmatprep.subr.bf16.mxu0 %v353
  %1387 = vmatpush1.bf16.msra.mxu0 %v352
  %1388 = vmatprep.subr.bf16.mxu0 0
  %1389 = vmatpush1.bf16.msra.mxu0 0
  %1390 = vmatprep.subr.bf16.mxu0 0
  %1391 = vmatpush1.bf16.msra.mxu0 0
  %1392 = vmatprep.subr.bf16.mxu0 0
  %1393 = vmatpush1.bf16.msra.mxu0 0
  %1394 = vmatprep.subr.bf16.mxu0 0
  %1395 = vmatpush1.bf16.msra.mxu0 0
  %1396 = vmatprep.subr.bf16.mxu0 0
  %1397 = vmatpush1.bf16.msra.mxu0 0
  %1398 = vmatprep.subr.bf16.mxu0 0
  %1399 = vmatpush1.bf16.msra.mxu0 0
  %1400 = vmatprep.subr.bf16.mxu0 0
  %1401 = vmatpush1.bf16.msra.mxu0 0
  %1402 = vmatprep.subr.bf16.mxu0 0
  %1403 = vmatpush1.bf16.msra.mxu0 0
  %1404 = vmatprep.subr.bf16.mxu0 0
  %1405 = vmatpush1.bf16.msra.mxu0 0
  %1406 = vmatprep.subr.bf16.mxu0 0
  %1407 = vmatpush1.bf16.msra.mxu0 0
  %1408 = vmatprep.subr.bf16.mxu0 0
  %1409 = vmatpush1.bf16.msra.mxu0 0
  %1410 = vmatprep.subr.bf16.mxu0 0
  %1411 = vmatpush1.bf16.msra.mxu0 0
  %1412 = vmatprep.subr.bf16.mxu0 0
  %1413 = vmatpush1.bf16.msra.mxu0 0
  %1414 = vmatprep.subr.bf16.mxu0 0
  %1415 = vmatpush1.bf16.msra.mxu0 0
  %1416 = vmatprep.subr.bf16.mxu0 0
  %1417 = vmatpush1.bf16.msra.mxu0 0
  %1418 = vmatprep.mubr.bf16.mxu0 0
  %1419 = vmatmul.mubr.bf16.gmra.mrb[0].mxu0 %v438
  %v1420 = vpop.f32.mrb[0].mxu0
  %v1421 = vadd.f32 %v104, %v1420
  %v1422 = vpop.f32.mrb[0].mxu0
  %v1423 = vadd.f32 %v104, %v1422
  %v1424 = vpop.f32.mrb[0].mxu0
  %v1425 = vadd.f32 %v109, %v1424
  %v1426 = vpop.f32.mrb[0].mxu0
  %v1427 = vadd.f32 %v109, %v1426
  %1428 = vdwg.mxu0
  %1429 = vmatprep.subr.bf16.mxu0 %v355
  %1430 = vmatpush1.bf16.msra.mxu0 %v354
  %1431 = vmatprep.subr.bf16.mxu0 0
  %1432 = vmatpush1.bf16.msra.mxu0 0
  %1433 = vmatprep.subr.bf16.mxu0 0
  %1434 = vmatpush1.bf16.msra.mxu0 0
  %1435 = vmatprep.subr.bf16.mxu0 0
  %1436 = vmatpush1.bf16.msra.mxu0 0
  %1437 = vmatprep.subr.bf16.mxu0 0
  %1438 = vmatpush1.bf16.msra.mxu0 0
  %1439 = vmatprep.subr.bf16.mxu0 0
  %1440 = vmatpush1.bf16.msra.mxu0 0
  %1441 = vmatprep.subr.bf16.mxu0 0
  %1442 = vmatpush1.bf16.msra.mxu0 0
  %1443 = vmatprep.subr.bf16.mxu0 0
  %1444 = vmatpush1.bf16.msra.mxu0 0
  %1445 = vmatprep.subr.bf16.mxu0 0
  %1446 = vmatpush1.bf16.msra.mxu0 0
  %1447 = vmatprep.subr.bf16.mxu0 0
  %1448 = vmatpush1.bf16.msra.mxu0 0
  %1449 = vmatprep.subr.bf16.mxu0 0
  %1450 = vmatpush1.bf16.msra.mxu0 0
  %1451 = vmatprep.subr.bf16.mxu0 0
  %1452 = vmatpush1.bf16.msra.mxu0 0
  %1453 = vmatprep.subr.bf16.mxu0 0
  %1454 = vmatpush1.bf16.msra.mxu0 0
  %1455 = vmatprep.subr.bf16.mxu0 0
  %1456 = vmatpush1.bf16.msra.mxu0 0
  %1457 = vmatprep.subr.bf16.mxu0 0
  %1458 = vmatpush1.bf16.msra.mxu0 0
  %1459 = vmatprep.subr.bf16.mxu0 0
  %1460 = vmatpush1.bf16.msra.mxu0 0
  %1461 = vmatprep.mubr.bf16.mxu0 0
  %1462 = vmatmul.mubr.bf16.gmra.mrb[0].mxu0 %v438
  %v1463 = vpop.f32.mrb[0].mxu0
  %v1464 = vadd.f32 %v104, %v1463
  %v1465 = vpop.f32.mrb[0].mxu0
  %v1466 = vadd.f32 %v104, %v1465
  %v1467 = vpop.f32.mrb[0].mxu0
  %v1468 = vadd.f32 %v109, %v1467
  %v1469 = vpop.f32.mrb[0].mxu0
  %v1470 = vadd.f32 %v109, %v1469
  %1471 = vdwg.mxu0
  %1472 = vmatprep.subr.bf16.mxu0 %v357
  %1473 = vmatpush1.bf16.msra.mxu0 %v356
  %1474 = vmatprep.subr.bf16.mxu0 0
  %1475 = vmatpush1.bf16.msra.mxu0 0
  %1476 = vmatprep.subr.bf16.mxu0 0
  %1477 = vmatpush1.bf16.msra.mxu0 0
  %1478 = vmatprep.subr.bf16.mxu0 0
  %1479 = vmatpush1.bf16.msra.mxu0 0
  %1480 = vmatprep.subr.bf16.mxu0 0
  %1481 = vmatpush1.bf16.msra.mxu0 0
  %1482 = vmatprep.subr.bf16.mxu0 0
  %1483 = vmatpush1.bf16.msra.mxu0 0
  %1484 = vmatprep.subr.bf16.mxu0 0
  %1485 = vmatpush1.bf16.msra.mxu0 0
  %1486 = vmatprep.subr.bf16.mxu0 0
  %1487 = vmatpush1.bf16.msra.mxu0 0
  %1488 = vmatprep.subr.bf16.mxu0 0
  %1489 = vmatpush1.bf16.msra.mxu0 0
  %1490 = vmatprep.subr.bf16.mxu0 0
  %1491 = vmatpush1.bf16.msra.mxu0 0
  %1492 = vmatprep.subr.bf16.mxu0 0
  %1493 = vmatpush1.bf16.msra.mxu0 0
  %1494 = vmatprep.subr.bf16.mxu0 0
  %1495 = vmatpush1.bf16.msra.mxu0 0
  %1496 = vmatprep.subr.bf16.mxu0 0
  %1497 = vmatpush1.bf16.msra.mxu0 0
  %1498 = vmatprep.subr.bf16.mxu0 0
  %1499 = vmatpush1.bf16.msra.mxu0 0
  %1500 = vmatprep.subr.bf16.mxu0 0
  %1501 = vmatpush1.bf16.msra.mxu0 0
  %1502 = vmatprep.subr.bf16.mxu0 0
  %1503 = vmatpush1.bf16.msra.mxu0 0
  %1504 = vmatprep.mubr.bf16.mxu0 0
  %1505 = vmatmul.mubr.bf16.gmra.mrb[0].mxu0 %v438
  %v1506 = vpop.f32.mrb[0].mxu0
  %v1507 = vadd.f32 %v104, %v1506
  %v1508 = vpop.f32.mrb[0].mxu0
  %v1509 = vadd.f32 %v104, %v1508
  %v1510 = vpop.f32.mrb[0].mxu0
  %v1511 = vadd.f32 %v109, %v1510
  %v1512 = vpop.f32.mrb[0].mxu0
  %v1513 = vadd.f32 %v109, %v1512
  %1514 = vdwg.mxu0
  %1515 = vmatprep.subr.bf16.mxu0 %v359
  %1516 = vmatpush1.bf16.msra.mxu0 %v358
  %1517 = vmatprep.subr.bf16.mxu0 0
  %1518 = vmatpush1.bf16.msra.mxu0 0
  %1519 = vmatprep.subr.bf16.mxu0 0
  %1520 = vmatpush1.bf16.msra.mxu0 0
  %1521 = vmatprep.subr.bf16.mxu0 0
  %1522 = vmatpush1.bf16.msra.mxu0 0
  %1523 = vmatprep.subr.bf16.mxu0 0
  %1524 = vmatpush1.bf16.msra.mxu0 0
  %1525 = vmatprep.subr.bf16.mxu0 0
  %1526 = vmatpush1.bf16.msra.mxu0 0
  %1527 = vmatprep.subr.bf16.mxu0 0
  %1528 = vmatpush1.bf16.msra.mxu0 0
  %1529 = vmatprep.subr.bf16.mxu0 0
  %1530 = vmatpush1.bf16.msra.mxu0 0
  %1531 = vmatprep.subr.bf16.mxu0 0
  %1532 = vmatpush1.bf16.msra.mxu0 0
  %1533 = vmatprep.subr.bf16.mxu0 0
  %1534 = vmatpush1.bf16.msra.mxu0 0
  %1535 = vmatprep.subr.bf16.mxu0 0
  %1536 = vmatpush1.bf16.msra.mxu0 0
  %1537 = vmatprep.subr.bf16.mxu0 0
  %1538 = vmatpush1.bf16.msra.mxu0 0
  %1539 = vmatprep.subr.bf16.mxu0 0
  %1540 = vmatpush1.bf16.msra.mxu0 0
  %1541 = vmatprep.subr.bf16.mxu0 0
  %1542 = vmatpush1.bf16.msra.mxu0 0
  %1543 = vmatprep.subr.bf16.mxu0 0
  %1544 = vmatpush1.bf16.msra.mxu0 0
  %1545 = vmatprep.subr.bf16.mxu0 0
  %1546 = vmatpush1.bf16.msra.mxu0 0
  %1547 = vmatprep.mubr.bf16.mxu0 0
  %1548 = vmatmul.mubr.bf16.gmra.mrb[0].mxu0 %v438
  %v1549 = vpop.f32.mrb[0].mxu0
  %v1550 = vadd.f32 %v104, %v1549
  %v1551 = vpop.f32.mrb[0].mxu0
  %v1552 = vadd.f32 %v104, %v1551
  %v1553 = vpop.f32.mrb[0].mxu0
  %v1554 = vadd.f32 %v109, %v1553
  %v1555 = vpop.f32.mrb[0].mxu0
  %v1556 = vadd.f32 %v109, %v1555
  %1557 = vdwg.mxu0
  %1558 = vmatprep.subr.bf16.mxu0 %v361
  %1559 = vmatpush1.bf16.msra.mxu0 %v360
  %1560 = vmatprep.subr.bf16.mxu0 0
  %1561 = vmatpush1.bf16.msra.mxu0 0
  %1562 = vmatprep.subr.bf16.mxu0 0
  %1563 = vmatpush1.bf16.msra.mxu0 0
  %1564 = vmatprep.subr.bf16.mxu0 0
  %1565 = vmatpush1.bf16.msra.mxu0 0
  %1566 = vmatprep.subr.bf16.mxu0 0
  %1567 = vmatpush1.bf16.msra.mxu0 0
  %1568 = vmatprep.subr.bf16.mxu0 0
  %1569 = vmatpush1.bf16.msra.mxu0 0
  %1570 = vmatprep.subr.bf16.mxu0 0
  %1571 = vmatpush1.bf16.msra.mxu0 0
  %1572 = vmatprep.subr.bf16.mxu0 0
  %1573 = vmatpush1.bf16.msra.mxu0 0
  %1574 = vmatprep.subr.bf16.mxu0 0
  %1575 = vmatpush1.bf16.msra.mxu0 0
  %1576 = vmatprep.subr.bf16.mxu0 0
  %1577 = vmatpush1.bf16.msra.mxu0 0
  %1578 = vmatprep.subr.bf16.mxu0 0
  %1579 = vmatpush1.bf16.msra.mxu0 0
  %1580 = vmatprep.subr.bf16.mxu0 0
  %1581 = vmatpush1.bf16.msra.mxu0 0
  %1582 = vmatprep.subr.bf16.mxu0 0
  %1583 = vmatpush1.bf16.msra.mxu0 0
  %1584 = vmatprep.subr.bf16.mxu0 0
  %1585 = vmatpush1.bf16.msra.mxu0 0
  %1586 = vmatprep.subr.bf16.mxu0 0
  %1587 = vmatpush1.bf16.msra.mxu0 0
  %1588 = vmatprep.subr.bf16.mxu0 0
  %1589 = vmatpush1.bf16.msra.mxu0 0
  %1590 = vmatprep.mubr.bf16.mxu0 0
  %1591 = vmatmul.mubr.bf16.gmra.mrb[0].mxu0 %v438
  %v1592 = vpop.f32.mrb[0].mxu0
  %v1593 = vadd.f32 %v104, %v1592
  %v1594 = vpop.f32.mrb[0].mxu0
  %v1595 = vadd.f32 %v104, %v1594
  %v1596 = vpop.f32.mrb[0].mxu0
  %v1597 = vadd.f32 %v109, %v1596
  %v1598 = vpop.f32.mrb[0].mxu0
  %v1599 = vadd.f32 %v109, %v1598
  %1600 = vdwg.mxu0
  %1601 = vmatprep.subr.bf16.mxu0 %v363
  %1602 = vmatpush1.bf16.msra.mxu0 %v362
  %1603 = vmatprep.subr.bf16.mxu0 0
  %1604 = vmatpush1.bf16.msra.mxu0 0
  %1605 = vmatprep.subr.bf16.mxu0 0
  %1606 = vmatpush1.bf16.msra.mxu0 0
  %1607 = vmatprep.subr.bf16.mxu0 0
  %1608 = vmatpush1.bf16.msra.mxu0 0
  %1609 = vmatprep.subr.bf16.mxu0 0
  %1610 = vmatpush1.bf16.msra.mxu0 0
  %1611 = vmatprep.subr.bf16.mxu0 0
  %1612 = vmatpush1.bf16.msra.mxu0 0
  %1613 = vmatprep.subr.bf16.mxu0 0
  %1614 = vmatpush1.bf16.msra.mxu0 0
  %1615 = vmatprep.subr.bf16.mxu0 0
  %1616 = vmatpush1.bf16.msra.mxu0 0
  %1617 = vmatprep.subr.bf16.mxu0 0
  %1618 = vmatpush1.bf16.msra.mxu0 0
  %1619 = vmatprep.subr.bf16.mxu0 0
  %1620 = vmatpush1.bf16.msra.mxu0 0
  %1621 = vmatprep.subr.bf16.mxu0 0
  %1622 = vmatpush1.bf16.msra.mxu0 0
  %1623 = vmatprep.subr.bf16.mxu0 0
  %1624 = vmatpush1.bf16.msra.mxu0 0
  %1625 = vmatprep.subr.bf16.mxu0 0
  %1626 = vmatpush1.bf16.msra.mxu0 0
  %1627 = vmatprep.subr.bf16.mxu0 0
  %1628 = vmatpush1.bf16.msra.mxu0 0
  %1629 = vmatprep.subr.bf16.mxu0 0
  %1630 = vmatpush1.bf16.msra.mxu0 0
  %1631 = vmatprep.subr.bf16.mxu0 0
  %1632 = vmatpush1.bf16.msra.mxu0 0
  %1633 = vmatprep.mubr.bf16.mxu0 0
  %1634 = vmatmul.mubr.bf16.gmra.mrb[0].mxu0 %v438
  %v1635 = vpop.f32.mrb[0].mxu0
  %v1636 = vadd.f32 %v104, %v1635
  %v1637 = vpop.f32.mrb[0].mxu0
  %v1638 = vadd.f32 %v104, %v1637
  %v1639 = vpop.f32.mrb[0].mxu0
  %v1640 = vadd.f32 %v109, %v1639
  %v1641 = vpop.f32.mrb[0].mxu0
  %v1642 = vadd.f32 %v109, %v1641
  %1643 = vdwg.mxu0
  %1644 = vmatprep.subr.bf16.mxu0 %v365
  %1645 = vmatpush1.bf16.msra.mxu0 %v364
  %1646 = vmatprep.subr.bf16.mxu0 0
  %1647 = vmatpush1.bf16.msra.mxu0 0
  %1648 = vmatprep.subr.bf16.mxu0 0
  %1649 = vmatpush1.bf16.msra.mxu0 0
  %1650 = vmatprep.subr.bf16.mxu0 0
  %1651 = vmatpush1.bf16.msra.mxu0 0
  %1652 = vmatprep.subr.bf16.mxu0 0
  %1653 = vmatpush1.bf16.msra.mxu0 0
  %1654 = vmatprep.subr.bf16.mxu0 0
  %1655 = vmatpush1.bf16.msra.mxu0 0
  %1656 = vmatprep.subr.bf16.mxu0 0
  %1657 = vmatpush1.bf16.msra.mxu0 0
  %1658 = vmatprep.subr.bf16.mxu0 0
  %1659 = vmatpush1.bf16.msra.mxu0 0
  %1660 = vmatprep.subr.bf16.mxu0 0
  %1661 = vmatpush1.bf16.msra.mxu0 0
  %1662 = vmatprep.subr.bf16.mxu0 0
  %1663 = vmatpush1.bf16.msra.mxu0 0
  %1664 = vmatprep.subr.bf16.mxu0 0
  %1665 = vmatpush1.bf16.msra.mxu0 0
  %1666 = vmatprep.subr.bf16.mxu0 0
  %1667 = vmatpush1.bf16.msra.mxu0 0
  %1668 = vmatprep.subr.bf16.mxu0 0
  %1669 = vmatpush1.bf16.msra.mxu0 0
  %1670 = vmatprep.subr.bf16.mxu0 0
  %1671 = vmatpush1.bf16.msra.mxu0 0
  %1672 = vmatprep.subr.bf16.mxu0 0
  %1673 = vmatpush1.bf16.msra.mxu0 0
  %1674 = vmatprep.subr.bf16.mxu0 0
  %1675 = vmatpush1.bf16.msra.mxu0 0
  %1676 = vmatprep.mubr.bf16.mxu0 0
  %1677 = vmatmul.mubr.bf16.gmra.mrb[0].mxu0 %v438
  %v1678 = vpop.f32.mrb[0].mxu0
  %v1679 = vadd.f32 %v104, %v1678
  %v1680 = vpop.f32.mrb[0].mxu0
  %v1681 = vadd.f32 %v104, %v1680
  %v1682 = vpop.f32.mrb[0].mxu0
  %v1683 = vadd.f32 %v109, %v1682
  %v1684 = vpop.f32.mrb[0].mxu0
  %v1685 = vadd.f32 %v109, %v1684
  %1686 = vdwg.mxu0
  %1687 = vmatprep.subr.bf16.mxu0 %v367
  %1688 = vmatpush1.bf16.msra.mxu0 %v366
  %1689 = vmatprep.subr.bf16.mxu0 0
  %1690 = vmatpush1.bf16.msra.mxu0 0
  %1691 = vmatprep.subr.bf16.mxu0 0
  %1692 = vmatpush1.bf16.msra.mxu0 0
  %1693 = vmatprep.subr.bf16.mxu0 0
  %1694 = vmatpush1.bf16.msra.mxu0 0
  %1695 = vmatprep.subr.bf16.mxu0 0
  %1696 = vmatpush1.bf16.msra.mxu0 0
  %1697 = vmatprep.subr.bf16.mxu0 0
  %1698 = vmatpush1.bf16.msra.mxu0 0
  %1699 = vmatprep.subr.bf16.mxu0 0
  %1700 = vmatpush1.bf16.msra.mxu0 0
  %1701 = vmatprep.subr.bf16.mxu0 0
  %1702 = vmatpush1.bf16.msra.mxu0 0
  %1703 = vmatprep.subr.bf16.mxu0 0
  %1704 = vmatpush1.bf16.msra.mxu0 0
  %1705 = vmatprep.subr.bf16.mxu0 0
  %1706 = vmatpush1.bf16.msra.mxu0 0
  %1707 = vmatprep.subr.bf16.mxu0 0
  %1708 = vmatpush1.bf16.msra.mxu0 0
  %1709 = vmatprep.subr.bf16.mxu0 0
  %1710 = vmatpush1.bf16.msra.mxu0 0
  %1711 = vmatprep.subr.bf16.mxu0 0
  %1712 = vmatpush1.bf16.msra.mxu0 0
  %1713 = vmatprep.subr.bf16.mxu0 0
  %1714 = vmatpush1.bf16.msra.mxu0 0
  %1715 = vmatprep.subr.bf16.mxu0 0
  %1716 = vmatpush1.bf16.msra.mxu0 0
  %1717 = vmatprep.subr.bf16.mxu0 0
  %1718 = vmatpush1.bf16.msra.mxu0 0
  %1719 = vmatprep.mubr.bf16.mxu0 0
  %1720 = vmatmul.mubr.bf16.gmra.mrb[0].mxu0 %v438
  %v1721 = vpop.f32.mrb[0].mxu0
  %v1722 = vadd.f32 %v104, %v1721
  %v1723 = vpop.f32.mrb[0].mxu0
  %v1724 = vadd.f32 %v104, %v1723
  %v1725 = vpop.f32.mrb[0].mxu0
  %v1726 = vadd.f32 %v109, %v1725
  %v1727 = vpop.f32.mrb[0].mxu0
  %v1728 = vadd.f32 %v109, %v1727
  %1729 = vdwg.mxu0
  %1730 = vmatprep.subr.bf16.mxu0 %v369
  %1731 = vmatpush1.bf16.msra.mxu0 %v368
  %1732 = vmatprep.subr.bf16.mxu0 0
  %1733 = vmatpush1.bf16.msra.mxu0 0
  %1734 = vmatprep.subr.bf16.mxu0 0
  %1735 = vmatpush1.bf16.msra.mxu0 0
  %1736 = vmatprep.subr.bf16.mxu0 0
  %1737 = vmatpush1.bf16.msra.mxu0 0
  %1738 = vmatprep.subr.bf16.mxu0 0
  %1739 = vmatpush1.bf16.msra.mxu0 0
  %1740 = vmatprep.subr.bf16.mxu0 0
  %1741 = vmatpush1.bf16.msra.mxu0 0
  %1742 = vmatprep.subr.bf16.mxu0 0
  %1743 = vmatpush1.bf16.msra.mxu0 0
  %1744 = vmatprep.subr.bf16.mxu0 0
  %1745 = vmatpush1.bf16.msra.mxu0 0
  %1746 = vmatprep.subr.bf16.mxu0 0
  %1747 = vmatpush1.bf16.msra.mxu0 0
  %1748 = vmatprep.subr.bf16.mxu0 0
  %1749 = vmatpush1.bf16.msra.mxu0 0
  %1750 = vmatprep.subr.bf16.mxu0 0
  %1751 = vmatpush1.bf16.msra.mxu0 0
  %1752 = vmatprep.subr.bf16.mxu0 0
  %1753 = vmatpush1.bf16.msra.mxu0 0
  %1754 = vmatprep.subr.bf16.mxu0 0
  %1755 = vmatpush1.bf16.msra.mxu0 0
  %1756 = vmatprep.subr.bf16.mxu0 0
  %1757 = vmatpush1.bf16.msra.mxu0 0
  %1758 = vmatprep.subr.bf16.mxu0 0
  %1759 = vmatpush1.bf16.msra.mxu0 0
  %1760 = vmatprep.subr.bf16.mxu0 0
  %1761 = vmatpush1.bf16.msra.mxu0 0
  %1762 = vmatprep.mubr.bf16.mxu0 0
  %1763 = vmatmul.mubr.bf16.gmra.mrb[0].mxu0 %v438
  %v1764 = vpop.f32.mrb[0].mxu0
  %v1765 = vadd.f32 %v104, %v1764
  %v1766 = vpop.f32.mrb[0].mxu0
  %v1767 = vadd.f32 %v104, %v1766
  %v1768 = vpop.f32.mrb[0].mxu0
  %v1769 = vadd.f32 %v109, %v1768
  %v1770 = vpop.f32.mrb[0].mxu0
  %v1771 = vadd.f32 %v109, %v1770
  %1772 = vdwg.mxu0
  %1773 = vmatprep.subr.bf16.mxu0 %v371
  %1774 = vmatpush1.bf16.msra.mxu0 %v370
  %1775 = vmatprep.subr.bf16.mxu0 0
  %1776 = vmatpush1.bf16.msra.mxu0 0
  %1777 = vmatprep.subr.bf16.mxu0 0
  %1778 = vmatpush1.bf16.msra.mxu0 0
  %1779 = vmatprep.subr.bf16.mxu0 0
  %1780 = vmatpush1.bf16.msra.mxu0 0
  %1781 = vmatprep.subr.bf16.mxu0 0
  %1782 = vmatpush1.bf16.msra.mxu0 0
  %1783 = vmatprep.subr.bf16.mxu0 0
  %1784 = vmatpush1.bf16.msra.mxu0 0
  %1785 = vmatprep.subr.bf16.mxu0 0
  %1786 = vmatpush1.bf16.msra.mxu0 0
  %1787 = vmatprep.subr.bf16.mxu0 0
  %1788 = vmatpush1.bf16.msra.mxu0 0
  %1789 = vmatprep.subr.bf16.mxu0 0
  %1790 = vmatpush1.bf16.msra.mxu0 0
  %1791 = vmatprep.subr.bf16.mxu0 0
  %1792 = vmatpush1.bf16.msra.mxu0 0
  %1793 = vmatprep.subr.bf16.mxu0 0
  %1794 = vmatpush1.bf16.msra.mxu0 0
  %1795 = vmatprep.subr.bf16.mxu0 0
  %1796 = vmatpush1.bf16.msra.mxu0 0
  %1797 = vmatprep.subr.bf16.mxu0 0
  %1798 = vmatpush1.bf16.msra.mxu0 0
  %1799 = vmatprep.subr.bf16.mxu0 0
  %1800 = vmatpush1.bf16.msra.mxu0 0
  %1801 = vmatprep.subr.bf16.mxu0 0
  %1802 = vmatpush1.bf16.msra.mxu0 0
  %1803 = vmatprep.subr.bf16.mxu0 0
  %1804 = vmatpush1.bf16.msra.mxu0 0
  %1805 = vmatprep.mubr.bf16.mxu0 0
  %1806 = vmatmul.mubr.bf16.gmra.mrb[0].mxu0 %v438
  %v1807 = vpop.f32.mrb[0].mxu0
  %v1808 = vadd.f32 %v104, %v1807
  %v1809 = vpop.f32.mrb[0].mxu0
  %v1810 = vadd.f32 %v104, %v1809
  %v1811 = vpop.f32.mrb[0].mxu0
  %v1812 = vadd.f32 %v109, %v1811
  %v1813 = vpop.f32.mrb[0].mxu0
  %v1814 = vadd.f32 %v109, %v1813
  %1815 = vdwg.mxu0
  %v1816 = vmax.f32 %v475, 0.0
  %v1817 = vmax.f32 %v477, 0.0
  %v1818 = vmax.f32 %v518, 0.0
  %v1819 = vmax.f32 %v520, 0.0
  %v1820 = vmax.f32 %v561, 0.0
  %v1821 = vmax.f32 %v563, 0.0
  %v1822 = vmax.f32 %v604, 0.0
  %v1823 = vmax.f32 %v606, 0.0
  %v1824 = vmax.f32 %v647, 0.0
  %v1825 = vmax.f32 %v649, 0.0
  %v1826 = vmax.f32 %v690, 0.0
  %v1827 = vmax.f32 %v692, 0.0
  %v1828 = vmax.f32 %v733, 0.0
  %v1829 = vmax.f32 %v735, 0.0
  %v1830 = vmax.f32 %v776, 0.0
  %v1831 = vmax.f32 %v778, 0.0
  %v1832 = vmax.f32 %v819, 0.0
  %v1833 = vmax.f32 %v821, 0.0
  %v1834 = vmax.f32 %v862, 0.0
  %v1835 = vmax.f32 %v864, 0.0
  %v1836 = vmax.f32 %v905, 0.0
  %v1837 = vmax.f32 %v907, 0.0
  %v1838 = vmax.f32 %v948, 0.0
  %v1839 = vmax.f32 %v950, 0.0
  %v1840 = vmax.f32 %v991, 0.0
  %v1841 = vmax.f32 %v993, 0.0
  %v1842 = vmax.f32 %v1034, 0.0
  %v1843 = vmax.f32 %v1036, 0.0
  %v1844 = vmax.f32 %v1077, 0.0
  %v1845 = vmax.f32 %v1079, 0.0
  %v1846 = vmax.f32 %v1120, 0.0
  %v1847 = vmax.f32 %v1122, 0.0
  %v1848 = vmax.f32 %v1163, 0.0
  %v1849 = vmax.f32 %v1165, 0.0
  %v1850 = vmax.f32 %v1206, 0.0
  %v1851 = vmax.f32 %v1208, 0.0
  %v1852 = vmax.f32 %v1249, 0.0
  %v1853 = vmax.f32 %v1251, 0.0
  %v1854 = vmax.f32 %v1292, 0.0
  %v1855 = vmax.f32 %v1294, 0.0
  %v1856 = vmax.f32 %v1335, 0.0
  %v1857 = vmax.f32 %v1337, 0.0
  %v1858 = vmax.f32 %v1378, 0.0
  %v1859 = vmax.f32 %v1380, 0.0
  %v1860 = vmax.f32 %v1421, 0.0
  %v1861 = vmax.f32 %v1423, 0.0
  %v1862 = vmax.f32 %v1464, 0.0
  %v1863 = vmax.f32 %v1466, 0.0
  %v1864 = vmax.f32 %v1507, 0.0
  %v1865 = vmax.f32 %v1509, 0.0
  %v1866 = vmax.f32 %v1550, 0.0
  %v1867 = vmax.f32 %v1552, 0.0
  %v1868 = vmax.f32 %v1593, 0.0
  %v1869 = vmax.f32 %v1595, 0.0
  %v1870 = vmax.f32 %v1636, 0.0
  %v1871 = vmax.f32 %v1638, 0.0
  %v1872 = vmax.f32 %v1679, 0.0
  %v1873 = vmax.f32 %v1681, 0.0
  %v1874 = vmax.f32 %v1722, 0.0
  %v1875 = vmax.f32 %v1724, 0.0
  %v1876 = vmax.f32 %v1765, 0.0
  %v1877 = vmax.f32 %v1767, 0.0
  %v1878 = vmax.f32 %v1808, 0.0
  %v1879 = vmax.f32 %v1810, 0.0
  %v1880 = vmax.f32 %v479, 0.0
  %v1881 = vmax.f32 %v481, 0.0
  %v1882 = vmax.f32 %v522, 0.0
  %v1883 = vmax.f32 %v524, 0.0
  %v1884 = vmax.f32 %v565, 0.0
  %v1885 = vmax.f32 %v567, 0.0
  %v1886 = vmax.f32 %v608, 0.0
  %v1887 = vmax.f32 %v610, 0.0
  %v1888 = vmax.f32 %v651, 0.0
  %v1889 = vmax.f32 %v653, 0.0
  %v1890 = vmax.f32 %v694, 0.0
  %v1891 = vmax.f32 %v696, 0.0
  %v1892 = vmax.f32 %v737, 0.0
  %v1893 = vmax.f32 %v739, 0.0
  %v1894 = vmax.f32 %v780, 0.0
  %v1895 = vmax.f32 %v782, 0.0
  %v1896 = vmax.f32 %v823, 0.0
  %v1897 = vmax.f32 %v825, 0.0
  %v1898 = vmax.f32 %v866, 0.0
  %v1899 = vmax.f32 %v868, 0.0
  %v1900 = vmax.f32 %v909, 0.0
  %v1901 = vmax.f32 %v911, 0.0
  %v1902 = vmax.f32 %v952, 0.0
  %v1903 = vmax.f32 %v954, 0.0
  %v1904 = vmax.f32 %v995, 0.0
  %v1905 = vmax.f32 %v997, 0.0
  %v1906 = vmax.f32 %v1038, 0.0
  %v1907 = vmax.f32 %v1040, 0.0
  %v1908 = vmax.f32 %v1081, 0.0
  %v1909 = vmax.f32 %v1083, 0.0
  %v1910 = vmax.f32 %v1124, 0.0
  %v1911 = vmax.f32 %v1126, 0.0
  %v1912 = vmax.f32 %v1167, 0.0
  %v1913 = vmax.f32 %v1169, 0.0
  %v1914 = vmax.f32 %v1210, 0.0
  %v1915 = vmax.f32 %v1212, 0.0
  %v1916 = vmax.f32 %v1253, 0.0
  %v1917 = vmax.f32 %v1255, 0.0
  %v1918 = vmax.f32 %v1296, 0.0
  %v1919 = vmax.f32 %v1298, 0.0
  %v1920 = vmax.f32 %v1339, 0.0
  %v1921 = vmax.f32 %v1341, 0.0
  %v1922 = vmax.f32 %v1382, 0.0
  %v1923 = vmax.f32 %v1384, 0.0
  %v1924 = vmax.f32 %v1425, 0.0
  %v1925 = vmax.f32 %v1427, 0.0
  %v1926 = vmax.f32 %v1468, 0.0
  %v1927 = vmax.f32 %v1470, 0.0
  %v1928 = vmax.f32 %v1511, 0.0
  %v1929 = vmax.f32 %v1513, 0.0
  %v1930 = vmax.f32 %v1554, 0.0
  %v1931 = vmax.f32 %v1556, 0.0
  %v1932 = vmax.f32 %v1597, 0.0
  %v1933 = vmax.f32 %v1599, 0.0
  %v1934 = vmax.f32 %v1640, 0.0
  %v1935 = vmax.f32 %v1642, 0.0
  %v1936 = vmax.f32 %v1683, 0.0
  %v1937 = vmax.f32 %v1685, 0.0
  %v1938 = vmax.f32 %v1726, 0.0
  %v1939 = vmax.f32 %v1728, 0.0
  %v1940 = vmax.f32 %v1769, 0.0
  %v1941 = vmax.f32 %v1771, 0.0
  %v1942 = vmax.f32 %v1812, 0.0
  %v1943 = vmax.f32 %v1814, 0.0
  %v1944 = vld [vmem:[%s3] sm:$0xff]
  %v1945 = vld [vmem:[%s3 + $0x8] sm:$0xff]
  %v1946 = vld [vmem:[%s3 + $0x10] sm:$0xff]
  %v1947 = vld [vmem:[%s3 + $0x18] sm:$0xff]
  %v1948 = vld [vmem:[%s4] sm:$0xff]
  %v1949 = vld [vmem:[%s4 + $0x8] sm:$0xff]
  %v1950 = vld [vmem:[%s4 + $0x10] sm:$0xff]
  %v1951 = vld [vmem:[%s4 + $0x18] sm:$0xff]
  %1953 = vset.pattern.permute.xlu0 0
  %1954 = vperm.xlu0 %1953, %v1948
  %v1955 = vpop.permute.xlu0 %1954
  %1958 = vset.pattern.permute.xlu0 0
  %1959 = vperm.xlu0 %1958, %v1949
  %v1960 = vpop.permute.xlu0 %1959
  %1963 = vset.pattern.permute.xlu0 0
  %1964 = vperm.xlu0 %1963, %v1950
  %v1965 = vpop.permute.xlu0 %1964
  %1968 = vset.pattern.permute.xlu0 0
  %1969 = vperm.xlu0 %1968, %v1951
  %v1970 = vpop.permute.xlu0 %1969
  %vm1972 = vcmask 523264
  %v1974 = vsel %vm1972, %v1944, 0
  %v1977 = vsel %vm1972, %v1945, 0
  %v1980 = vsel %vm1972, %v1946, 0
  %v1983 = vsel %vm1972, %v1947, 0
  %1985 = vmatprep.subr.mxu0 %v1817
  %1986 = vmatpush1.msra.mxu0 %v1816
  %1987 = vmatprep.subr.mxu0 %v1881
  %1988 = vmatpush1.msra.mxu0 %v1880
  %1989 = vmatprep.subr.mxu0 %v1833
  %1990 = vmatpush1.msra.mxu0 %v1832
  %1991 = vmatprep.subr.mxu0 %v1897
  %1992 = vmatpush1.msra.mxu0 %v1896
  %1993 = vmatprep.subr.mxu0 %v1849
  %1994 = vmatpush1.msra.mxu0 %v1848
  %1995 = vmatprep.subr.mxu0 %v1913
  %1996 = vmatpush1.msra.mxu0 %v1912
  %1997 = vmatprep.subr.mxu0 %v1865
  %1998 = vmatpush1.msra.mxu0 %v1864
  %1999 = vmatprep.subr.mxu0 %v1929
  %2000 = vmatpush1.msra.mxu0 %v1928
  %2001 = vmatprep.subr.mxu0 0.0
  %2002 = vmatpush1.msra.mxu0 0.0
  %2003 = vmatprep.subr.mxu0 0.0
  %2004 = vmatpush1.msra.mxu0 0.0
  %2005 = vmatprep.subr.mxu0 0.0
  %2006 = vmatpush1.msra.mxu0 0.0
  %2007 = vmatprep.subr.mxu0 0.0
  %2008 = vmatpush1.msra.mxu0 0.0
  %2009 = vmatprep.subr.mxu0 0.0
  %2010 = vmatpush1.msra.mxu0 0.0
  %2011 = vmatprep.subr.mxu0 0.0
  %2012 = vmatpush1.msra.mxu0 0.0
  %2013 = vmatprep.subr.mxu0 0.0
  %2014 = vmatpush1.msra.mxu0 0.0
  %2015 = vmatprep.subr.mxu0 0.0
  %2016 = vmatpush1.msra.mxu0 0.0
  %2017 = vmatprep.subr.mxu0 0.0
  %2018 = vmatpush1.msra.mxu0 0.0
  %2019 = vmatprep.subr.mxu0 0.0
  %2020 = vmatpush1.msra.mxu0 0.0
  %2021 = vmatprep.subr.mxu0 0.0
  %2022 = vmatpush1.msra.mxu0 0.0
  %2023 = vmatprep.subr.mxu0 0.0
  %2024 = vmatpush1.msra.mxu0 0.0
  %2025 = vmatprep.subr.mxu0 0.0
  %2026 = vmatpush1.msra.mxu0 0.0
  %2027 = vmatprep.subr.mxu0 0.0
  %2028 = vmatpush1.msra.mxu0 0.0
  %2029 = vmatprep.subr.mxu0 0.0
  %2030 = vmatpush1.msra.mxu0 0.0
  %2031 = vmatprep.subr.mxu0 0.0
  %2032 = vmatpush1.msra.mxu0 0.0
  %2033 = vmatprep.subr.mxu0 0.0
  %2034 = vmatpush1.msra.mxu0 0.0
  %2035 = vmatprep.subr.mxu0 0.0
  %2036 = vmatpush1.msra.mxu0 0.0
  %2037 = vmatprep.subr.mxu0 0.0
  %2038 = vmatpush1.msra.mxu0 0.0
  %2039 = vmatprep.subr.mxu0 0.0
  %2040 = vmatpush1.msra.mxu0 0.0
  %2041 = vmatprep.subr.mxu0 0.0
  %2042 = vmatpush1.msra.mxu0 0.0
  %2043 = vmatprep.subr.mxu0 0.0
  %2044 = vmatpush1.msra.mxu0 0.0
  %2045 = vmatprep.subr.mxu0 0.0
  %2046 = vmatpush1.msra.mxu0 0.0
  %2047 = vmatprep.subr.mxu0 0.0
  %2048 = vmatpush1.msra.mxu0 0.0
  %2049 = vmatprep.mubr.f32.mxu0 0.0
  %2050 = vmatmul.mubr.f32.gmra.mrb[0].mxu0 %v1974
  %v2051 = vpop.f32.mrb[0].mxu0
  %v2052 = vadd.f32 %v1955, %v2051
  %v2053 = vpop.f32.mrb[0].mxu0
  %v2054 = vadd.f32 %v1955, %v2053
  %2055 = vmatprep.mubr.f32.mxu0 0.0
  %2056 = vmatmul.mubr.f32.gmra.mrb[0].mxu0 %v1977
  %v2057 = vpop.f32.mrb[0].mxu0
  %v2058 = vadd.f32 %v1960, %v2057
  %v2059 = vpop.f32.mrb[0].mxu0
  %v2060 = vadd.f32 %v1960, %v2059
  %2061 = vmatprep.mubr.f32.mxu0 0.0
  %2062 = vmatmul.mubr.f32.gmra.mrb[0].mxu0 %v1980
  %v2063 = vpop.f32.mrb[0].mxu0
  %v2064 = vadd.f32 %v1965, %v2063
  %v2065 = vpop.f32.mrb[0].mxu0
  %v2066 = vadd.f32 %v1965, %v2065
  %2067 = vmatprep.mubr.f32.mxu0 0.0
  %2068 = vmatmul.mubr.f32.gmra.mrb[0].mxu0 %v1983
  %v2069 = vpop.f32.mrb[0].mxu0
  %v2070 = vadd.f32 %v1970, %v2069
  %v2071 = vpop.f32.mrb[0].mxu0
  %v2072 = vadd.f32 %v1970, %v2071
  %2073 = vdwg.mxu0
  %2074 = vmatprep.subr.mxu0 %v1819
  %2075 = vmatpush1.msra.mxu0 %v1818
  %2076 = vmatprep.subr.mxu0 %v1883
  %2077 = vmatpush1.msra.mxu0 %v1882
  %2078 = vmatprep.subr.mxu0 %v1835
  %2079 = vmatpush1.msra.mxu0 %v1834
  %2080 = vmatprep.subr.mxu0 %v1899
  %2081 = vmatpush1.msra.mxu0 %v1898
  %2082 = vmatprep.subr.mxu0 %v1851
  %2083 = vmatpush1.msra.mxu0 %v1850
  %2084 = vmatprep.subr.mxu0 %v1915
  %2085 = vmatpush1.msra.mxu0 %v1914
  %2086 = vmatprep.subr.mxu0 %v1867
  %2087 = vmatpush1.msra.mxu0 %v1866
  %2088 = vmatprep.subr.mxu0 %v1931
  %2089 = vmatpush1.msra.mxu0 %v1930
  %2090 = vmatprep.subr.mxu0 0.0
  %2091 = vmatpush1.msra.mxu0 0.0
  %2092 = vmatprep.subr.mxu0 0.0
  %2093 = vmatpush1.msra.mxu0 0.0
  %2094 = vmatprep.subr.mxu0 0.0
  %2095 = vmatpush1.msra.mxu0 0.0
  %2096 = vmatprep.subr.mxu0 0.0
  %2097 = vmatpush1.msra.mxu0 0.0
  %2098 = vmatprep.subr.mxu0 0.0
  %2099 = vmatpush1.msra.mxu0 0.0
  %2100 = vmatprep.subr.mxu0 0.0
  %2101 = vmatpush1.msra.mxu0 0.0
  %2102 = vmatprep.subr.mxu0 0.0
  %2103 = vmatpush1.msra.mxu0 0.0
  %2104 = vmatprep.subr.mxu0 0.0
  %2105 = vmatpush1.msra.mxu0 0.0
  %2106 = vmatprep.subr.mxu0 0.0
  %2107 = vmatpush1.msra.mxu0 0.0
  %2108 = vmatprep.subr.mxu0 0.0
  %2109 = vmatpush1.msra.mxu0 0.0
  %2110 = vmatprep.subr.mxu0 0.0
  %2111 = vmatpush1.msra.mxu0 0.0
  %2112 = vmatprep.subr.mxu0 0.0
  %2113 = vmatpush1.msra.mxu0 0.0
  %2114 = vmatprep.subr.mxu0 0.0
  %2115 = vmatpush1.msra.mxu0 0.0
  %2116 = vmatprep.subr.mxu0 0.0
  %2117 = vmatpush1.msra.mxu0 0.0
  %2118 = vmatprep.subr.mxu0 0.0
  %2119 = vmatpush1.msra.mxu0 0.0
  %2120 = vmatprep.subr.mxu0 0.0
  %2121 = vmatpush1.msra.mxu0 0.0
  %2122 = vmatprep.subr.mxu0 0.0
  %2123 = vmatpush1.msra.mxu0 0.0
  %2124 = vmatprep.subr.mxu0 0.0
  %2125 = vmatpush1.msra.mxu0 0.0
  %2126 = vmatprep.subr.mxu0 0.0
  %2127 = vmatpush1.msra.mxu0 0.0
  %2128 = vmatprep.subr.mxu0 0.0
  %2129 = vmatpush1.msra.mxu0 0.0
  %2130 = vmatprep.subr.mxu0 0.0
  %2131 = vmatpush1.msra.mxu0 0.0
  %2132 = vmatprep.subr.mxu0 0.0
  %2133 = vmatpush1.msra.mxu0 0.0
  %2134 = vmatprep.subr.mxu0 0.0
  %2135 = vmatpush1.msra.mxu0 0.0
  %2136 = vmatprep.subr.mxu0 0.0
  %2137 = vmatpush1.msra.mxu0 0.0
  %2138 = vmatprep.mubr.f32.mxu0 0.0
  %2139 = vmatmul.mubr.f32.gmra.mrb[0].mxu0 %v1974
  %v2140 = vpop.f32.mrb[0].mxu0
  %v2141 = vadd.f32 %v1955, %v2140
  %v2142 = vpop.f32.mrb[0].mxu0
  %v2143 = vadd.f32 %v1955, %v2142
  %2144 = vmatprep.mubr.f32.mxu0 0.0
  %2145 = vmatmul.mubr.f32.gmra.mrb[0].mxu0 %v1977
  %v2146 = vpop.f32.mrb[0].mxu0
  %v2147 = vadd.f32 %v1960, %v2146
  %v2148 = vpop.f32.mrb[0].mxu0
  %v2149 = vadd.f32 %v1960, %v2148
  %2150 = vmatprep.mubr.f32.mxu0 0.0
  %2151 = vmatmul.mubr.f32.gmra.mrb[0].mxu0 %v1980
  %v2152 = vpop.f32.mrb[0].mxu0
  %v2153 = vadd.f32 %v1965, %v2152
  %v2154 = vpop.f32.mrb[0].mxu0
  %v2155 = vadd.f32 %v1965, %v2154
  %2156 = vmatprep.mubr.f32.mxu0 0.0
  %2157 = vmatmul.mubr.f32.gmra.mrb[0].mxu0 %v1983
  %v2158 = vpop.f32.mrb[0].mxu0
  %v2159 = vadd.f32 %v1970, %v2158
  %v2160 = vpop.f32.mrb[0].mxu0
  %v2161 = vadd.f32 %v1970, %v2160
  %2162 = vdwg.mxu0
  %2163 = vmatprep.subr.mxu0 %v1821
  %2164 = vmatpush1.msra.mxu0 %v1820
  %2165 = vmatprep.subr.mxu0 %v1885
  %2166 = vmatpush1.msra.mxu0 %v1884
  %2167 = vmatprep.subr.mxu0 %v1837
  %2168 = vmatpush1.msra.mxu0 %v1836
  %2169 = vmatprep.subr.mxu0 %v1901
  %2170 = vmatpush1.msra.mxu0 %v1900
  %2171 = vmatprep.subr.mxu0 %v1853
  %2172 = vmatpush1.msra.mxu0 %v1852
  %2173 = vmatprep.subr.mxu0 %v1917
  %2174 = vmatpush1.msra.mxu0 %v1916
  %2175 = vmatprep.subr.mxu0 %v1869
  %2176 = vmatpush1.msra.mxu0 %v1868
  %2177 = vmatprep.subr.mxu0 %v1933
  %2178 = vmatpush1.msra.mxu0 %v1932
  %2179 = vmatprep.subr.mxu0 0.0
  %2180 = vmatpush1.msra.mxu0 0.0
  %2181 = vmatprep.subr.mxu0 0.0
  %2182 = vmatpush1.msra.mxu0 0.0
  %2183 = vmatprep.subr.mxu0 0.0
  %2184 = vmatpush1.msra.mxu0 0.0
  %2185 = vmatprep.subr.mxu0 0.0
  %2186 = vmatpush1.msra.mxu0 0.0
  %2187 = vmatprep.subr.mxu0 0.0
  %2188 = vmatpush1.msra.mxu0 0.0
  %2189 = vmatprep.subr.mxu0 0.0
  %2190 = vmatpush1.msra.mxu0 0.0
  %2191 = vmatprep.subr.mxu0 0.0
  %2192 = vmatpush1.msra.mxu0 0.0
  %2193 = vmatprep.subr.mxu0 0.0
  %2194 = vmatpush1.msra.mxu0 0.0
  %2195 = vmatprep.subr.mxu0 0.0
  %2196 = vmatpush1.msra.mxu0 0.0
  %2197 = vmatprep.subr.mxu0 0.0
  %2198 = vmatpush1.msra.mxu0 0.0
  %2199 = vmatprep.subr.mxu0 0.0
  %2200 = vmatpush1.msra.mxu0 0.0
  %2201 = vmatprep.subr.mxu0 0.0
  %2202 = vmatpush1.msra.mxu0 0.0
  %2203 = vmatprep.subr.mxu0 0.0
  %2204 = vmatpush1.msra.mxu0 0.0
  %2205 = vmatprep.subr.mxu0 0.0
  %2206 = vmatpush1.msra.mxu0 0.0
  %2207 = vmatprep.subr.mxu0 0.0
  %2208 = vmatpush1.msra.mxu0 0.0
  %2209 = vmatprep.subr.mxu0 0.0
  %2210 = vmatpush1.msra.mxu0 0.0
  %2211 = vmatprep.subr.mxu0 0.0
  %2212 = vmatpush1.msra.mxu0 0.0
  %2213 = vmatprep.subr.mxu0 0.0
  %2214 = vmatpush1.msra.mxu0 0.0
  %2215 = vmatprep.subr.mxu0 0.0
  %2216 = vmatpush1.msra.mxu0 0.0
  %2217 = vmatprep.subr.mxu0 0.0
  %2218 = vmatpush1.msra.mxu0 0.0
  %2219 = vmatprep.subr.mxu0 0.0
  %2220 = vmatpush1.msra.mxu0 0.0
  %2221 = vmatprep.subr.mxu0 0.0
  %2222 = vmatpush1.msra.mxu0 0.0
  %2223 = vmatprep.subr.mxu0 0.0
  %2224 = vmatpush1.msra.mxu0 0.0
  %2225 = vmatprep.subr.mxu0 0.0
  %2226 = vmatpush1.msra.mxu0 0.0
  %2227 = vmatprep.mubr.f32.mxu0 0.0
  %2228 = vmatmul.mubr.f32.gmra.mrb[0].mxu0 %v1974
  %v2229 = vpop.f32.mrb[0].mxu0
  %v2230 = vadd.f32 %v1955, %v2229
  %v2231 = vpop.f32.mrb[0].mxu0
  %v2232 = vadd.f32 %v1955, %v2231
  %2233 = vmatprep.mubr.f32.mxu0 0.0
  %2234 = vmatmul.mubr.f32.gmra.mrb[0].mxu0 %v1977
  %v2235 = vpop.f32.mrb[0].mxu0
  %v2236 = vadd.f32 %v1960, %v2235
  %v2237 = vpop.f32.mrb[0].mxu0
  %v2238 = vadd.f32 %v1960, %v2237
  %2239 = vmatprep.mubr.f32.mxu0 0.0
  %2240 = vmatmul.mubr.f32.gmra.mrb[0].mxu0 %v1980
  %v2241 = vpop.f32.mrb[0].mxu0
  %v2242 = vadd.f32 %v1965, %v2241
  %v2243 = vpop.f32.mrb[0].mxu0
  %v2244 = vadd.f32 %v1965, %v2243
  %2245 = vmatprep.mubr.f32.mxu0 0.0
  %2246 = vmatmul.mubr.f32.gmra.mrb[0].mxu0 %v1983
  %v2247 = vpop.f32.mrb[0].mxu0
  %v2248 = vadd.f32 %v1970, %v2247
  %v2249 = vpop.f32.mrb[0].mxu0
  %v2250 = vadd.f32 %v1970, %v2249
  %2251 = vdwg.mxu0
  %2252 = vmatprep.subr.mxu0 %v1823
  %2253 = vmatpush1.msra.mxu0 %v1822
  %2254 = vmatprep.subr.mxu0 %v1887
  %2255 = vmatpush1.msra.mxu0 %v1886
  %2256 = vmatprep.subr.mxu0 %v1839
  %2257 = vmatpush1.msra.mxu0 %v1838
  %2258 = vmatprep.subr.mxu0 %v1903
  %2259 = vmatpush1.msra.mxu0 %v1902
  %2260 = vmatprep.subr.mxu0 %v1855
  %2261 = vmatpush1.msra.mxu0 %v1854
  %2262 = vmatprep.subr.mxu0 %v1919
  %2263 = vmatpush1.msra.mxu0 %v1918
  %2264 = vmatprep.subr.mxu0 %v1871
  %2265 = vmatpush1.msra.mxu0 %v1870
  %2266 = vmatprep.subr.mxu0 %v1935
  %2267 = vmatpush1.msra.mxu0 %v1934
  %2268 = vmatprep.subr.mxu0 0.0
  %2269 = vmatpush1.msra.mxu0 0.0
  %2270 = vmatprep.subr.mxu0 0.0
  %2271 = vmatpush1.msra.mxu0 0.0
  %2272 = vmatprep.subr.mxu0 0.0
  %2273 = vmatpush1.msra.mxu0 0.0
  %2274 = vmatprep.subr.mxu0 0.0
  %2275 = vmatpush1.msra.mxu0 0.0
  %2276 = vmatprep.subr.mxu0 0.0
  %2277 = vmatpush1.msra.mxu0 0.0
  %2278 = vmatprep.subr.mxu0 0.0
  %2279 = vmatpush1.msra.mxu0 0.0
  %2280 = vmatprep.subr.mxu0 0.0
  %2281 = vmatpush1.msra.mxu0 0.0
  %2282 = vmatprep.subr.mxu0 0.0
  %2283 = vmatpush1.msra.mxu0 0.0
  %2284 = vmatprep.subr.mxu0 0.0
  %2285 = vmatpush1.msra.mxu0 0.0
  %2286 = vmatprep.subr.mxu0 0.0
  %2287 = vmatpush1.msra.mxu0 0.0
  %2288 = vmatprep.subr.mxu0 0.0
  %2289 = vmatpush1.msra.mxu0 0.0
  %2290 = vmatprep.subr.mxu0 0.0
  %2291 = vmatpush1.msra.mxu0 0.0
  %2292 = vmatprep.subr.mxu0 0.0
  %2293 = vmatpush1.msra.mxu0 0.0
  %2294 = vmatprep.subr.mxu0 0.0
  %2295 = vmatpush1.msra.mxu0 0.0
  %2296 = vmatprep.subr.mxu0 0.0
  %2297 = vmatpush1.msra.mxu0 0.0
  %2298 = vmatprep.subr.mxu0 0.0
  %2299 = vmatpush1.msra.mxu0 0.0
  %2300 = vmatprep.subr.mxu0 0.0
  %2301 = vmatpush1.msra.mxu0 0.0
  %2302 = vmatprep.subr.mxu0 0.0
  %2303 = vmatpush1.msra.mxu0 0.0
  %2304 = vmatprep.subr.mxu0 0.0
  %2305 = vmatpush1.msra.mxu0 0.0
  %2306 = vmatprep.subr.mxu0 0.0
  %2307 = vmatpush1.msra.mxu0 0.0
  %2308 = vmatprep.subr.mxu0 0.0
  %2309 = vmatpush1.msra.mxu0 0.0
  %2310 = vmatprep.subr.mxu0 0.0
  %2311 = vmatpush1.msra.mxu0 0.0
  %2312 = vmatprep.subr.mxu0 0.0
  %2313 = vmatpush1.msra.mxu0 0.0
  %2314 = vmatprep.subr.mxu0 0.0
  %2315 = vmatpush1.msra.mxu0 0.0
  %2316 = vmatprep.mubr.f32.mxu0 0.0
  %2317 = vmatmul.mubr.f32.gmra.mrb[0].mxu0 %v1974
  %v2318 = vpop.f32.mrb[0].mxu0
  %v2319 = vadd.f32 %v1955, %v2318
  %v2320 = vpop.f32.mrb[0].mxu0
  %v2321 = vadd.f32 %v1955, %v2320
  %2322 = vmatprep.mubr.f32.mxu0 0.0
  %2323 = vmatmul.mubr.f32.gmra.mrb[0].mxu0 %v1977
  %v2324 = vpop.f32.mrb[0].mxu0
  %v2325 = vadd.f32 %v1960, %v2324
  %v2326 = vpop.f32.mrb[0].mxu0
  %v2327 = vadd.f32 %v1960, %v2326
  %2328 = vmatprep.mubr.f32.mxu0 0.0
  %2329 = vmatmul.mubr.f32.gmra.mrb[0].mxu0 %v1980
  %v2330 = vpop.f32.mrb[0].mxu0
  %v2331 = vadd.f32 %v1965, %v2330
  %v2332 = vpop.f32.mrb[0].mxu0
  %v2333 = vadd.f32 %v1965, %v2332
  %2334 = vmatprep.mubr.f32.mxu0 0.0
  %2335 = vmatmul.mubr.f32.gmra.mrb[0].mxu0 %v1983
  %v2336 = vpop.f32.mrb[0].mxu0
  %v2337 = vadd.f32 %v1970, %v2336
  %v2338 = vpop.f32.mrb[0].mxu0
  %v2339 = vadd.f32 %v1970, %v2338
  %2340 = vdwg.mxu0
  %2341 = vmatprep.subr.mxu0 %v1825
  %2342 = vmatpush1.msra.mxu0 %v1824
  %2343 = vmatprep.subr.mxu0 %v1889
  %2344 = vmatpush1.msra.mxu0 %v1888
  %2345 = vmatprep.subr.mxu0 %v1841
  %2346 = vmatpush1.msra.mxu0 %v1840
  %2347 = vmatprep.subr.mxu0 %v1905
  %2348 = vmatpush1.msra.mxu0 %v1904
  %2349 = vmatprep.subr.mxu0 %v1857
  %2350 = vmatpush1.msra.mxu0 %v1856
  %2351 = vmatprep.subr.mxu0 %v1921
  %2352 = vmatpush1.msra.mxu0 %v1920
  %2353 = vmatprep.subr.mxu0 %v1873
  %2354 = vmatpush1.msra.mxu0 %v1872
  %2355 = vmatprep.subr.mxu0 %v1937
  %2356 = vmatpush1.msra.mxu0 %v1936
  %2357 = vmatprep.subr.mxu0 0.0
  %2358 = vmatpush1.msra.mxu0 0.0
  %2359 = vmatprep.subr.mxu0 0.0
  %2360 = vmatpush1.msra.mxu0 0.0
  %2361 = vmatprep.subr.mxu0 0.0
  %2362 = vmatpush1.msra.mxu0 0.0
  %2363 = vmatprep.subr.mxu0 0.0
  %2364 = vmatpush1.msra.mxu0 0.0
  %2365 = vmatprep.subr.mxu0 0.0
  %2366 = vmatpush1.msra.mxu0 0.0
  %2367 = vmatprep.subr.mxu0 0.0
  %2368 = vmatpush1.msra.mxu0 0.0
  %2369 = vmatprep.subr.mxu0 0.0
  %2370 = vmatpush1.msra.mxu0 0.0
  %2371 = vmatprep.subr.mxu0 0.0
  %2372 = vmatpush1.msra.mxu0 0.0
  %2373 = vmatprep.subr.mxu0 0.0
  %2374 = vmatpush1.msra.mxu0 0.0
  %2375 = vmatprep.subr.mxu0 0.0
  %2376 = vmatpush1.msra.mxu0 0.0
  %2377 = vmatprep.subr.mxu0 0.0
  %2378 = vmatpush1.msra.mxu0 0.0
  %2379 = vmatprep.subr.mxu0 0.0
  %2380 = vmatpush1.msra.mxu0 0.0
  %2381 = vmatprep.subr.mxu0 0.0
  %2382 = vmatpush1.msra.mxu0 0.0
  %2383 = vmatprep.subr.mxu0 0.0
  %2384 = vmatpush1.msra.mxu0 0.0
  %2385 = vmatprep.subr.mxu0 0.0
  %2386 = vmatpush1.msra.mxu0 0.0
  %2387 = vmatprep.subr.mxu0 0.0
  %2388 = vmatpush1.msra.mxu0 0.0
  %2389 = vmatprep.subr.mxu0 0.0
  %2390 = vmatpush1.msra.mxu0 0.0
  %2391 = vmatprep.subr.mxu0 0.0
  %2392 = vmatpush1.msra.mxu0 0.0
  %2393 = vmatprep.subr.mxu0 0.0
  %2394 = vmatpush1.msra.mxu0 0.0
  %2395 = vmatprep.subr.mxu0 0.0
  %2396 = vmatpush1.msra.mxu0 0.0
  %2397 = vmatprep.subr.mxu0 0.0
  %2398 = vmatpush1.msra.mxu0 0.0
  %2399 = vmatprep.subr.mxu0 0.0
  %2400 = vmatpush1.msra.mxu0 0.0
  %2401 = vmatprep.subr.mxu0 0.0
  %2402 = vmatpush1.msra.mxu0 0.0
  %2403 = vmatprep.subr.mxu0 0.0
  %2404 = vmatpush1.msra.mxu0 0.0
  %2405 = vmatprep.mubr.f32.mxu0 0.0
  %2406 = vmatmul.mubr.f32.gmra.mrb[0].mxu0 %v1974
  %v2407 = vpop.f32.mrb[0].mxu0
  %v2408 = vadd.f32 %v1955, %v2407
  %v2409 = vpop.f32.mrb[0].mxu0
  %v2410 = vadd.f32 %v1955, %v2409
  %2411 = vmatprep.mubr.f32.mxu0 0.0
  %2412 = vmatmul.mubr.f32.gmra.mrb[0].mxu0 %v1977
  %v2413 = vpop.f32.mrb[0].mxu0
  %v2414 = vadd.f32 %v1960, %v2413
  %v2415 = vpop.f32.mrb[0].mxu0
  %v2416 = vadd.f32 %v1960, %v2415
  %2417 = vmatprep.mubr.f32.mxu0 0.0
  %2418 = vmatmul.mubr.f32.gmra.mrb[0].mxu0 %v1980
  %v2419 = vpop.f32.mrb[0].mxu0
  %v2420 = vadd.f32 %v1965, %v2419
  %v2421 = vpop.f32.mrb[0].mxu0
  %v2422 = vadd.f32 %v1965, %v2421
  %2423 = vmatprep.mubr.f32.mxu0 0.0
  %2424 = vmatmul.mubr.f32.gmra.mrb[0].mxu0 %v1983
  %v2425 = vpop.f32.mrb[0].mxu0
  %v2426 = vadd.f32 %v1970, %v2425
  %v2427 = vpop.f32.mrb[0].mxu0
  %v2428 = vadd.f32 %v1970, %v2427
  %2429 = vdwg.mxu0
  %2430 = vmatprep.subr.mxu0 %v1827
  %2431 = vmatpush1.msra.mxu0 %v1826
  %2432 = vmatprep.subr.mxu0 %v1891
  %2433 = vmatpush1.msra.mxu0 %v1890
  %2434 = vmatprep.subr.mxu0 %v1843
  %2435 = vmatpush1.msra.mxu0 %v1842
  %2436 = vmatprep.subr.mxu0 %v1907
  %2437 = vmatpush1.msra.mxu0 %v1906
  %2438 = vmatprep.subr.mxu0 %v1859
  %2439 = vmatpush1.msra.mxu0 %v1858
  %2440 = vmatprep.subr.mxu0 %v1923
  %2441 = vmatpush1.msra.mxu0 %v1922
  %2442 = vmatprep.subr.mxu0 %v1875
  %2443 = vmatpush1.msra.mxu0 %v1874
  %2444 = vmatprep.subr.mxu0 %v1939
  %2445 = vmatpush1.msra.mxu0 %v1938
  %2446 = vmatprep.subr.mxu0 0.0
  %2447 = vmatpush1.msra.mxu0 0.0
  %2448 = vmatprep.subr.mxu0 0.0
  %2449 = vmatpush1.msra.mxu0 0.0
  %2450 = vmatprep.subr.mxu0 0.0
  %2451 = vmatpush1.msra.mxu0 0.0
  %2452 = vmatprep.subr.mxu0 0.0
  %2453 = vmatpush1.msra.mxu0 0.0
  %2454 = vmatprep.subr.mxu0 0.0
  %2455 = vmatpush1.msra.mxu0 0.0
  %2456 = vmatprep.subr.mxu0 0.0
  %2457 = vmatpush1.msra.mxu0 0.0
  %2458 = vmatprep.subr.mxu0 0.0
  %2459 = vmatpush1.msra.mxu0 0.0
  %2460 = vmatprep.subr.mxu0 0.0
  %2461 = vmatpush1.msra.mxu0 0.0
  %2462 = vmatprep.subr.mxu0 0.0
  %2463 = vmatpush1.msra.mxu0 0.0
  %2464 = vmatprep.subr.mxu0 0.0
  %2465 = vmatpush1.msra.mxu0 0.0
  %2466 = vmatprep.subr.mxu0 0.0
  %2467 = vmatpush1.msra.mxu0 0.0
  %2468 = vmatprep.subr.mxu0 0.0
  %2469 = vmatpush1.msra.mxu0 0.0
  %2470 = vmatprep.subr.mxu0 0.0
  %2471 = vmatpush1.msra.mxu0 0.0
  %2472 = vmatprep.subr.mxu0 0.0
  %2473 = vmatpush1.msra.mxu0 0.0
  %2474 = vmatprep.subr.mxu0 0.0
  %2475 = vmatpush1.msra.mxu0 0.0
  %2476 = vmatprep.subr.mxu0 0.0
  %2477 = vmatpush1.msra.mxu0 0.0
  %2478 = vmatprep.subr.mxu0 0.0
  %2479 = vmatpush1.msra.mxu0 0.0
  %2480 = vmatprep.subr.mxu0 0.0
  %2481 = vmatpush1.msra.mxu0 0.0
  %2482 = vmatprep.subr.mxu0 0.0
  %2483 = vmatpush1.msra.mxu0 0.0
  %2484 = vmatprep.subr.mxu0 0.0
  %2485 = vmatpush1.msra.mxu0 0.0
  %2486 = vmatprep.subr.mxu0 0.0
  %2487 = vmatpush1.msra.mxu0 0.0
  %2488 = vmatprep.subr.mxu0 0.0
  %2489 = vmatpush1.msra.mxu0 0.0
  %2490 = vmatprep.subr.mxu0 0.0
  %2491 = vmatpush1.msra.mxu0 0.0
  %2492 = vmatprep.subr.mxu0 0.0
  %2493 = vmatpush1.msra.mxu0 0.0
  %2494 = vmatprep.mubr.f32.mxu0 0.0
  %2495 = vmatmul.mubr.f32.gmra.mrb[0].mxu0 %v1974
  %v2496 = vpop.f32.mrb[0].mxu0
  %v2497 = vadd.f32 %v1955, %v2496
  %v2498 = vpop.f32.mrb[0].mxu0
  %v2499 = vadd.f32 %v1955, %v2498
  %2500 = vmatprep.mubr.f32.mxu0 0.0
  %2501 = vmatmul.mubr.f32.gmra.mrb[0].mxu0 %v1977
  %v2502 = vpop.f32.mrb[0].mxu0
  %v2503 = vadd.f32 %v1960, %v2502
  %v2504 = vpop.f32.mrb[0].mxu0
  %v2505 = vadd.f32 %v1960, %v2504
  %2506 = vmatprep.mubr.f32.mxu0 0.0
  %2507 = vmatmul.mubr.f32.gmra.mrb[0].mxu0 %v1980
  %v2508 = vpop.f32.mrb[0].mxu0
  %v2509 = vadd.f32 %v1965, %v2508
  %v2510 = vpop.f32.mrb[0].mxu0
  %v2511 = vadd.f32 %v1965, %v2510
  %2512 = vmatprep.mubr.f32.mxu0 0.0
  %2513 = vmatmul.mubr.f32.gmra.mrb[0].mxu0 %v1983
  %v2514 = vpop.f32.mrb[0].mxu0
  %v2515 = vadd.f32 %v1970, %v2514
  %v2516 = vpop.f32.mrb[0].mxu0
  %v2517 = vadd.f32 %v1970, %v2516
  %2518 = vdwg.mxu0
  %2519 = vmatprep.subr.mxu0 %v1829
  %2520 = vmatpush1.msra.mxu0 %v1828
  %2521 = vmatprep.subr.mxu0 %v1893
  %2522 = vmatpush1.msra.mxu0 %v1892
  %2523 = vmatprep.subr.mxu0 %v1845
  %2524 = vmatpush1.msra.mxu0 %v1844
  %2525 = vmatprep.subr.mxu0 %v1909
  %2526 = vmatpush1.msra.mxu0 %v1908
  %2527 = vmatprep.subr.mxu0 %v1861
  %2528 = vmatpush1.msra.mxu0 %v1860
  %2529 = vmatprep.subr.mxu0 %v1925
  %2530 = vmatpush1.msra.mxu0 %v1924
  %2531 = vmatprep.subr.mxu0 %v1877
  %2532 = vmatpush1.msra.mxu0 %v1876
  %2533 = vmatprep.subr.mxu0 %v1941
  %2534 = vmatpush1.msra.mxu0 %v1940
  %2535 = vmatprep.subr.mxu0 0.0
  %2536 = vmatpush1.msra.mxu0 0.0
  %2537 = vmatprep.subr.mxu0 0.0
  %2538 = vmatpush1.msra.mxu0 0.0
  %2539 = vmatprep.subr.mxu0 0.0
  %2540 = vmatpush1.msra.mxu0 0.0
  %2541 = vmatprep.subr.mxu0 0.0
  %2542 = vmatpush1.msra.mxu0 0.0
  %2543 = vmatprep.subr.mxu0 0.0
  %2544 = vmatpush1.msra.mxu0 0.0
  %2545 = vmatprep.subr.mxu0 0.0
  %2546 = vmatpush1.msra.mxu0 0.0
  %2547 = vmatprep.subr.mxu0 0.0
  %2548 = vmatpush1.msra.mxu0 0.0
  %2549 = vmatprep.subr.mxu0 0.0
  %2550 = vmatpush1.msra.mxu0 0.0
  %2551 = vmatprep.subr.mxu0 0.0
  %2552 = vmatpush1.msra.mxu0 0.0
  %2553 = vmatprep.subr.mxu0 0.0
  %2554 = vmatpush1.msra.mxu0 0.0
  %2555 = vmatprep.subr.mxu0 0.0
  %2556 = vmatpush1.msra.mxu0 0.0
  %2557 = vmatprep.subr.mxu0 0.0
  %2558 = vmatpush1.msra.mxu0 0.0
  %2559 = vmatprep.subr.mxu0 0.0
  %2560 = vmatpush1.msra.mxu0 0.0
  %2561 = vmatprep.subr.mxu0 0.0
  %2562 = vmatpush1.msra.mxu0 0.0
  %2563 = vmatprep.subr.mxu0 0.0
  %2564 = vmatpush1.msra.mxu0 0.0
  %2565 = vmatprep.subr.mxu0 0.0
  %2566 = vmatpush1.msra.mxu0 0.0
  %2567 = vmatprep.subr.mxu0 0.0
  %2568 = vmatpush1.msra.mxu0 0.0
  %2569 = vmatprep.subr.mxu0 0.0
  %2570 = vmatpush1.msra.mxu0 0.0
  %2571 = vmatprep.subr.mxu0 0.0
  %2572 = vmatpush1.msra.mxu0 0.0
  %2573 = vmatprep.subr.mxu0 0.0
  %2574 = vmatpush1.msra.mxu0 0.0
  %2575 = vmatprep.subr.mxu0 0.0
  %2576 = vmatpush1.msra.mxu0 0.0
  %2577 = vmatprep.subr.mxu0 0.0
  %2578 = vmatpush1.msra.mxu0 0.0
  %2579 = vmatprep.subr.mxu0 0.0
  %2580 = vmatpush1.msra.mxu0 0.0
  %2581 = vmatprep.subr.mxu0 0.0
  %2582 = vmatpush1.msra.mxu0 0.0
  %2583 = vmatprep.mubr.f32.mxu0 0.0
  %2584 = vmatmul.mubr.f32.gmra.mrb[0].mxu0 %v1974
  %v2585 = vpop.f32.mrb[0].mxu0
  %v2586 = vadd.f32 %v1955, %v2585
  %v2587 = vpop.f32.mrb[0].mxu0
  %v2588 = vadd.f32 %v1955, %v2587
  %2589 = vmatprep.mubr.f32.mxu0 0.0
  %2590 = vmatmul.mubr.f32.gmra.mrb[0].mxu0 %v1977
  %v2591 = vpop.f32.mrb[0].mxu0
  %v2592 = vadd.f32 %v1960, %v2591
  %v2593 = vpop.f32.mrb[0].mxu0
  %v2594 = vadd.f32 %v1960, %v2593
  %2595 = vmatprep.mubr.f32.mxu0 0.0
  %2596 = vmatmul.mubr.f32.gmra.mrb[0].mxu0 %v1980
  %v2597 = vpop.f32.mrb[0].mxu0
  %v2598 = vadd.f32 %v1965, %v2597
  %v2599 = vpop.f32.mrb[0].mxu0
  %v2600 = vadd.f32 %v1965, %v2599
  %2601 = vmatprep.mubr.f32.mxu0 0.0
  %2602 = vmatmul.mubr.f32.gmra.mrb[0].mxu0 %v1983
  %v2603 = vpop.f32.mrb[0].mxu0
  %v2604 = vadd.f32 %v1970, %v2603
  %v2605 = vpop.f32.mrb[0].mxu0
  %v2606 = vadd.f32 %v1970, %v2605
  %2607 = vdwg.mxu0
  %2608 = vmatprep.subr.mxu0 %v1831
  %2609 = vmatpush1.msra.mxu0 %v1830
  %2610 = vmatprep.subr.mxu0 %v1895
  %2611 = vmatpush1.msra.mxu0 %v1894
  %2612 = vmatprep.subr.mxu0 %v1847
  %2613 = vmatpush1.msra.mxu0 %v1846
  %2614 = vmatprep.subr.mxu0 %v1911
  %2615 = vmatpush1.msra.mxu0 %v1910
  %2616 = vmatprep.subr.mxu0 %v1863
  %2617 = vmatpush1.msra.mxu0 %v1862
  %2618 = vmatprep.subr.mxu0 %v1927
  %2619 = vmatpush1.msra.mxu0 %v1926
  %2620 = vmatprep.subr.mxu0 %v1879
  %2621 = vmatpush1.msra.mxu0 %v1878
  %2622 = vmatprep.subr.mxu0 %v1943
  %2623 = vmatpush1.msra.mxu0 %v1942
  %2624 = vmatprep.subr.mxu0 0.0
  %2625 = vmatpush1.msra.mxu0 0.0
  %2626 = vmatprep.subr.mxu0 0.0
  %2627 = vmatpush1.msra.mxu0 0.0
  %2628 = vmatprep.subr.mxu0 0.0
  %2629 = vmatpush1.msra.mxu0 0.0
  %2630 = vmatprep.subr.mxu0 0.0
  %2631 = vmatpush1.msra.mxu0 0.0
  %2632 = vmatprep.subr.mxu0 0.0
  %2633 = vmatpush1.msra.mxu0 0.0
  %2634 = vmatprep.subr.mxu0 0.0
  %2635 = vmatpush1.msra.mxu0 0.0
  %2636 = vmatprep.subr.mxu0 0.0
  %2637 = vmatpush1.msra.mxu0 0.0
  %2638 = vmatprep.subr.mxu0 0.0
  %2639 = vmatpush1.msra.mxu0 0.0
  %2640 = vmatprep.subr.mxu0 0.0
  %2641 = vmatpush1.msra.mxu0 0.0
  %2642 = vmatprep.subr.mxu0 0.0
  %2643 = vmatpush1.msra.mxu0 0.0
  %2644 = vmatprep.subr.mxu0 0.0
  %2645 = vmatpush1.msra.mxu0 0.0
  %2646 = vmatprep.subr.mxu0 0.0
  %2647 = vmatpush1.msra.mxu0 0.0
  %2648 = vmatprep.subr.mxu0 0.0
  %2649 = vmatpush1.msra.mxu0 0.0
  %2650 = vmatprep.subr.mxu0 0.0
  %2651 = vmatpush1.msra.mxu0 0.0
  %2652 = vmatprep.subr.mxu0 0.0
  %2653 = vmatpush1.msra.mxu0 0.0
  %2654 = vmatprep.subr.mxu0 0.0
  %2655 = vmatpush1.msra.mxu0 0.0
  %2656 = vmatprep.subr.mxu0 0.0
  %2657 = vmatpush1.msra.mxu0 0.0
  %2658 = vmatprep.subr.mxu0 0.0
  %2659 = vmatpush1.msra.mxu0 0.0
  %2660 = vmatprep.subr.mxu0 0.0
  %2661 = vmatpush1.msra.mxu0 0.0
  %2662 = vmatprep.subr.mxu0 0.0
  %2663 = vmatpush1.msra.mxu0 0.0
  %2664 = vmatprep.subr.mxu0 0.0
  %2665 = vmatpush1.msra.mxu0 0.0
  %2666 = vmatprep.subr.mxu0 0.0
  %2667 = vmatpush1.msra.mxu0 0.0
  %2668 = vmatprep.subr.mxu0 0.0
  %2669 = vmatpush1.msra.mxu0 0.0
  %2670 = vmatprep.subr.mxu0 0.0
  %2671 = vmatpush1.msra.mxu0 0.0
  %2672 = vmatprep.mubr.f32.mxu0 0.0
  %2673 = vmatmul.mubr.f32.gmra.mrb[0].mxu0 %v1974
  %v2674 = vpop.f32.mrb[0].mxu0
  %v2675 = vadd.f32 %v1955, %v2674
  %v2676 = vpop.f32.mrb[0].mxu0
  %v2677 = vadd.f32 %v1955, %v2676
  %2678 = vmatprep.mubr.f32.mxu0 0.0
  %2679 = vmatmul.mubr.f32.gmra.mrb[0].mxu0 %v1977
  %v2680 = vpop.f32.mrb[0].mxu0
  %v2681 = vadd.f32 %v1960, %v2680
  %v2682 = vpop.f32.mrb[0].mxu0
  %v2683 = vadd.f32 %v1960, %v2682
  %2684 = vmatprep.mubr.f32.mxu0 0.0
  %2685 = vmatmul.mubr.f32.gmra.mrb[0].mxu0 %v1980
  %v2686 = vpop.f32.mrb[0].mxu0
  %v2687 = vadd.f32 %v1965, %v2686
  %v2688 = vpop.f32.mrb[0].mxu0
  %v2689 = vadd.f32 %v1965, %v2688
  %2690 = vmatprep.mubr.f32.mxu0 0.0
  %2691 = vmatmul.mubr.f32.gmra.mrb[0].mxu0 %v1983
  %v2692 = vpop.f32.mrb[0].mxu0
  %v2693 = vadd.f32 %v1970, %v2692
  %v2694 = vpop.f32.mrb[0].mxu0
  %v2695 = vadd.f32 %v1970, %v2694
  %2696 = vdwg.mxu0
  %v2697 = vmax.f32 %v2052, 0.0
  %v2698 = vmax.f32 %v2054, 0.0
  %v2699 = vmax.f32 %v2141, 0.0
  %v2700 = vmax.f32 %v2143, 0.0
  %v2701 = vmax.f32 %v2230, 0.0
  %v2702 = vmax.f32 %v2232, 0.0
  %v2703 = vmax.f32 %v2319, 0.0
  %v2704 = vmax.f32 %v2321, 0.0
  %v2705 = vmax.f32 %v2408, 0.0
  %v2706 = vmax.f32 %v2410, 0.0
  %v2707 = vmax.f32 %v2497, 0.0
  %v2708 = vmax.f32 %v2499, 0.0
  %v2709 = vmax.f32 %v2586, 0.0
  %v2710 = vmax.f32 %v2588, 0.0
  %v2711 = vmax.f32 %v2675, 0.0
  %v2712 = vmax.f32 %v2677, 0.0
  %v2713 = vmax.f32 %v2058, 0.0
  %v2714 = vmax.f32 %v2060, 0.0
  %v2715 = vmax.f32 %v2147, 0.0
  %v2716 = vmax.f32 %v2149, 0.0
  %v2717 = vmax.f32 %v2236, 0.0
  %v2718 = vmax.f32 %v2238, 0.0
  %v2719 = vmax.f32 %v2325, 0.0
  %v2720 = vmax.f32 %v2327, 0.0
  %v2721 = vmax.f32 %v2414, 0.0
  %v2722 = vmax.f32 %v2416, 0.0
  %v2723 = vmax.f32 %v2503, 0.0
  %v2724 = vmax.f32 %v2505, 0.0
  %v2725 = vmax.f32 %v2592, 0.0
  %v2726 = vmax.f32 %v2594, 0.0
  %v2727 = vmax.f32 %v2681, 0.0
  %v2728 = vmax.f32 %v2683, 0.0
  %v2729 = vmax.f32 %v2064, 0.0
  %v2730 = vmax.f32 %v2066, 0.0
  %v2731 = vmax.f32 %v2153, 0.0
  %v2732 = vmax.f32 %v2155, 0.0
  %v2733 = vmax.f32 %v2242, 0.0
  %v2734 = vmax.f32 %v2244, 0.0
  %v2735 = vmax.f32 %v2331, 0.0
  %v2736 = vmax.f32 %v2333, 0.0
  %v2737 = vmax.f32 %v2420, 0.0
  %v2738 = vmax.f32 %v2422, 0.0
  %v2739 = vmax.f32 %v2509, 0.0
  %v2740 = vmax.f32 %v2511, 0.0
  %v2741 = vmax.f32 %v2598, 0.0
  %v2742 = vmax.f32 %v2600, 0.0
  %v2743 = vmax.f32 %v2687, 0.0
  %v2744 = vmax.f32 %v2689, 0.0
  %v2745 = vmax.f32 %v2070, 0.0
  %v2746 = vmax.f32 %v2072, 0.0
  %v2747 = vmax.f32 %v2159, 0.0
  %v2748 = vmax.f32 %v2161, 0.0
  %v2749 = vmax.f32 %v2248, 0.0
  %v2750 = vmax.f32 %v2250, 0.0
  %v2751 = vmax.f32 %v2337, 0.0
  %v2752 = vmax.f32 %v2339, 0.0
  %v2753 = vmax.f32 %v2426, 0.0
  %v2754 = vmax.f32 %v2428, 0.0
  %v2755 = vmax.f32 %v2515, 0.0
  %v2756 = vmax.f32 %v2517, 0.0
  %v2757 = vmax.f32 %v2604, 0.0
  %v2758 = vmax.f32 %v2606, 0.0
  %v2759 = vmax.f32 %v2693, 0.0
  %v2760 = vmax.f32 %v2695, 0.0
  %v2761 = vld [vmem:[%s5] sm:$0xff]
  %v2762 = vld [vmem:[%s5 + $0x8] sm:$0xff]
  %v2763 = vld [vmem:[%s5 + $0x10] sm:$0xff]
  %v2764 = vld [vmem:[%s5 + $0x18] sm:$0xff]
  %v2765 = vld [vmem:[%s5 + $0x20] sm:$0xff]
  %v2766 = vld [vmem:[%s5 + $0x28] sm:$0xff]
  %v2767 = vld [vmem:[%s5 + $0x30] sm:$0xff]
  %v2768 = vld [vmem:[%s5 + $0x38] sm:$0xff]
  %v2769 = vld [vmem:[%s6] sm:$0xff]
  %v2770 = vld [vmem:[%s6 + $0x8] sm:$0xff]
  %v2771 = vld [vmem:[%s6 + $0x10] sm:$0xff]
  %v2772 = vld [vmem:[%s6 + $0x18] sm:$0xff]
  %v2773 = vld [vmem:[%s6 + $0x20] sm:$0xff]
  %v2774 = vld [vmem:[%s6 + $0x28] sm:$0xff]
  %v2775 = vld [vmem:[%s6 + $0x30] sm:$0xff]
  %v2776 = vld [vmem:[%s6 + $0x38] sm:$0xff]
  %2778 = vset.pattern.permute.xlu0 0
  %2779 = vperm.xlu0 %2778, %v2769
  %v2780 = vpop.permute.xlu0 %2779
  %2783 = vset.pattern.permute.xlu0 0
  %2784 = vperm.xlu0 %2783, %v2770
  %v2785 = vpop.permute.xlu0 %2784
  %2788 = vset.pattern.permute.xlu0 0
  %2789 = vperm.xlu0 %2788, %v2771
  %v2790 = vpop.permute.xlu0 %2789
  %2793 = vset.pattern.permute.xlu0 0
  %2794 = vperm.xlu0 %2793, %v2772
  %v2795 = vpop.permute.xlu0 %2794
  %2798 = vset.pattern.permute.xlu0 0
  %2799 = vperm.xlu0 %2798, %v2773
  %v2800 = vpop.permute.xlu0 %2799
  %2803 = vset.pattern.permute.xlu0 0
  %2804 = vperm.xlu0 %2803, %v2774
  %v2805 = vpop.permute.xlu0 %2804
  %2808 = vset.pattern.permute.xlu0 0
  %2809 = vperm.xlu0 %2808, %v2775
  %v2810 = vpop.permute.xlu0 %2809
  %2813 = vset.pattern.permute.xlu0 0
  %2814 = vperm.xlu0 %2813, %v2776
  %v2815 = vpop.permute.xlu0 %2814
  %2817 = vmatprep.subr.mxu0 %v2698
  %2818 = vmatpush1.msra.mxu0 %v2697
  %2819 = vmatprep.subr.mxu0 %v2714
  %2820 = vmatpush1.msra.mxu0 %v2713
  %2821 = vmatprep.subr.mxu0 %v2730
  %2822 = vmatpush1.msra.mxu0 %v2729
  %2823 = vmatprep.subr.mxu0 %v2746
  %2824 = vmatpush1.msra.mxu0 %v2745
  %2825 = vmatprep.subr.mxu0 %v2702
  %2826 = vmatpush1.msra.mxu0 %v2701
  %2827 = vmatprep.subr.mxu0 %v2718
  %2828 = vmatpush1.msra.mxu0 %v2717
  %2829 = vmatprep.subr.mxu0 %v2734
  %2830 = vmatpush1.msra.mxu0 %v2733
  %2831 = vmatprep.subr.mxu0 %v2750
  %2832 = vmatpush1.msra.mxu0 %v2749
  %2833 = vmatprep.subr.mxu0 %v2706
  %2834 = vmatpush1.msra.mxu0 %v2705
  %2835 = vmatprep.subr.mxu0 %v2722
  %2836 = vmatpush1.msra.mxu0 %v2721
  %2837 = vmatprep.subr.mxu0 %v2738
  %2838 = vmatpush1.msra.mxu0 %v2737
  %2839 = vmatprep.subr.mxu0 %v2754
  %2840 = vmatpush1.msra.mxu0 %v2753
  %2841 = vmatprep.subr.mxu0 %v2710
  %2842 = vmatpush1.msra.mxu0 %v2709
  %2843 = vmatprep.subr.mxu0 %v2726
  %2844 = vmatpush1.msra.mxu0 %v2725
  %2845 = vmatprep.subr.mxu0 %v2742
  %2846 = vmatpush1.msra.mxu0 %v2741
  %2847 = vmatprep.subr.mxu0 %v2758
  %2848 = vmatpush1.msra.mxu0 %v2757
  %2849 = vmatprep.subr.mxu0 0.0
  %2850 = vmatpush1.msra.mxu0 0.0
  %2851 = vmatprep.subr.mxu0 0.0
  %2852 = vmatpush1.msra.mxu0 0.0
  %2853 = vmatprep.subr.mxu0 0.0
  %2854 = vmatpush1.msra.mxu0 0.0
  %2855 = vmatprep.subr.mxu0 0.0
  %2856 = vmatpush1.msra.mxu0 0.0
  %2857 = vmatprep.subr.mxu0 0.0
  %2858 = vmatpush1.msra.mxu0 0.0
  %2859 = vmatprep.subr.mxu0 0.0
  %2860 = vmatpush1.msra.mxu0 0.0
  %2861 = vmatprep.subr.mxu0 0.0
  %2862 = vmatpush1.msra.mxu0 0.0
  %2863 = vmatprep.subr.mxu0 0.0
  %2864 = vmatpush1.msra.mxu0 0.0
  %2865 = vmatprep.subr.mxu0 0.0
  %2866 = vmatpush1.msra.mxu0 0.0
  %2867 = vmatprep.subr.mxu0 0.0
  %2868 = vmatpush1.msra.mxu0 0.0
  %2869 = vmatprep.subr.mxu0 0.0
  %2870 = vmatpush1.msra.mxu0 0.0
  %2871 = vmatprep.subr.mxu0 0.0
  %2872 = vmatpush1.msra.mxu0 0.0
  %2873 = vmatprep.subr.mxu0 0.0
  %2874 = vmatpush1.msra.mxu0 0.0
  %2875 = vmatprep.subr.mxu0 0.0
  %2876 = vmatpush1.msra.mxu0 0.0
  %2877 = vmatprep.subr.mxu0 0.0
  %2878 = vmatpush1.msra.mxu0 0.0
  %2879 = vmatprep.subr.mxu0 0.0
  %2880 = vmatpush1.msra.mxu0 0.0
  %2881 = vmatprep.mubr.f32.mxu0 0.0
  %2882 = vmatmul.mubr.f32.gmra.mrb[0].mxu0 %v2761
  %v2883 = vpop.f32.mrb[0].mxu0
  %v2884 = vadd.f32 %v2780, %v2883
  %v2885 = vpop.f32.mrb[0].mxu0
  %v2886 = vadd.f32 %v2780, %v2885
  %2887 = vmatprep.mubr.f32.mxu0 0.0
  %2888 = vmatmul.mubr.f32.gmra.mrb[0].mxu0 %v2762
  %v2889 = vpop.f32.mrb[0].mxu0
  %v2890 = vadd.f32 %v2785, %v2889
  %v2891 = vpop.f32.mrb[0].mxu0
  %v2892 = vadd.f32 %v2785, %v2891
  %2893 = vmatprep.mubr.f32.mxu0 0.0
  %2894 = vmatmul.mubr.f32.gmra.mrb[0].mxu0 %v2763
  %v2895 = vpop.f32.mrb[0].mxu0
  %v2896 = vadd.f32 %v2790, %v2895
  %v2897 = vpop.f32.mrb[0].mxu0
  %v2898 = vadd.f32 %v2790, %v2897
  %2899 = vmatprep.mubr.f32.mxu0 0.0
  %2900 = vmatmul.mubr.f32.gmra.mrb[0].mxu0 %v2764
  %v2901 = vpop.f32.mrb[0].mxu0
  %v2902 = vadd.f32 %v2795, %v2901
  %v2903 = vpop.f32.mrb[0].mxu0
  %v2904 = vadd.f32 %v2795, %v2903
  %2905 = vmatprep.mubr.f32.mxu0 0.0
  %2906 = vmatmul.mubr.f32.gmra.mrb[0].mxu0 %v2765
  %v2907 = vpop.f32.mrb[0].mxu0
  %v2908 = vadd.f32 %v2800, %v2907
  %v2909 = vpop.f32.mrb[0].mxu0
  %v2910 = vadd.f32 %v2800, %v2909
  %2911 = vmatprep.mubr.f32.mxu0 0.0
  %2912 = vmatmul.mubr.f32.gmra.mrb[0].mxu0 %v2766
  %v2913 = vpop.f32.mrb[0].mxu0
  %v2914 = vadd.f32 %v2805, %v2913
  %v2915 = vpop.f32.mrb[0].mxu0
  %v2916 = vadd.f32 %v2805, %v2915
  %2917 = vmatprep.mubr.f32.mxu0 0.0
  %2918 = vmatmul.mubr.f32.gmra.mrb[0].mxu0 %v2767
  %v2919 = vpop.f32.mrb[0].mxu0
  %v2920 = vadd.f32 %v2810, %v2919
  %v2921 = vpop.f32.mrb[0].mxu0
  %v2922 = vadd.f32 %v2810, %v2921
  %2923 = vmatprep.mubr.f32.mxu0 0.0
  %2924 = vmatmul.mubr.f32.gmra.mrb[0].mxu0 %v2768
  %v2925 = vpop.f32.mrb[0].mxu0
  %v2926 = vadd.f32 %v2815, %v2925
  %v2927 = vpop.f32.mrb[0].mxu0
  %v2928 = vadd.f32 %v2815, %v2927
  %2929 = vdwg.mxu0
  %2930 = vmatprep.subr.mxu0 %v2700
  %2931 = vmatpush1.msra.mxu0 %v2699
  %2932 = vmatprep.subr.mxu0 %v2716
  %2933 = vmatpush1.msra.mxu0 %v2715
  %2934 = vmatprep.subr.mxu0 %v2732
  %2935 = vmatpush1.msra.mxu0 %v2731
  %2936 = vmatprep.subr.mxu0 %v2748
  %2937 = vmatpush1.msra.mxu0 %v2747
  %2938 = vmatprep.subr.mxu0 %v2704
  %2939 = vmatpush1.msra.mxu0 %v2703
  %2940 = vmatprep.subr.mxu0 %v2720
  %2941 = vmatpush1.msra.mxu0 %v2719
  %2942 = vmatprep.subr.mxu0 %v2736
  %2943 = vmatpush1.msra.mxu0 %v2735
  %2944 = vmatprep.subr.mxu0 %v2752
  %2945 = vmatpush1.msra.mxu0 %v2751
  %2946 = vmatprep.subr.mxu0 %v2708
  %2947 = vmatpush1.msra.mxu0 %v2707
  %2948 = vmatprep.subr.mxu0 %v2724
  %2949 = vmatpush1.msra.mxu0 %v2723
  %2950 = vmatprep.subr.mxu0 %v2740
  %2951 = vmatpush1.msra.mxu0 %v2739
  %2952 = vmatprep.subr.mxu0 %v2756
  %2953 = vmatpush1.msra.mxu0 %v2755
  %2954 = vmatprep.subr.mxu0 %v2712
  %2955 = vmatpush1.msra.mxu0 %v2711
  %2956 = vmatprep.subr.mxu0 %v2728
  %2957 = vmatpush1.msra.mxu0 %v2727
  %2958 = vmatprep.subr.mxu0 %v2744
  %2959 = vmatpush1.msra.mxu0 %v2743
  %2960 = vmatprep.subr.mxu0 %v2760
  %2961 = vmatpush1.msra.mxu0 %v2759
  %2962 = vmatprep.subr.mxu0 0.0
  %2963 = vmatpush1.msra.mxu0 0.0
  %2964 = vmatprep.subr.mxu0 0.0
  %2965 = vmatpush1.msra.mxu0 0.0
  %2966 = vmatprep.subr.mxu0 0.0
  %2967 = vmatpush1.msra.mxu0 0.0
  %2968 = vmatprep.subr.mxu0 0.0
  %2969 = vmatpush1.msra.mxu0 0.0
  %2970 = vmatprep.subr.mxu0 0.0
  %2971 = vmatpush1.msra.mxu0 0.0
  %2972 = vmatprep.subr.mxu0 0.0
  %2973 = vmatpush1.msra.mxu0 0.0
  %2974 = vmatprep.subr.mxu0 0.0
  %2975 = vmatpush1.msra.mxu0 0.0
  %2976 = vmatprep.subr.mxu0 0.0
  %2977 = vmatpush1.msra.mxu0 0.0
  %2978 = vmatprep.subr.mxu0 0.0
  %2979 = vmatpush1.msra.mxu0 0.0
  %2980 = vmatprep.subr.mxu0 0.0
  %2981 = vmatpush1.msra.mxu0 0.0
  %2982 = vmatprep.subr.mxu0 0.0
  %2983 = vmatpush1.msra.mxu0 0.0
  %2984 = vmatprep.subr.mxu0 0.0
  %2985 = vmatpush1.msra.mxu0 0.0
  %2986 = vmatprep.subr.mxu0 0.0
  %2987 = vmatpush1.msra.mxu0 0.0
  %2988 = vmatprep.subr.mxu0 0.0
  %2989 = vmatpush1.msra.mxu0 0.0
  %2990 = vmatprep.subr.mxu0 0.0
  %2991 = vmatpush1.msra.mxu0 0.0
  %2992 = vmatprep.subr.mxu0 0.0
  %2993 = vmatpush1.msra.mxu0 0.0
  %2994 = vmatprep.mubr.f32.mxu0 0.0
  %2995 = vmatmul.mubr.f32.gmra.mrb[0].mxu0 %v2761
  %v2996 = vpop.f32.mrb[0].mxu0
  %v2997 = vadd.f32 %v2780, %v2996
  %v2998 = vpop.f32.mrb[0].mxu0
  %v2999 = vadd.f32 %v2780, %v2998
  %3000 = vmatprep.mubr.f32.mxu0 0.0
  %3001 = vmatmul.mubr.f32.gmra.mrb[0].mxu0 %v2762
  %v3002 = vpop.f32.mrb[0].mxu0
  %v3003 = vadd.f32 %v2785, %v3002
  %v3004 = vpop.f32.mrb[0].mxu0
  %v3005 = vadd.f32 %v2785, %v3004
  %3006 = vmatprep.mubr.f32.mxu0 0.0
  %3007 = vmatmul.mubr.f32.gmra.mrb[0].mxu0 %v2763
  %v3008 = vpop.f32.mrb[0].mxu0
  %v3009 = vadd.f32 %v2790, %v3008
  %v3010 = vpop.f32.mrb[0].mxu0
  %v3011 = vadd.f32 %v2790, %v3010
  %3012 = vmatprep.mubr.f32.mxu0 0.0
  %3013 = vmatmul.mubr.f32.gmra.mrb[0].mxu0 %v2764
  %v3014 = vpop.f32.mrb[0].mxu0
  %v3015 = vadd.f32 %v2795, %v3014
  %v3016 = vpop.f32.mrb[0].mxu0
  %v3017 = vadd.f32 %v2795, %v3016
  %3018 = vmatprep.mubr.f32.mxu0 0.0
  %3019 = vmatmul.mubr.f32.gmra.mrb[0].mxu0 %v2765
  %v3020 = vpop.f32.mrb[0].mxu0
  %v3021 = vadd.f32 %v2800, %v3020
  %v3022 = vpop.f32.mrb[0].mxu0
  %v3023 = vadd.f32 %v2800, %v3022
  %3024 = vmatprep.mubr.f32.mxu0 0.0
  %3025 = vmatmul.mubr.f32.gmra.mrb[0].mxu0 %v2766
  %v3026 = vpop.f32.mrb[0].mxu0
  %v3027 = vadd.f32 %v2805, %v3026
  %v3028 = vpop.f32.mrb[0].mxu0
  %v3029 = vadd.f32 %v2805, %v3028
  %3030 = vmatprep.mubr.f32.mxu0 0.0
  %3031 = vmatmul.mubr.f32.gmra.mrb[0].mxu0 %v2767
  %v3032 = vpop.f32.mrb[0].mxu0
  %v3033 = vadd.f32 %v2810, %v3032
  %v3034 = vpop.f32.mrb[0].mxu0
  %v3035 = vadd.f32 %v2810, %v3034
  %3036 = vmatprep.mubr.f32.mxu0 0.0
  %3037 = vmatmul.mubr.f32.gmra.mrb[0].mxu0 %v2768
  %v3038 = vpop.f32.mrb[0].mxu0
  %v3039 = vadd.f32 %v2815, %v3038
  %v3040 = vpop.f32.mrb[0].mxu0
  %v3041 = vadd.f32 %v2815, %v3040
  %3042 = vdwg.mxu0
  %v3043 = vmax.f32 %v2884, 0.0
  %v3044 = vmax.f32 %v2886, 0.0
  %v3045 = vmax.f32 %v2997, 0.0
  %v3046 = vmax.f32 %v2999, 0.0
  %v3047 = vmax.f32 %v2890, 0.0
  %v3048 = vmax.f32 %v2892, 0.0
  %v3049 = vmax.f32 %v3003, 0.0
  %v3050 = vmax.f32 %v3005, 0.0
  %v3051 = vmax.f32 %v2896, 0.0
  %v3052 = vmax.f32 %v2898, 0.0
  %v3053 = vmax.f32 %v3009, 0.0
  %v3054 = vmax.f32 %v3011, 0.0
  %v3055 = vmax.f32 %v2902, 0.0
  %v3056 = vmax.f32 %v2904, 0.0
  %v3057 = vmax.f32 %v3015, 0.0
  %v3058 = vmax.f32 %v3017, 0.0
  %v3059 = vmax.f32 %v2908, 0.0
  %v3060 = vmax.f32 %v2910, 0.0
  %v3061 = vmax.f32 %v3021, 0.0
  %v3062 = vmax.f32 %v3023, 0.0
  %v3063 = vmax.f32 %v2914, 0.0
  %v3064 = vmax.f32 %v2916, 0.0
  %v3065 = vmax.f32 %v3027, 0.0
  %v3066 = vmax.f32 %v3029, 0.0
  %v3067 = vmax.f32 %v2920, 0.0
  %v3068 = vmax.f32 %v2922, 0.0
  %v3069 = vmax.f32 %v3033, 0.0
  %v3070 = vmax.f32 %v3035, 0.0
  %v3071 = vmax.f32 %v2926, 0.0
  %v3072 = vmax.f32 %v2928, 0.0
  %v3073 = vmax.f32 %v3039, 0.0
  %v3074 = vmax.f32 %v3041, 0.0
  %v3075 = vld [vmem:[%s7] sm:$0xff]
  %v3076 = vld [vmem:[%s7 + $0x8] sm:$0xff]
  %v3077 = vld [vmem:[%s8] sm:$0xff]
  %3079 = vset.pattern.permute.xlu0 0
  %3080 = vperm.xlu0 %3079, %v3077
  %v3081 = vpop.permute.xlu0 %3080
  %3083 = vmatprep.subr.mxu0 0.0
  %3084 = vmatpush1.msra.mxu0 %v3043
  %3085 = vmatprep.subr.mxu0 0.0
  %3086 = vmatpush1.msra.mxu0 %v3047
  %3087 = vmatprep.subr.mxu0 0.0
  %3088 = vmatpush1.msra.mxu0 %v3051
  %3089 = vmatprep.subr.mxu0 0.0
  %3090 = vmatpush1.msra.mxu0 %v3055
  %3091 = vmatprep.subr.mxu0 0.0
  %3092 = vmatpush1.msra.mxu0 %v3059
  %3093 = vmatprep.subr.mxu0 0.0
  %3094 = vmatpush1.msra.mxu0 %v3063
  %3095 = vmatprep.subr.mxu0 0.0
  %3096 = vmatpush1.msra.mxu0 %v3067
  %3097 = vmatprep.subr.mxu0 0.0
  %3098 = vmatpush1.msra.mxu0 %v3071
  %3099 = vmatprep.subr.mxu0 0.0
  %3100 = vmatpush1.msra.mxu0 %v3044
  %3101 = vmatprep.subr.mxu0 0.0
  %3102 = vmatpush1.msra.mxu0 %v3048
  %3103 = vmatprep.subr.mxu0 0.0
  %3104 = vmatpush1.msra.mxu0 %v3052
  %3105 = vmatprep.subr.mxu0 0.0
  %3106 = vmatpush1.msra.mxu0 %v3056
  %3107 = vmatprep.subr.mxu0 0.0
  %3108 = vmatpush1.msra.mxu0 %v3060
  %3109 = vmatprep.subr.mxu0 0.0
  %3110 = vmatpush1.msra.mxu0 %v3064
  %3111 = vmatprep.subr.mxu0 0.0
  %3112 = vmatpush1.msra.mxu0 %v3068
  %3113 = vmatprep.subr.mxu0 0.0
  %3114 = vmatpush1.msra.mxu0 %v3072
  %3115 = vmatprep.subr.mxu0 0.0
  %3116 = vmatpush1.msra.mxu0 %v3045
  %3117 = vmatprep.subr.mxu0 0.0
  %3118 = vmatpush1.msra.mxu0 %v3049
  %3119 = vmatprep.subr.mxu0 0.0
  %3120 = vmatpush1.msra.mxu0 %v3053
  %3121 = vmatprep.subr.mxu0 0.0
  %3122 = vmatpush1.msra.mxu0 %v3057
  %3123 = vmatprep.subr.mxu0 0.0
  %3124 = vmatpush1.msra.mxu0 %v3061
  %3125 = vmatprep.subr.mxu0 0.0
  %3126 = vmatpush1.msra.mxu0 %v3065
  %3127 = vmatprep.subr.mxu0 0.0
  %3128 = vmatpush1.msra.mxu0 %v3069
  %3129 = vmatprep.subr.mxu0 0.0
  %3130 = vmatpush1.msra.mxu0 %v3073
  %3131 = vmatprep.subr.mxu0 0.0
  %3132 = vmatpush1.msra.mxu0 %v3046
  %3133 = vmatprep.subr.mxu0 0.0
  %3134 = vmatpush1.msra.mxu0 %v3050
  %3135 = vmatprep.subr.mxu0 0.0
  %3136 = vmatpush1.msra.mxu0 %v3054
  %3137 = vmatprep.subr.mxu0 0.0
  %3138 = vmatpush1.msra.mxu0 %v3058
  %3139 = vmatprep.subr.mxu0 0.0
  %3140 = vmatpush1.msra.mxu0 %v3062
  %3141 = vmatprep.subr.mxu0 0.0
  %3142 = vmatpush1.msra.mxu0 %v3066
  %3143 = vmatprep.subr.mxu0 0.0
  %3144 = vmatpush1.msra.mxu0 %v3070
  %3145 = vmatprep.subr.mxu0 0.0
  %3146 = vmatpush1.msra.mxu0 %v3074
  %3147 = vmatprep.mubr.f32.mxu0 %v3076
  %3148 = vmatmul.mubr.f32.gmra.mrb[0].mxu0 %v3075
  %v3149 = vpop.f32.mrb[0].mxu0
  %v3150 = vadd.f32 %v3081, %v3149
  %v3151 = vpop.f32.mrb[0].mxu0
  %3152 = vdwg.mxu0
  %3153 = vst [vmem:[%s9] sm:$0xff] %v3150
  // Predicated region
  $region38: #{convolutional_network_forward.1} parent=0 // pred_check
    _
  $region39: #{convolutional_network_forward.1} parent=0 // pred_check_branch
    %3155 = sbr.rel (0) target = $region41
  $region40: #{convolutional_network_forward.1} parent=0 // pred_region
    _
  $region41: #{convolutional_network_forward.1} parent=0 // pred_fallthru
    _
  // Predicated region
  $region42: #{convolutional_network_forward.1} parent=0 // pred_check
    _
  $region43: #{convolutional_network_forward.1} parent=0 // pred_check_branch
    %3157 = sbr.rel (0) target = $region45
  $region44: #{convolutional_network_forward.1} parent=0 // pred_region
    _
  $region45: #{convolutional_network_forward.1} parent=0 // pred_fallthru
    _

</llo_original>
